<compile_context>
chip_gen: v5e
topology: v5e:2x2
jax: 0.10.0
libtpu: 0.0.40
codegen_flags: <defaults>
</compile_context>

<pallas_src>
import functools

import jax
import jax.numpy as jnp
from jax.experimental import pallas as pl
from jax.experimental.pallas import tpu as pltpu

_LANE = 128
# Working set is < 2 MiB; 32 MiB fits comfortably inside v5e/v6e (128 MiB) and v7x (64 MiB) VMEM.
_VMEM_LIMIT = 32 * 1024 * 1024


def _round_up(x, m):
    return (x + m - 1) // m * m


# --------------------------------------------------------------------------- kernel 1: knn distances
def _neg_pairwise_dist_kernel(xq_ref, xk_ref, d_ref):
    xq = xq_ref[0]                                                        # (TN, Cp) f32
    xk = xk_ref[0]                                                        # (N,  Cp) f32
    # x_i . x_j for this tile of query points against all key points (MXU).
    g = jax.lax.dot_general(xq, xk, (((1,), (1,)), ((), ())),
                            preferred_element_type=jnp.float32)           # (TN, N)
    sq_q = jnp.sum(xq * xq, axis=1, keepdims=True)                        # (TN, 1)
    ones = jnp.ones((1, xk.shape[1]), jnp.float32)
    # row vector of ||x_j||^2 without any in-kernel transpose (ones @ (x*x) on the MXU).
    sq_k = jax.lax.dot_general(ones, xk * xk, (((1,), (1,)), ((), ())),
                               preferred_element_type=jnp.float32)        # (1, N)
    d_ref[0] = 2.0 * g - sq_q - sq_k                                      # -||x_i - x_j||^2


def pallas_neg_pairwise_dist(xt_p, tn):
    B, N, Cp = xt_p.shape
    return pl.pallas_call(
        _neg_pairwise_dist_kernel,
        out_shape=jax.ShapeDtypeStruct((B, N, N), jnp.float32),
        grid=(B, N // tn),
        in_specs=[
            pl.BlockSpec((1, tn, Cp), lambda b, nt: (b, nt, 0)),   # query tile
            pl.BlockSpec((1, N, Cp), lambda b, nt: (b, 0, 0)),     # full key table (reused over nt)
        ],
        out_specs=pl.BlockSpec((1, tn, N), lambda b, nt: (b, nt, 0)),
        compiler_params=pltpu.CompilerParams(
            dimension_semantics=("parallel", "parallel"),
            vmem_limit_bytes=_VMEM_LIMIT),
    )(xt_p, xt_p)


# --------------------------------------------------------------------------- kernel 2: fused EdgeConv
def _edgeconv_fused_kernel(xt_ref, idx_ref, a_ref, bm_ref, b1_ref, w2_ref, b2_ref,
                           out_ref, p_s, q_s, *, tn):
    nt = pl.program_id(1)

    # Build the per-batch projection tables once (first N-tile of each batch) into VMEM scratch:
    #   P = x @ (W1a^T * s1)          (applied to the gathered neighbour x_j)
    #   Q = x @ ((W1b - W1a)^T * s1)  (applied to the centre point x_i)
    @pl.when(nt == 0)
    def _():
        xt = xt_ref[0].astype(jnp.bfloat16)                                         # (N, Cp)
        p_s[...] = jnp.dot(xt, a_ref[...], preferred_element_type=jnp.float32)
        q_s[...] = jnp.dot(xt, bm_ref[...], preferred_element_type=jnp.float32)

    n_pts = p_s.shape[0]
    p_full = p_s[...]                                                               # (N, C_out) f32
    q_tile = q_s[pl.ds(pl.multiple_of(nt * tn, tn), tn), :]                         # (TN, C_out)
    b1 = b1_ref[...]                                                                # (1, C_out)
    b2 = b2_ref[...]
    w2 = w2_ref[...]                                                                # (C_out, C_out) bf16
    idx = idx_ref[0]                                                                # (TN, k) int32
    col_ids = jax.lax.broadcasted_iota(jnp.int32, (tn, n_pts), 1)

    out = None
    for j in range(idx.shape[1]):                   # k is small & static -> unrolled
        onehot = (idx[:, j:j + 1] == col_ids).astype(jnp.float32)                   # (TN, N)
        # Neighbour gather as a one-hot matmul on the MXU (no HBM graph-feature tensor).
        p_j = jnp.dot(onehot, p_full, preferred_element_type=jnp.float32)           # (TN, C_out)
        h1 = jnp.maximum(p_j + q_tile + b1, 0.0)                                    # conv1 + BN1 + ReLU
        h2 = jnp.dot(h1.astype(jnp.bfloat16), w2,
                     preferred_element_type=jnp.float32) + b2                       # conv2 + BN2
        h2 = jnp.maximum(h2, 0.0)                                                   # ReLU
        out = h2 if out is None else jnp.maximum(out, h2)                           # max over k (VPU)
    out_ref[0] = out


def pallas_edgeconv_fused(xt_p, idx, params, tn):
    B, N, Cp = xt_p.shape
    c_out = params["w2f"].shape[1]
    k = idx.shape[-1]
    kernel = functools.partial(_edgeconv_fused_kernel, tn=tn)
    return pl.pallas_call(
        kernel,
        out_shape=jax.ShapeDtypeStruct((B, N, c_out), jnp.float32),
        grid=(B, N // tn),
        in_specs=[
            pl.BlockSpec((1, N, Cp), lambda b, nt: (b, 0, 0)),       # full point table per batch
            pl.BlockSpec((1, tn, k), lambda b, nt: (b, nt, 0)),      # knn indices for this tile
            pl.BlockSpec((Cp, c_out), lambda b, nt: (0, 0)),         # W1a^T * s1        (bf16)
            pl.BlockSpec((Cp, c_out), lambda b, nt: (0, 0)),         # (W1b-W1a)^T * s1  (bf16)
            pl.BlockSpec((1, c_out), lambda b, nt: (0, 0)),          # BN1 bias (f32)
            pl.BlockSpec((c_out, c_out), lambda b, nt: (0, 0)),      # W2^T * s2         (bf16)
            pl.BlockSpec((1, c_out), lambda b, nt: (0, 0)),          # BN2 bias (f32)
        ],
        out_specs=pl.BlockSpec((1, tn, c_out), lambda b, nt: (b, nt, 0)),
        scratch_shapes=[
            pltpu.VMEM((N, c_out), jnp.float32),    # P table (per batch)
            pltpu.VMEM((N, c_out), jnp.float32),    # Q table (per batch)
        ],
        compiler_params=pltpu.CompilerParams(
            dimension_semantics=("parallel", "arbitrary"),
            vmem_limit_bytes=_VMEM_LIMIT),
    )(xt_p, idx, params["a"], params["bm"], params["b1"], params["w2f"], params["b2"])


# --------------------------------------------------------------------------- parameters
def _fold_bn(key, c, eps=1e-5):
    # Inference-mode (running statistics) BatchNorm folded into scale + shift.
    k1, k2, k3 = jax.random.split(key, 3)
    gamma = 1.0 + 0.1 * jax.random.normal(k1, (c,))
    beta = 0.1 * jax.random.normal(k2, (c,))
    running_mean = 0.1 * jax.random.normal(k3, (c,))
    running_var = jnp.ones((c,))
    scale = gamma / jnp.sqrt(running_var + eps)
    shift = beta - running_mean * scale
    return scale.astype(jnp.float32), shift.astype(jnp.float32)


def make_edgeconv_params(in_channels, out_channels, seed=0):
    key = jax.random.PRNGKey(seed)
    k1, k2, k3, k4 = jax.random.split(key, 4)
    c2 = 2 * in_channels
    w1 = (jax.random.normal(k1, (out_channels, c2)) * jnp.sqrt(2.0 / c2)).astype(jnp.float32)
    w2 = (jax.random.normal(k2, (out_channels, out_channels))
          * jnp.sqrt(2.0 / out_channels)).astype(jnp.float32)
    s1, b1 = _fold_bn(k3, out_channels)
    s2, b2 = _fold_bn(k4, out_channels)

    # cat(x_j - x_i, x_i) @ W1^T  ==  x_j @ W1a^T  +  x_i @ (W1b - W1a)^T
    w1a = w1[:, :in_channels]           # acts on (x_j - x_i)
    w1b = w1[:, in_channels:]           # acts on x_i
    a = w1a.T * s1                      # (C_in, C_out), BN1 scale folded in
    bm = (w1b - w1a).T * s1

    cp = _round_up(in_channels, _LANE)  # lane-pad the contraction dim (zero rows -> exact)
    pad = ((0, cp - in_channels), (0, 0))
    a = jnp.pad(a, pad).astype(jnp.bfloat16)        # weights pre-cast to bf16 once
    bm = jnp.pad(bm, pad).astype(jnp.bfloat16)
    w2f = (w2.T * s2).astype(jnp.bfloat16)

    return {
        "a": a,
        "bm": bm,
        "b1": b1.reshape(1, out_channels),
        "w2f": w2f,
        "b2": b2.reshape(1, out_channels),
    }


# --------------------------------------------------------------------------- forward
def edgeconv_forward(params, x, k):
    # x: (B, C_in, N) as in PyTorch.  Returns (B, C_out, N).
    B, c_in, N = x.shape
    cp = params["a"].shape[0]
    tn = min(_LANE, N)
    assert N % tn == 0 and tn % 8 == 0, "num_points must tile by the N block"

    xt = jnp.transpose(x, (0, 2, 1)).astype(jnp.float32)                  # (B, N, C_in)
    xt_p = jnp.pad(xt, ((0, 0), (0, 0), (0, cp - c_in)))                  # zero-pad channels

    neg_dist = pallas_neg_pairwise_dist(xt_p, tn)                         # (B, N, N)
    # TODO(synk): top-k neighbour selection stays in XLA (lax.top_k); selection/sort has no
    # clean Pallas TPU equivalent.
    idx = jax.lax.top_k(neg_dist, k)[1].astype(jnp.int32)                 # (B, N, k)

    out_nhc = pallas_edgeconv_fused(xt_p, idx, params, tn)                # (B, N, C_out)
    return jnp.transpose(out_nhc, (0, 2, 1))                              # (B, C_out, N)


# --------------------------------------------------------------------------- main
if __name__ == "__main__":
    B, C_IN, N_PTS = 2, 8, 256
    C_OUT, K = 128, 8          # lane-dense out_channels; k nearest neighbours

    x = jax.random.normal(jax.random.PRNGKey(0), (B, C_IN, N_PTS), dtype=jnp.float32)
    params = make_edgeconv_params(C_IN, C_OUT, seed=0)

    fwd = jax.jit(functools.partial(edgeconv_forward, k=K))
    out = jax.block_until_ready(fwd(params, x))

    assert out.shape == (B, C_OUT, N_PTS)
    assert bool(jnp.all(jnp.isfinite(out)))
    print("KERNEL_OK")
</pallas_src>

<mosaic_0001>
module attributes {stable_mosaic.version = 11 : i64} {
  func.func @_neg_pairwise_dist_kernel(%arg0: i32, %arg1: i32, %arg2: memref<1x128x128xf32, #tpu.memory_space<vmem>>, %arg3: memref<1x256x128xf32, #tpu.memory_space<vmem>>, %arg4: memref<1x128x256xf32, #tpu.memory_space<vmem>>) attributes {dimension_semantics = [#tpu.dimension_semantics<parallel>, #tpu.dimension_semantics<parallel>], iteration_bounds = array<i64: 2, 2>, scalar_prefetch = 0 : i64, scratch_operands = 0 : i64, tpu.core_type = #tpu.core_type<tc>, window_params = [{transform_indices = @transform_0, window_bounds = array<i64: 1, 128, 128>}, {transform_indices = @transform_1, window_bounds = array<i64: 1, 256, 128>}, {transform_indices = @transform_2, window_bounds = array<i64: 1, 128, 256>}]} {
    %c0 = arith.constant 0 : index
    %c0_0 = arith.constant 0 : index
    %c0_1 = arith.constant 0 : index
    %0 = vector.load %arg2[%c0, %c0_0, %c0_1] : memref<1x128x128xf32, #tpu.memory_space<vmem>>, vector<1x128x128xf32>
    %1 = vector.shape_cast %0 : vector<1x128x128xf32> to vector<128x128xf32>
    %c0_2 = arith.constant 0 : index
    %c0_3 = arith.constant 0 : index
    %c0_4 = arith.constant 0 : index
    %2 = vector.load %arg3[%c0_2, %c0_3, %c0_4] : memref<1x256x128xf32, #tpu.memory_space<vmem>>, vector<1x256x128xf32>
    %3 = vector.shape_cast %2 : vector<1x256x128xf32> to vector<256x128xf32>
    %cst = arith.constant dense<0.000000e+00> : vector<128x256xf32>
    %4 = tpu.matmul %1, %3, %cst {dimension_numbers = #tpu.dot_dimension_numbers<[1], [1], [0], [0], [0, 0, 1, 0], [], []>} : vector<128x128xf32>, vector<256x128xf32>, vector<128x256xf32> -> vector<128x256xf32>
    %5 = arith.mulf %1, %1 : vector<128x128xf32>
    %cst_5 = arith.constant dense<0.000000e+00> : vector<128xf32>
    %6 = vector.multi_reduction <add>, %5, %cst_5 [1] : vector<128x128xf32> to vector<128xf32>
    %7 = vector.shape_cast %6 : vector<128xf32> to vector<128x1xf32>
    %cst_6 = arith.constant 1.000000e+00 : f32
    %8 = vector.broadcast %cst_6 : f32 to vector<1x128xf32>
    %9 = arith.mulf %3, %3 : vector<256x128xf32>
    %cst_7 = arith.constant dense<0.000000e+00> : vector<1x256xf32>
    %10 = tpu.matmul %8, %9, %cst_7 {dimension_numbers = #tpu.dot_dimension_numbers<[1], [1], [0], [0], [0, 0, 1, 0], [], []>} : vector<1x128xf32>, vector<256x128xf32>, vector<1x256xf32> -> vector<1x256xf32>
    %cst_8 = arith.constant 2.000000e+00 : f32
    %11 = vector.broadcast %cst_8 : f32 to vector<128x256xf32>
    %12 = arith.mulf %11, %4 : vector<128x256xf32>
    %13 = vector.broadcast %7 : vector<128x1xf32> to vector<128x256xf32>
    %14 = arith.subf %12, %13 : vector<128x256xf32>
    %15 = vector.broadcast %10 : vector<1x256xf32> to vector<128x256xf32>
    %16 = arith.subf %14, %15 : vector<128x256xf32>
    %c0_9 = arith.constant 0 : index
    %c0_10 = arith.constant 0 : index
    %c0_11 = arith.constant 0 : index
    %17 = vector.load %arg4[%c0_9, %c0_10, %c0_11] : memref<1x128x256xf32, #tpu.memory_space<vmem>>, vector<1x128x256xf32>
    %18 = vector.shape_cast %17 : vector<1x128x256xf32> to vector<128x256xf32>
    %19 = vector.shape_cast %16 : vector<128x256xf32> to vector<1x128x256xf32>
    tpu.vector_store %arg4[%c0_9, %c0_10, %c0_11], %19 {strides = array<i32>} : memref<1x128x256xf32, #tpu.memory_space<vmem>>, vector<1x128x256xf32>,
    return
  }
  func.func @transform_0(%arg0: i32, %arg1: i32) -> (i32, i32, i32) {
    %c0_i32 = arith.constant 0 : i32
    %c0_i32_0 = arith.constant 0 : i32
    return %arg0, %arg1, %c0_i32 : i32, i32, i32
  }
  func.func @transform_1(%arg0: i32, %arg1: i32) -> (i32, i32, i32) {
    %c0_i32 = arith.constant 0 : i32
    %c0_i32_0 = arith.constant 0 : i32
    %c0_i32_1 = arith.constant 0 : i32
    return %arg0, %c0_i32, %c0_i32_0 : i32, i32, i32
  }
  func.func @transform_2(%arg0: i32, %arg1: i32) -> (i32, i32, i32) {
    %c0_i32 = arith.constant 0 : i32
    %c0_i32_0 = arith.constant 0 : i32
    return %arg0, %arg1, %c0_i32 : i32, i32, i32
  }
}

module attributes {stable_mosaic.version = 11 : i64} {
  func.func @_edgeconv_fused_kernel(%arg0: i32, %arg1: i32, %arg2: memref<1x256x128xf32, #tpu.memory_space<vmem>>, %arg3: memref<1x128x8xi32, #tpu.memory_space<vmem>>, %arg4: memref<128x128xbf16, #tpu.memory_space<vmem>>, %arg5: memref<128x128xbf16, #tpu.memory_space<vmem>>, %arg6: memref<1x128xf32, #tpu.memory_space<vmem>>, %arg7: memref<128x128xbf16, #tpu.memory_space<vmem>>, %arg8: memref<1x128xf32, #tpu.memory_space<vmem>>, %arg9: memref<1x128x128xf32, #tpu.memory_space<vmem>>, %arg10: memref<256x128xf32, #tpu.memory_space<vmem>>, %arg11: memref<256x128xf32, #tpu.memory_space<vmem>>) attributes {dimension_semantics = [#tpu.dimension_semantics<parallel>, #tpu.dimension_semantics<arbitrary>], iteration_bounds = array<i64: 2, 2>, scalar_prefetch = 0 : i64, scratch_operands = 2 : i64, tpu.core_type = #tpu.core_type<tc>, window_params = [{transform_indices = @transform_0, window_bounds = array<i64: 1, 256, 128>}, {transform_indices = @transform_1, window_bounds = array<i64: 1, 128, 8>}, {pipeline_mode = #tpu.pipeline_mode<synchronous>, transform_indices = @transform_2, window_bounds = array<i64: 128, 128>}, {pipeline_mode = #tpu.pipeline_mode<synchronous>, transform_indices = @transform_3, window_bounds = array<i64: 128, 128>}, {pipeline_mode = #tpu.pipeline_mode<synchronous>, transform_indices = @transform_4, window_bounds = array<i64: 1, 128>}, {pipeline_mode = #tpu.pipeline_mode<synchronous>, transform_indices = @transform_5, window_bounds = array<i64: 128, 128>}, {pipeline_mode = #tpu.pipeline_mode<synchronous>, transform_indices = @transform_6, window_bounds = array<i64: 1, 128>}, {transform_indices = @transform_7, window_bounds = array<i64: 1, 128, 128>}]} {
    %c0_i32 = arith.constant 0 : i32
    %0 = arith.cmpi eq, %arg1, %c0_i32 : i32
    %1 = arith.extui %0 : i1 to i32
    %c0_i32_0 = arith.constant 0 : i32
    %2 = arith.cmpi ne, %1, %c0_i32_0 : i32
    scf.if %2 {
      %c0_46 = arith.constant 0 : index
      %c0_47 = arith.constant 0 : index
      %c0_48 = arith.constant 0 : index
      %160 = vector.load %arg2[%c0_46, %c0_47, %c0_48] : memref<1x256x128xf32, #tpu.memory_space<vmem>>, vector<1x256x128xf32>
      %161 = vector.shape_cast %160 : vector<1x256x128xf32> to vector<256x128xf32>
      %162 = arith.truncf %161 : vector<256x128xf32> to vector<256x128xbf16>
      %c0_49 = arith.constant 0 : index
      %c0_50 = arith.constant 0 : index
      %163 = vector.load %arg4[%c0_49, %c0_50] : memref<128x128xbf16, #tpu.memory_space<vmem>>, vector<128x128xbf16>
      %cst_51 = arith.constant dense<0.000000e+00> : vector<256x128xf32>
      %164 = tpu.matmul %162, %163, %cst_51 {dimension_numbers = #tpu.dot_dimension_numbers<[1], [0], [0], [1], [0, 0, 1, 1], [], []>} : vector<256x128xbf16>, vector<128x128xbf16>, vector<256x128xf32> -> vector<256x128xf32>
      %c0_52 = arith.constant 0 : index
      %c0_53 = arith.constant 0 : index
      %165 = vector.load %arg10[%c0_52, %c0_53] : memref<256x128xf32, #tpu.memory_space<vmem>>, vector<256x128xf32>
      tpu.vector_store %arg10[%c0_52, %c0_53], %164 {strides = array<i32>} : memref<256x128xf32, #tpu.memory_space<vmem>>, vector<256x128xf32>,
      %c0_54 = arith.constant 0 : index
      %c0_55 = arith.constant 0 : index
      %166 = vector.load %arg5[%c0_54, %c0_55] : memref<128x128xbf16, #tpu.memory_space<vmem>>, vector<128x128xbf16>
      %cst_56 = arith.constant dense<0.000000e+00> : vector<256x128xf32>
      %167 = tpu.matmul %162, %166, %cst_56 {dimension_numbers = #tpu.dot_dimension_numbers<[1], [0], [0], [1], [0, 0, 1, 1], [], []>} : vector<256x128xbf16>, vector<128x128xbf16>, vector<256x128xf32> -> vector<256x128xf32>
      %c0_57 = arith.constant 0 : index
      %c0_58 = arith.constant 0 : index
      %168 = vector.load %arg11[%c0_57, %c0_58] : memref<256x128xf32, #tpu.memory_space<vmem>>, vector<256x128xf32>
      tpu.vector_store %arg11[%c0_57, %c0_58], %167 {strides = array<i32>} : memref<256x128xf32, #tpu.memory_space<vmem>>, vector<256x128xf32>,
    } else {
    }
    %c0 = arith.constant 0 : index
    %c0_1 = arith.constant 0 : index
    %3 = vector.load %arg10[%c0, %c0_1] : memref<256x128xf32, #tpu.memory_space<vmem>>, vector<256x128xf32>
    %c128_i32 = arith.constant 128 : i32
    %4 = arith.muli %arg1, %c128_i32 : i32
    %5 = tpu.assume_multiple %4, 128 : i32
    %6 = arith.index_cast %5 : i32 to index
    %c0_2 = arith.constant 0 : index
    %7 = vector.load %arg11[%6, %c0_2] : memref<256x128xf32, #tpu.memory_space<vmem>>, vector<128x128xf32>
    %c0_3 = arith.constant 0 : index
    %c0_4 = arith.constant 0 : index
    %8 = vector.load %arg6[%c0_3, %c0_4] : memref<1x128xf32, #tpu.memory_space<vmem>>, vector<1x128xf32>
    %c0_5 = arith.constant 0 : index
    %c0_6 = arith.constant 0 : index
    %9 = vector.load %arg8[%c0_5, %c0_6] : memref<1x128xf32, #tpu.memory_space<vmem>>, vector<1x128xf32>
    %c0_7 = arith.constant 0 : index
    %c0_8 = arith.constant 0 : index
    %10 = vector.load %arg7[%c0_7, %c0_8] : memref<128x128xbf16, #tpu.memory_space<vmem>>, vector<128x128xbf16>
    %c0_9 = arith.constant 0 : index
    %c0_10 = arith.constant 0 : index
    %c0_11 = arith.constant 0 : index
    %11 = vector.load %arg3[%c0_9, %c0_10, %c0_11] : memref<1x128x8xi32, #tpu.memory_space<vmem>>, vector<1x128x8xi32>
    %12 = vector.shape_cast %11 : vector<1x128x8xi32> to vector<128x8xi32>
    %13 = tpu.iota {dimensions = array<i32: 1>} : vector<128x256xi32>
    %14 = vector.extract_strided_slice %12 {offsets = [0, 0], sizes = [128, 1], strides = [1, 1]} : vector<128x8xi32> to vector<128x1xi32>
    %15 = vector.broadcast %14 : vector<128x1xi32> to vector<128x256xi32>
    %16 = arith.cmpi eq, %15, %13 : vector<128x256xi32>
    %17 = arith.extui %16 : vector<128x256xi1> to vector<128x256xi32>
    %18 = arith.sitofp %17 : vector<128x256xi32> to vector<128x256xf32>
    %cst = arith.constant dense<0.000000e+00> : vector<128x128xf32>
    %19 = tpu.matmul %18, %3, %cst {dimension_numbers = #tpu.dot_dimension_numbers<[1], [0], [0], [1], [0, 0, 1, 1], [], []>} : vector<128x256xf32>, vector<256x128xf32>, vector<128x128xf32> -> vector<128x128xf32>
    %20 = arith.addf %19, %7 : vector<128x128xf32>
    %21 = vector.broadcast %8 : vector<1x128xf32> to vector<128x128xf32>
    %22 = arith.addf %20, %21 : vector<128x128xf32>
    %cst_12 = arith.constant 0.000000e+00 : f32
    %23 = vector.broadcast %cst_12 : f32 to vector<128x128xf32>
    %24 = arith.maximumf %22, %23 : vector<128x128xf32>
    %25 = arith.truncf %24 : vector<128x128xf32> to vector<128x128xbf16>
    %cst_13 = arith.constant dense<0.000000e+00> : vector<128x128xf32>
    %26 = tpu.matmul %25, %10, %cst_13 {dimension_numbers = #tpu.dot_dimension_numbers<[1], [0], [0], [1], [0, 0, 1, 1], [], []>} : vector<128x128xbf16>, vector<128x128xbf16>, vector<128x128xf32> -> vector<128x128xf32>
    %27 = vector.broadcast %9 : vector<1x128xf32> to vector<128x128xf32>
    %28 = arith.addf %26, %27 : vector<128x128xf32>
    %cst_14 = arith.constant 0.000000e+00 : f32
    %29 = vector.broadcast %cst_14 : f32 to vector<128x128xf32>
    %30 = arith.maximumf %28, %29 : vector<128x128xf32>
    %31 = vector.extract_strided_slice %12 {offsets = [0, 1], sizes = [128, 1], strides = [1, 1]} : vector<128x8xi32> to vector<128x1xi32>
    %32 = vector.broadcast %31 : vector<128x1xi32> to vector<128x256xi32>
    %33 = arith.cmpi eq, %32, %13 : vector<128x256xi32>
    %34 = arith.extui %33 : vector<128x256xi1> to vector<128x256xi32>
    %35 = arith.sitofp %34 : vector<128x256xi32> to vector<128x256xf32>
    %cst_15 = arith.constant dense<0.000000e+00> : vector<128x128xf32>
    %36 = tpu.matmul %35, %3, %cst_15 {dimension_numbers = #tpu.dot_dimension_numbers<[1], [0], [0], [1], [0, 0, 1, 1], [], []>} : vector<128x256xf32>, vector<256x128xf32>, vector<128x128xf32> -> vector<128x128xf32>
    %37 = arith.addf %36, %7 : vector<128x128xf32>
    %38 = vector.broadcast %8 : vector<1x128xf32> to vector<128x128xf32>
    %39 = arith.addf %37, %38 : vector<128x128xf32>
    %cst_16 = arith.constant 0.000000e+00 : f32
    %40 = vector.broadcast %cst_16 : f32 to vector<128x128xf32>
    %41 = arith.maximumf %39, %40 : vector<128x128xf32>
    %42 = arith.truncf %41 : vector<128x128xf32> to vector<128x128xbf16>
    %cst_17 = arith.constant dense<0.000000e+00> : vector<128x128xf32>
    %43 = tpu.matmul %42, %10, %cst_17 {dimension_numbers = #tpu.dot_dimension_numbers<[1], [0], [0], [1], [0, 0, 1, 1], [], []>} : vector<128x128xbf16>, vector<128x128xbf16>, vector<128x128xf32> -> vector<128x128xf32>
    %44 = vector.broadcast %9 : vector<1x128xf32> to vector<128x128xf32>
    %45 = arith.addf %43, %44 : vector<128x128xf32>
    %cst_18 = arith.constant 0.000000e+00 : f32
    %46 = vector.broadcast %cst_18 : f32 to vector<128x128xf32>
    %47 = arith.maximumf %45, %46 : vector<128x128xf32>
    %48 = arith.maximumf %30, %47 : vector<128x128xf32>
    %49 = vector.extract_strided_slice %12 {offsets = [0, 2], sizes = [128, 1], strides = [1, 1]} : vector<128x8xi32> to vector<128x1xi32>
    %50 = vector.broadcast %49 : vector<128x1xi32> to vector<128x256xi32>
    %51 = arith.cmpi eq, %50, %13 : vector<128x256xi32>
    %52 = arith.extui %51 : vector<128x256xi1> to vector<128x256xi32>
    %53 = arith.sitofp %52 : vector<128x256xi32> to vector<128x256xf32>
    %cst_19 = arith.constant dense<0.000000e+00> : vector<128x128xf32>
    %54 = tpu.matmul %53, %3, %cst_19 {dimension_numbers = #tpu.dot_dimension_numbers<[1], [0], [0], [1], [0, 0, 1, 1], [], []>} : vector<128x256xf32>, vector<256x128xf32>, vector<128x128xf32> -> vector<128x128xf32>
    %55 = arith.addf %54, %7 : vector<128x128xf32>
    %56 = vector.broadcast %8 : vector<1x128xf32> to vector<128x128xf32>
    %57 = arith.addf %55, %56 : vector<128x128xf32>
    %cst_20 = arith.constant 0.000000e+00 : f32
    %58 = vector.broadcast %cst_20 : f32 to vector<128x128xf32>
    %59 = arith.maximumf %57, %58 : vector<128x128xf32>
    %60 = arith.truncf %59 : vector<128x128xf32> to vector<128x128xbf16>
    %cst_21 = arith.constant dense<0.000000e+00> : vector<128x128xf32>
    %61 = tpu.matmul %60, %10, %cst_21 {dimension_numbers = #tpu.dot_dimension_numbers<[1], [0], [0], [1], [0, 0, 1, 1], [], []>} : vector<128x128xbf16>, vector<128x128xbf16>, vector<128x128xf32> -> vector<128x128xf32>
    %62 = vector.broadcast %9 : vector<1x128xf32> to vector<128x128xf32>
    %63 = arith.addf %61, %62 : vector<128x128xf32>
    %cst_22 = arith.constant 0.000000e+00 : f32
    %64 = vector.broadcast %cst_22 : f32 to vector<128x128xf32>
    %65 = arith.maximumf %63, %64 : vector<128x128xf32>
    %66 = arith.maximumf %48, %65 : vector<128x128xf32>
    %67 = vector.extract_strided_slice %12 {offsets = [0, 3], sizes = [128, 1], strides = [1, 1]} : vector<128x8xi32> to vector<128x1xi32>
    %68 = vector.broadcast %67 : vector<128x1xi32> to vector<128x256xi32>
    %69 = arith.cmpi eq, %68, %13 : vector<128x256xi32>
    %70 = arith.extui %69 : vector<128x256xi1> to vector<128x256xi32>
    %71 = arith.sitofp %70 : vector<128x256xi32> to vector<128x256xf32>
    %cst_23 = arith.constant dense<0.000000e+00> : vector<128x128xf32>
    %72 = tpu.matmul %71, %3, %cst_23 {dimension_numbers = #tpu.dot_dimension_numbers<[1], [0], [0], [1], [0, 0, 1, 1], [], []>} : vector<128x256xf32>, vector<256x128xf32>, vector<128x128xf32> -> vector<128x128xf32>
    %73 = arith.addf %72, %7 : vector<128x128xf32>
    %74 = vector.broadcast %8 : vector<1x128xf32> to vector<128x128xf32>
    %75 = arith.addf %73, %74 : vector<128x128xf32>
    %cst_24 = arith.constant 0.000000e+00 : f32
    %76 = vector.broadcast %cst_24 : f32 to vector<128x128xf32>
    %77 = arith.maximumf %75, %76 : vector<128x128xf32>
    %78 = arith.truncf %77 : vector<128x128xf32> to vector<128x128xbf16>
    %cst_25 = arith.constant dense<0.000000e+00> : vector<128x128xf32>
    %79 = tpu.matmul %78, %10, %cst_25 {dimension_numbers = #tpu.dot_dimension_numbers<[1], [0], [0], [1], [0, 0, 1, 1], [], []>} : vector<128x128xbf16>, vector<128x128xbf16>, vector<128x128xf32> -> vector<128x128xf32>
    %80 = vector.broadcast %9 : vector<1x128xf32> to vector<128x128xf32>
    %81 = arith.addf %79, %80 : vector<128x128xf32>
    %cst_26 = arith.constant 0.000000e+00 : f32
    %82 = vector.broadcast %cst_26 : f32 to vector<128x128xf32>
    %83 = arith.maximumf %81, %82 : vector<128x128xf32>
    %84 = arith.maximumf %66, %83 : vector<128x128xf32>
    %85 = vector.extract_strided_slice %12 {offsets = [0, 4], sizes = [128, 1], strides = [1, 1]} : vector<128x8xi32> to vector<128x1xi32>
    %86 = vector.broadcast %85 : vector<128x1xi32> to vector<128x256xi32>
    %87 = arith.cmpi eq, %86, %13 : vector<128x256xi32>
    %88 = arith.extui %87 : vector<128x256xi1> to vector<128x256xi32>
    %89 = arith.sitofp %88 : vector<128x256xi32> to vector<128x256xf32>
    %cst_27 = arith.constant dense<0.000000e+00> : vector<128x128xf32>
    %90 = tpu.matmul %89, %3, %cst_27 {dimension_numbers = #tpu.dot_dimension_numbers<[1], [0], [0], [1], [0, 0, 1, 1], [], []>} : vector<128x256xf32>, vector<256x128xf32>, vector<128x128xf32> -> vector<128x128xf32>
    %91 = arith.addf %90, %7 : vector<128x128xf32>
    %92 = vector.broadcast %8 : vector<1x128xf32> to vector<128x128xf32>
    %93 = arith.addf %91, %92 : vector<128x128xf32>
    %cst_28 = arith.constant 0.000000e+00 : f32
    %94 = vector.broadcast %cst_28 : f32 to vector<128x128xf32>
    %95 = arith.maximumf %93, %94 : vector<128x128xf32>
    %96 = arith.truncf %95 : vector<128x128xf32> to vector<128x128xbf16>
    %cst_29 = arith.constant dense<0.000000e+00> : vector<128x128xf32>
    %97 = tpu.matmul %96, %10, %cst_29 {dimension_numbers = #tpu.dot_dimension_numbers<[1], [0], [0], [1], [0, 0, 1, 1], [], []>} : vector<128x128xbf16>, vector<128x128xbf16>, vector<128x128xf32> -> vector<128x128xf32>
    %98 = vector.broadcast %9 : vector<1x128xf32> to vector<128x128xf32>
    %99 = arith.addf %97, %98 : vector<128x128xf32>
    %cst_30 = arith.constant 0.000000e+00 : f32
    %100 = vector.broadcast %cst_30 : f32 to vector<128x128xf32>
    %101 = arith.maximumf %99, %100 : vector<128x128xf32>
    %102 = arith.maximumf %84, %101 : vector<128x128xf32>
    %103 = vector.extract_strided_slice %12 {offsets = [0, 5], sizes = [128, 1], strides = [1, 1]} : vector<128x8xi32> to vector<128x1xi32>
    %104 = vector.broadcast %103 : vector<128x1xi32> to vector<128x256xi32>
    %105 = arith.cmpi eq, %104, %13 : vector<128x256xi32>
    %106 = arith.extui %105 : vector<128x256xi1> to vector<128x256xi32>
    %107 = arith.sitofp %106 : vector<128x256xi32> to vector<128x256xf32>
    %cst_31 = arith.constant dense<0.000000e+00> : vector<128x128xf32>
    %108 = tpu.matmul %107, %3, %cst_31 {dimension_numbers = #tpu.dot_dimension_numbers<[1], [0], [0], [1], [0, 0, 1, 1], [], []>} : vector<128x256xf32>, vector<256x128xf32>, vector<128x128xf32> -> vector<128x128xf32>
    %109 = arith.addf %108, %7 : vector<128x128xf32>
    %110 = vector.broadcast %8 : vector<1x128xf32> to vector<128x128xf32>
    %111 = arith.addf %109, %110 : vector<128x128xf32>
    %cst_32 = arith.constant 0.000000e+00 : f32
    %112 = vector.broadcast %cst_32 : f32 to vector<128x128xf32>
    %113 = arith.maximumf %111, %112 : vector<128x128xf32>
    %114 = arith.truncf %113 : vector<128x128xf32> to vector<128x128xbf16>
    %cst_33 = arith.constant dense<0.000000e+00> : vector<128x128xf32>
    %115 = tpu.matmul %114, %10, %cst_33 {dimension_numbers = #tpu.dot_dimension_numbers<[1], [0], [0], [1], [0, 0, 1, 1], [], []>} : vector<128x128xbf16>, vector<128x128xbf16>, vector<128x128xf32> -> vector<128x128xf32>
    %116 = vector.broadcast %9 : vector<1x128xf32> to vector<128x128xf32>
    %117 = arith.addf %115, %116 : vector<128x128xf32>
    %cst_34 = arith.constant 0.000000e+00 : f32
    %118 = vector.broadcast %cst_34 : f32 to vector<128x128xf32>
    %119 = arith.maximumf %117, %118 : vector<128x128xf32>
    %120 = arith.maximumf %102, %119 : vector<128x128xf32>
    %121 = vector.extract_strided_slice %12 {offsets = [0, 6], sizes = [128, 1], strides = [1, 1]} : vector<128x8xi32> to vector<128x1xi32>
    %122 = vector.broadcast %121 : vector<128x1xi32> to vector<128x256xi32>
    %123 = arith.cmpi eq, %122, %13 : vector<128x256xi32>
    %124 = arith.extui %123 : vector<128x256xi1> to vector<128x256xi32>
    %125 = arith.sitofp %124 : vector<128x256xi32> to vector<128x256xf32>
    %cst_35 = arith.constant dense<0.000000e+00> : vector<128x128xf32>
    %126 = tpu.matmul %125, %3, %cst_35 {dimension_numbers = #tpu.dot_dimension_numbers<[1], [0], [0], [1], [0, 0, 1, 1], [], []>} : vector<128x256xf32>, vector<256x128xf32>, vector<128x128xf32> -> vector<128x128xf32>
    %127 = arith.addf %126, %7 : vector<128x128xf32>
    %128 = vector.broadcast %8 : vector<1x128xf32> to vector<128x128xf32>
    %129 = arith.addf %127, %128 : vector<128x128xf32>
    %cst_36 = arith.constant 0.000000e+00 : f32
    %130 = vector.broadcast %cst_36 : f32 to vector<128x128xf32>
    %131 = arith.maximumf %129, %130 : vector<128x128xf32>
    %132 = arith.truncf %131 : vector<128x128xf32> to vector<128x128xbf16>
    %cst_37 = arith.constant dense<0.000000e+00> : vector<128x128xf32>
    %133 = tpu.matmul %132, %10, %cst_37 {dimension_numbers = #tpu.dot_dimension_numbers<[1], [0], [0], [1], [0, 0, 1, 1], [], []>} : vector<128x128xbf16>, vector<128x128xbf16>, vector<128x128xf32> -> vector<128x128xf32>
    %134 = vector.broadcast %9 : vector<1x128xf32> to vector<128x128xf32>
    %135 = arith.addf %133, %134 : vector<128x128xf32>
    %cst_38 = arith.constant 0.000000e+00 : f32
    %136 = vector.broadcast %cst_38 : f32 to vector<128x128xf32>
    %137 = arith.maximumf %135, %136 : vector<128x128xf32>
    %138 = arith.maximumf %120, %137 : vector<128x128xf32>
    %139 = vector.extract_strided_slice %12 {offsets = [0, 7], sizes = [128, 1], strides = [1, 1]} : vector<128x8xi32> to vector<128x1xi32>
    %140 = vector.broadcast %139 : vector<128x1xi32> to vector<128x256xi32>
    %141 = arith.cmpi eq, %140, %13 : vector<128x256xi32>
    %142 = arith.extui %141 : vector<128x256xi1> to vector<128x256xi32>
    %143 = arith.sitofp %142 : vector<128x256xi32> to vector<128x256xf32>
    %cst_39 = arith.constant dense<0.000000e+00> : vector<128x128xf32>
    %144 = tpu.matmul %143, %3, %cst_39 {dimension_numbers = #tpu.dot_dimension_numbers<[1], [0], [0], [1], [0, 0, 1, 1], [], []>} : vector<128x256xf32>, vector<256x128xf32>, vector<128x128xf32> -> vector<128x128xf32>
    %145 = arith.addf %144, %7 : vector<128x128xf32>
    %146 = vector.broadcast %8 : vector<1x128xf32> to vector<128x128xf32>
    %147 = arith.addf %145, %146 : vector<128x128xf32>
    %cst_40 = arith.constant 0.000000e+00 : f32
    %148 = vector.broadcast %cst_40 : f32 to vector<128x128xf32>
    %149 = arith.maximumf %147, %148 : vector<128x128xf32>
    %150 = arith.truncf %149 : vector<128x128xf32> to vector<128x128xbf16>
    %cst_41 = arith.constant dense<0.000000e+00> : vector<128x128xf32>
    %151 = tpu.matmul %150, %10, %cst_41 {dimension_numbers = #tpu.dot_dimension_numbers<[1], [0], [0], [1], [0, 0, 1, 1], [], []>} : vector<128x128xbf16>, vector<128x128xbf16>, vector<128x128xf32> -> vector<128x128xf32>
    %152 = vector.broadcast %9 : vector<1x128xf32> to vector<128x128xf32>
    %153 = arith.addf %151, %152 : vector<128x128xf32>
    %cst_42 = arith.constant 0.000000e+00 : f32
    %154 = vector.broadcast %cst_42 : f32 to vector<128x128xf32>
    %155 = arith.maximumf %153, %154 : vector<128x128xf32>
    %156 = arith.maximumf %138, %155 : vector<128x128xf32>
    %c0_43 = arith.constant 0 : index
    %c0_44 = arith.constant 0 : index
    %c0_45 = arith.constant 0 : index
    %157 = vector.load %arg9[%c0_43, %c0_44, %c0_45] : memref<1x128x128xf32, #tpu.memory_space<vmem>>, vector<1x128x128xf32>
    %158 = vector.shape_cast %157 : vector<1x128x128xf32> to vector<128x128xf32>
    %159 = vector.shape_cast %156 : vector<128x128xf32> to vector<1x128x128xf32>
    tpu.vector_store %arg9[%c0_43, %c0_44, %c0_45], %159 {strides = array<i32>} : memref<1x128x128xf32, #tpu.memory_space<vmem>>, vector<1x128x128xf32>,
    return
  }
  func.func @transform_0(%arg0: i32, %arg1: i32) -> (i32, i32, i32) {
    %c0_i32 = arith.constant 0 : i32
    %c0_i32_0 = arith.constant 0 : i32
    %c0_i32_1 = arith.constant 0 : i32
    return %arg0, %c0_i32, %c0_i32_0 : i32, i32, i32
  }
  func.func @transform_1(%arg0: i32, %arg1: i32) -> (i32, i32, i32) {
    %c0_i32 = arith.constant 0 : i32
    %c0_i32_0 = arith.constant 0 : i32
    return %arg0, %arg1, %c0_i32 : i32, i32, i32
  }
  func.func @transform_2(%arg0: i32, %arg1: i32) -> (i32, i32) {
    %c0_i32 = arith.constant 0 : i32
    %c0_i32_0 = arith.constant 0 : i32
    %c0_i32_1 = arith.constant 0 : i32
    return %c0_i32, %c0_i32_0 : i32, i32
  }
  func.func @transform_3(%arg0: i32, %arg1: i32) -> (i32, i32) {
    %c0_i32 = arith.constant 0 : i32
    %c0_i32_0 = arith.constant 0 : i32
    %c0_i32_1 = arith.constant 0 : i32
    return %c0_i32, %c0_i32_0 : i32, i32
  }
  func.func @transform_4(%arg0: i32, %arg1: i32) -> (i32, i32) {
    %c0_i32 = arith.constant 0 : i32
    %c0_i32_0 = arith.constant 0 : i32
    %c0_i32_1 = arith.constant 0 : i32
    return %c0_i32, %c0_i32_0 : i32, i32
  }
  func.func @transform_5(%arg0: i32, %arg1: i32) -> (i32, i32) {
    %c0_i32 = arith.constant 0 : i32
    %c0_i32_0 = arith.constant 0 : i32
    %c0_i32_1 = arith.constant 0 : i32
    return %c0_i32, %c0_i32_0 : i32, i32
  }
  func.func @transform_6(%arg0: i32, %arg1: i32) -> (i32, i32) {
    %c0_i32 = arith.constant 0 : i32
    %c0_i32_0 = arith.constant 0 : i32
    %c0_i32_1 = arith.constant 0 : i32
    return %c0_i32, %c0_i32_0 : i32, i32
  }
  func.func @transform_7(%arg0: i32, %arg1: i32) -> (i32, i32, i32) {
    %c0_i32 = arith.constant 0 : i32
    %c0_i32_0 = arith.constant 0 : i32
    return %arg0, %arg1, %c0_i32 : i32, i32, i32
  }
}

</mosaic_0001>

<llo_original>
// kernel: edgeconv_forward.2
$region0: #{edgeconv_forward.2}
  #allocation0 [shape = 'u32[]', space=smem, size = 0x4, offset = 0x4, fixed_abs, tag = 'smem constant byte address 0x4 - core index']
  #allocation1 [shape = 'u32[72,128]{1,0:T(1,128)}', space=vmem, size = 0x9000, scoped, tag = 'internal scratch']
  %s0 = inlined_call_operand.vmem [shape: f32[2,256,128], index: 0, kind: input, shape index: {}, may-alias: {0,1}]
  %s1 = inlined_call_operand.vmem [shape: f32[2,256,128], index: 1, kind: input, shape index: {}, may-alias: {0,1}]
  %s2 = inlined_call_operand.vmem [shape: f32[2,256,256], index: 2, kind: output, shape index: {}]
  %s3 = sld [smem:[#allocation0]]
  $region41: #{edgeconv_forward.2} parent=0
    _
  %s5 = ssub.s32 1, %s3
  %s6 = scalar_select 0, %s5, %s3
  loop: start=0, step=1, limit=6
  $region2: #{edgeconv_forward.2} parent=0 // loop_pre_header
    _
  $region3: #{edgeconv_forward.2} parent=0 // loop_header
    %s8 = sphi 0, %s12
    %p9 = scmp.ge.s32.totalorder %s8, 6
    %s15 = sphi 0, %s27
    %s16 = sphi 0, %s23
    %s17 = sphi 0, %s15
    %s18 = sphi 0, %s16
    %s19 = sphi 0, %s17
    %s20 = sphi 0, %s18
    %s32 = sphi 0, %s34
    %s35 = sphi 0, %s32
    %s36 = sphi 0, %s35
    %s52 = sphi 0, %s36
    %s58 = sphi 0, %s60
    %s61 = sphi 0, %s58
    %s62 = sphi 0, %s61
    %s78 = sphi 0, %s62
    %s86 = sphi 0, %s88
    %s89 = sphi 0, %s86
    %s90 = sphi 0, %s89
    %s106 = sphi 0, %s90
  $region4: #{edgeconv_forward.2} parent=0 // loop_header_branch
    %11 = sbr.rel (%p9) target = $region8
  $region5: #{edgeconv_forward.2} parent=0 // loop_body
    %s13 = ssub.s32 %s8, 1
    %s14 = ssub.s32 %s8, 2
    %s21 = sadd.s32 1, %s16
    %p22 = scmp.ge.s32.totalorder %s21, 2
    %s23 = scalar_select %p22, 0, %s21
    %s24 = sadd.s32 1, %s15
    %s25 = scalar_select %p22, %s24, %s15
    %p26 = scmp.ge.s32.totalorder %s25, 2
    %s27 = scalar_select %p26, 0, %s25
    %s28 = ssub.s32 %s15, %s27
    %s29 = ssub.s32 %s16, %s23
    %s30 = sor.u32 %s28, %s29
    %p31 = scmp.eq.s32.totalorder %s30, 0
    %s33 = sadd.s32 %s32, 1
    %s34 = scalar_select %p31, %s32, %s33
    %p37 = pneg %p31
    %p38 = scmp.eq.s32.totalorder %s8, 3
    %p39 = por %p37, %p38
    %p40 = scmp.ne.s32.totalorder %s32, %s35
    %p41 = scmp.eq.s32.totalorder %s8, 0
    %p42 = por %p40, %p41
    %p43 = scmp.ne.s32.totalorder %s32, %s35
    %p44 = scmp.eq.s32.totalorder %s13, 3
    %p45 = por %p43, %p44
    %p46 = scmp.ne.s32.totalorder %s35, %s36
    %p47 = scmp.eq.s32.totalorder %s13, 0
    %p48 = por %p46, %p47
    %p49 = scmp.ne.s32.totalorder %s35, %s36
    %p50 = scmp.eq.s32.totalorder %s14, 3
    %p51 = por %p49, %p50
    %p53 = scmp.ne.s32.totalorder %s36, %s52
    %p54 = scmp.eq.s32.totalorder %s14, 0
    %p55 = por %p53, %p54
    %s56 = ssub.s32 %s15, %s27
    %p57 = scmp.eq.s32.totalorder %s56, 0
    %s59 = sadd.s32 %s58, 1
    %s60 = scalar_select %p57, %s58, %s59
    %p63 = pneg %p57
    %p64 = scmp.eq.s32.totalorder %s8, 3
    %p65 = por %p63, %p64
    %p66 = scmp.ne.s32.totalorder %s58, %s61
    %p67 = scmp.eq.s32.totalorder %s8, 0
    %p68 = por %p66, %p67
    %p69 = scmp.ne.s32.totalorder %s58, %s61
    %p70 = scmp.eq.s32.totalorder %s13, 3
    %p71 = por %p69, %p70
    %p72 = scmp.ne.s32.totalorder %s61, %s62
    %p73 = scmp.eq.s32.totalorder %s13, 0
    %p74 = por %p72, %p73
    %p75 = scmp.ne.s32.totalorder %s61, %s62
    %p76 = scmp.eq.s32.totalorder %s14, 3
    %p77 = por %p75, %p76
    %p79 = scmp.ne.s32.totalorder %s62, %s78
    %p80 = scmp.eq.s32.totalorder %s14, 0
    %p81 = por %p79, %p80
    %s82 = ssub.s32 %s15, %s27
    %s83 = ssub.s32 %s16, %s23
    %s84 = sor.u32 %s82, %s83
    %p85 = scmp.eq.s32.totalorder %s84, 0
    %s87 = sadd.s32 %s86, 1
    %s88 = scalar_select %p85, %s86, %s87
    %p91 = pneg %p85
    %p92 = scmp.eq.s32.totalorder %s8, 3
    %p93 = por %p91, %p92
    %p94 = scmp.ne.s32.totalorder %s86, %s89
    %p95 = scmp.eq.s32.totalorder %s8, 0
    %p96 = por %p94, %p95
    %p97 = scmp.ne.s32.totalorder %s86, %s89
    %p98 = scmp.eq.s32.totalorder %s13, 3
    %p99 = por %p97, %p98
    %p100 = scmp.ne.s32.totalorder %s89, %s90
    %p101 = scmp.eq.s32.totalorder %s13, 0
    %p102 = por %p100, %p101
    %p103 = scmp.ne.s32.totalorder %s89, %s90
    %p104 = scmp.eq.s32.totalorder %s14, 3
    %p105 = por %p103, %p104
    %p107 = scmp.ne.s32.totalorder %s90, %s106
    %p108 = scmp.eq.s32.totalorder %s14, 0
    %p109 = por %p107, %p108
    %p110 = scmp.le.s32.totalorder 1, %s8
    %p111 = scmp.lt.s32.totalorder %s8, 5
    %p112 = pnand %p110, %p111
    %p113 = pneg %p112
    // Predicated region
    $region9: #{edgeconv_forward.2} parent=5 // pred_check
      _
    $region10: #{edgeconv_forward.2} parent=5 // pred_check_branch
      %115 = sbr.rel (%p112) target = $region12
    $region11: #{edgeconv_forward.2} parent=5 // pred_region
      %s116 = ssub.s32 %s8, 1
    $region12: #{edgeconv_forward.2} parent=5 // pred_fallthru
      _
    %p117 = scmp.lt.s32.totalorder %s8, 4
    // Predicated region
    $region13: #{edgeconv_forward.2} parent=5 // pred_check
      %p118 = pneg %p117
    $region14: #{edgeconv_forward.2} parent=5 // pred_check_branch
      %120 = sbr.rel (%p118) target = $region16
    $region15: #{edgeconv_forward.2} parent=5 // pred_region
      // Predicated region
      $region17: #{edgeconv_forward.2} parent=15 // pred_check
        %p121 = pneg %p42
      $region18: #{edgeconv_forward.2} parent=15 // pred_check_branch
        %123 = sbr.rel (%p121) target = $region20
      $region19: #{edgeconv_forward.2} parent=15 // pred_region
        %s124 = smul.u32 16, %s16
        %p125 = scmp.lt.s32.totalorder %s15, 1
        %s126 = scalar_select %p125, %s15, 1
        %p127 = scmp.lt.s32.totalorder %s124, 31
        %s128 = scalar_select %p127, %s124, 31
        %s129 = smul.addr %s126, 32
        %s130 = sadd.s32 %s128, %s129
        %s131 = smul.addr %s130, 8
        %s132 = scalar_lea.vmem %s0, %s131
        %s133 = smul.u32 16, %s16
      $region20: #{edgeconv_forward.2} parent=15 // pred_fallthru
        _
      // Predicated region
      $region21: #{edgeconv_forward.2} parent=15 // pred_check
        %p134 = pneg %p68
      $region22: #{edgeconv_forward.2} parent=15 // pred_check_branch
        %136 = sbr.rel (%p134) target = $region24
      $region23: #{edgeconv_forward.2} parent=15 // pred_region
        %p137 = scmp.lt.s32.totalorder %s15, 1
        %s138 = scalar_select %p137, %s15, 1
        %s139 = smul.addr %s138, 32
        %s140 = smul.addr %s139, 8
        %s141 = scalar_lea.vmem %s1, %s140
      $region24: #{edgeconv_forward.2} parent=15 // pred_fallthru
        _
    $region16: #{edgeconv_forward.2} parent=5 // pred_fallthru
      _
    %p142 = scmp.le.s32.totalorder 1, %s8
    %p143 = scmp.lt.s32.totalorder %s8, 5
    %p144 = pnand %p142, %p143
    %p145 = pneg %p144
    // Predicated region
    $region25: #{edgeconv_forward.2} parent=5 // pred_check
      _
    $region26: #{edgeconv_forward.2} parent=5 // pred_check_branch
      %147 = sbr.rel (%p144) target = $region28
    $region27: #{edgeconv_forward.2} parent=5 // pred_region
      %s148 = ssub.s32 %s8, 1
      %s149 = smul.u32 16, %s18
      %p150 = scmp.lt.s32.totalorder %s17, 1
      %s151 = scalar_select %p150, %s17, 1
      %p152 = scmp.lt.s32.totalorder %s149, 31
      %s153 = scalar_select %p152, %s149, 31
      %s154 = smul.addr %s151, 32
      %s155 = sadd.s32 %s153, %s154
      %s156 = smul.addr %s155, 8
      %s157 = scalar_lea.vmem %s0, %s156
      %p158 = pneg %p48
      %p159 = pneg %p45
      %p160 = scmp.lt.s32.totalorder %s17, 1
      %s161 = scalar_select %p160, %s17, 1
      %s162 = smul.addr %s161, 32
      %s163 = smul.addr %s162, 8
      %s164 = scalar_lea.vmem %s1, %s163
      %p165 = pneg %p74
      %p166 = pneg %p71
      %p167 = pneg %p102
      %p168 = pneg %p99
      %s169 = smul.u32 16, %s18
      %p170 = scmp.lt.s32.totalorder %s17, 1
      %s171 = scalar_select %p170, %s17, 1
      %p172 = scmp.lt.s32.totalorder %s169, 31
      %s173 = scalar_select %p172, %s169, 31
      %s174 = smul.addr %s173, 2
      %s175 = smul.addr %s171, 64
      %s176 = sadd.s32 %s174, %s175
      %s177 = smul.addr %s176, 8
      %s178 = scalar_lea.vmem %s2, %s177
      %s179 = smul.u32 16, %s18
      %p180 = scmp.lt.s32.totalorder %s17, 1
      %s181 = scalar_select %p180, %s17, 1
      %p182 = scmp.lt.s32.totalorder %s179, 31
      %s183 = scalar_select %p182, %s179, 31
      %s184 = smul.addr %s181, 32
      %s185 = sadd.s32 %s183, %s184
      %s186 = smul.addr %s185, 8
      %s187 = scalar_lea.vmem %s0, %s186
      %s188 = smul.u32 16, %s18
      %p189 = scmp.lt.s32.totalorder %s17, 1
      %s190 = scalar_select %p189, %s17, 1
      %s191 = smul.addr %s190, 32
      %s192 = smul.addr %s191, 8
      %s193 = scalar_lea.vmem %s1, %s192
      %s194 = smul.u32 16, %s18
      %p195 = scmp.lt.s32.totalorder %s17, 1
      %s196 = scalar_select %p195, %s17, 1
      %p197 = scmp.lt.s32.totalorder %s194, 31
      %s198 = scalar_select %p197, %s194, 31
      %s199 = smul.addr %s198, 2
      %s200 = smul.addr %s196, 64
      %s201 = sadd.s32 %s199, %s200
      %s202 = smul.addr %s201, 8
      %s203 = scalar_lea.vmem %s2, %s202
      %s204 = smul.u32 16, %s18
      %v205 = vld [vmem:[%s187] sm:$0xff]
      %v206 = vld [vmem:[%s187 + $0x8] sm:$0xff]
      %v207 = vld [vmem:[%s187 + $0x10] sm:$0xff]
      %v208 = vld [vmem:[%s187 + $0x18] sm:$0xff]
      %v209 = vld [vmem:[%s187 + $0x20] sm:$0xff]
      %v210 = vld [vmem:[%s187 + $0x28] sm:$0xff]
      %v211 = vld [vmem:[%s187 + $0x30] sm:$0xff]
      %v212 = vld [vmem:[%s187 + $0x38] sm:$0xff]
      %v213 = vld [vmem:[%s187 + $0x40] sm:$0xff]
      %v214 = vld [vmem:[%s187 + $0x48] sm:$0xff]
      %v215 = vld [vmem:[%s187 + $0x50] sm:$0xff]
      %v216 = vld [vmem:[%s187 + $0x58] sm:$0xff]
      %v217 = vld [vmem:[%s187 + $0x60] sm:$0xff]
      %v218 = vld [vmem:[%s187 + $0x68] sm:$0xff]
      %v219 = vld [vmem:[%s187 + $0x70] sm:$0xff]
      %v220 = vld [vmem:[%s187 + $0x78] sm:$0xff]
      %v221 = vld [vmem:[%s193] sm:$0xff]
      %v222 = vld [vmem:[%s193 + $0x8] sm:$0xff]
      %v223 = vld [vmem:[%s193 + $0x10] sm:$0xff]
      %v224 = vld [vmem:[%s193 + $0x18] sm:$0xff]
      %v225 = vld [vmem:[%s193 + $0x20] sm:$0xff]
      %v226 = vld [vmem:[%s193 + $0x28] sm:$0xff]
      %v227 = vld [vmem:[%s193 + $0x30] sm:$0xff]
      %v228 = vld [vmem:[%s193 + $0x38] sm:$0xff]
      %v229 = vld [vmem:[%s193 + $0x40] sm:$0xff]
      %v230 = vld [vmem:[%s193 + $0x48] sm:$0xff]
      %v231 = vld [vmem:[%s193 + $0x50] sm:$0xff]
      %v232 = vld [vmem:[%s193 + $0x58] sm:$0xff]
      %v233 = vld [vmem:[%s193 + $0x60] sm:$0xff]
      %v234 = vld [vmem:[%s193 + $0x68] sm:$0xff]
      %v235 = vld [vmem:[%s193 + $0x70] sm:$0xff]
      %v236 = vld [vmem:[%s193 + $0x78] sm:$0xff]
      %v237 = vld [vmem:[%s193 + $0x80] sm:$0xff]
      %v238 = vld [vmem:[%s193 + $0x88] sm:$0xff]
      %v239 = vld [vmem:[%s193 + $0x90] sm:$0xff]
      %v240 = vld [vmem:[%s193 + $0x98] sm:$0xff]
      %v241 = vld [vmem:[%s193 + $0xa0] sm:$0xff]
      %v242 = vld [vmem:[%s193 + $0xa8] sm:$0xff]
      %v243 = vld [vmem:[%s193 + $0xb0] sm:$0xff]
      %v244 = vld [vmem:[%s193 + $0xb8] sm:$0xff]
      %v245 = vld [vmem:[%s193 + $0xc0] sm:$0xff]
      %v246 = vld [vmem:[%s193 + $0xc8] sm:$0xff]
      %v247 = vld [vmem:[%s193 + $0xd0] sm:$0xff]
      %v248 = vld [vmem:[%s193 + $0xd8] sm:$0xff]
      %v249 = vld [vmem:[%s193 + $0xe0] sm:$0xff]
      %v250 = vld [vmem:[%s193 + $0xe8] sm:$0xff]
      %v251 = vld [vmem:[%s193 + $0xf0] sm:$0xff]
      %v252 = vld [vmem:[%s193 + $0xf8] sm:$0xff]
      %253 = vmatpush.xpose.msra.mxu0 %v236
      %254 = vmatpush.xpose.msra.mxu0 %v235
      %255 = vmatpush.xpose.msra.mxu0 %v234
      %256 = vmatpush.xpose.msra.mxu0 %v233
      %257 = vmatpush.xpose.msra.mxu0 %v232
      %258 = vmatpush.xpose.msra.mxu0 %v231
      %259 = vmatpush.xpose.msra.mxu0 %v230
      %260 = vmatpush.xpose.msra.mxu0 %v229
      %261 = vmatpush.xpose.msra.mxu0 %v228
      %262 = vmatpush.xpose.msra.mxu0 %v227
      %263 = vmatpush.xpose.msra.mxu0 %v226
      %264 = vmatpush.xpose.msra.mxu0 %v225
      %265 = vmatpush.xpose.msra.mxu0 %v224
      %266 = vmatpush.xpose.msra.mxu0 %v223
      %267 = vmatpush.xpose.msra.mxu0 %v222
      %268 = vmatpush.xpose.msra.mxu0 %v221
      %269 = vmatmul.f32.gmra.mxu0 %v205
      %v270 = vpop.f32.mrf.mxu0
      %v271 = vadd.f32 0.0, %v270
      %272 = vmatmul.f32.gmra.mxu0 %v206
      %v273 = vpop.f32.mrf.mxu0
      %v274 = vadd.f32 0.0, %v273
      %275 = vmatmul.f32.gmra.mxu0 %v207
      %v276 = vpop.f32.mrf.mxu0
      %v277 = vadd.f32 0.0, %v276
      %278 = vmatmul.f32.gmra.mxu0 %v208
      %v279 = vpop.f32.mrf.mxu0
      %v280 = vadd.f32 0.0, %v279
      %281 = vmatmul.f32.gmra.mxu0 %v209
      %v282 = vpop.f32.mrf.mxu0
      %v283 = vadd.f32 0.0, %v282
      %284 = vmatmul.f32.gmra.mxu0 %v210
      %v285 = vpop.f32.mrf.mxu0
      %v286 = vadd.f32 0.0, %v285
      %287 = vmatmul.f32.gmra.mxu0 %v211
      %v288 = vpop.f32.mrf.mxu0
      %v289 = vadd.f32 0.0, %v288
      %290 = vmatmul.f32.gmra.mxu0 %v212
      %v291 = vpop.f32.mrf.mxu0
      %v292 = vadd.f32 0.0, %v291
      %293 = vmatmul.f32.gmra.mxu0 %v213
      %v294 = vpop.f32.mrf.mxu0
      %v295 = vadd.f32 0.0, %v294
      %296 = vmatmul.f32.gmra.mxu0 %v214
      %v297 = vpop.f32.mrf.mxu0
      %v298 = vadd.f32 0.0, %v297
      %299 = vmatmul.f32.gmra.mxu0 %v215
      %v300 = vpop.f32.mrf.mxu0
      %v301 = vadd.f32 0.0, %v300
      %302 = vmatmul.f32.gmra.mxu0 %v216
      %v303 = vpop.f32.mrf.mxu0
      %v304 = vadd.f32 0.0, %v303
      %305 = vmatmul.f32.gmra.mxu0 %v217
      %v306 = vpop.f32.mrf.mxu0
      %v307 = vadd.f32 0.0, %v306
      %308 = vmatmul.f32.gmra.mxu0 %v218
      %v309 = vpop.f32.mrf.mxu0
      %v310 = vadd.f32 0.0, %v309
      %311 = vmatmul.f32.gmra.mxu0 %v219
      %v312 = vpop.f32.mrf.mxu0
      %v313 = vadd.f32 0.0, %v312
      %314 = vmatmul.f32.gmra.mxu0 %v220
      %v315 = vpop.f32.mrf.mxu0
      %v316 = vadd.f32 0.0, %v315
      %317 = vdwg.mxu0
      %318 = vmatpush.xpose.msra.mxu0 %v252
      %319 = vmatpush.xpose.msra.mxu0 %v251
      %320 = vmatpush.xpose.msra.mxu0 %v250
      %321 = vmatpush.xpose.msra.mxu0 %v249
      %322 = vmatpush.xpose.msra.mxu0 %v248
      %323 = vmatpush.xpose.msra.mxu0 %v247
      %324 = vmatpush.xpose.msra.mxu0 %v246
      %325 = vmatpush.xpose.msra.mxu0 %v245
      %326 = vmatpush.xpose.msra.mxu0 %v244
      %327 = vmatpush.xpose.msra.mxu0 %v243
      %328 = vmatpush.xpose.msra.mxu0 %v242
      %329 = vmatpush.xpose.msra.mxu0 %v241
      %330 = vmatpush.xpose.msra.mxu0 %v240
      %331 = vmatpush.xpose.msra.mxu0 %v239
      %332 = vmatpush.xpose.msra.mxu0 %v238
      %333 = vmatpush.xpose.msra.mxu0 %v237
      %334 = vmatmul.f32.gmra.mxu0 %v205
      %v335 = vpop.f32.mrf.mxu0
      %v336 = vadd.f32 0.0, %v335
      %337 = vmatmul.f32.gmra.mxu0 %v206
      %v338 = vpop.f32.mrf.mxu0
      %v339 = vadd.f32 0.0, %v338
      %340 = vmatmul.f32.gmra.mxu0 %v207
      %v341 = vpop.f32.mrf.mxu0
      %v342 = vadd.f32 0.0, %v341
      %343 = vmatmul.f32.gmra.mxu0 %v208
      %v344 = vpop.f32.mrf.mxu0
      %v345 = vadd.f32 0.0, %v344
      %346 = vmatmul.f32.gmra.mxu0 %v209
      %v347 = vpop.f32.mrf.mxu0
      %v348 = vadd.f32 0.0, %v347
      %349 = vmatmul.f32.gmra.mxu0 %v210
      %v350 = vpop.f32.mrf.mxu0
      %v351 = vadd.f32 0.0, %v350
      %352 = vmatmul.f32.gmra.mxu0 %v211
      %v353 = vpop.f32.mrf.mxu0
      %v354 = vadd.f32 0.0, %v353
      %355 = vmatmul.f32.gmra.mxu0 %v212
      %v356 = vpop.f32.mrf.mxu0
      %v357 = vadd.f32 0.0, %v356
      %358 = vmatmul.f32.gmra.mxu0 %v213
      %v359 = vpop.f32.mrf.mxu0
      %v360 = vadd.f32 0.0, %v359
      %361 = vmatmul.f32.gmra.mxu0 %v214
      %v362 = vpop.f32.mrf.mxu0
      %v363 = vadd.f32 0.0, %v362
      %364 = vmatmul.f32.gmra.mxu0 %v215
      %v365 = vpop.f32.mrf.mxu0
      %v366 = vadd.f32 0.0, %v365
      %367 = vmatmul.f32.gmra.mxu0 %v216
      %v368 = vpop.f32.mrf.mxu0
      %v369 = vadd.f32 0.0, %v368
      %370 = vmatmul.f32.gmra.mxu0 %v217
      %v371 = vpop.f32.mrf.mxu0
      %v372 = vadd.f32 0.0, %v371
      %373 = vmatmul.f32.gmra.mxu0 %v218
      %v374 = vpop.f32.mrf.mxu0
      %v375 = vadd.f32 0.0, %v374
      %376 = vmatmul.f32.gmra.mxu0 %v219
      %v377 = vpop.f32.mrf.mxu0
      %v378 = vadd.f32 0.0, %v377
      %379 = vmatmul.f32.gmra.mxu0 %v220
      %v380 = vpop.f32.mrf.mxu0
      %v381 = vadd.f32 0.0, %v380
      %382 = vdwg.mxu0
      %v383 = vmul.f32 %v205, %v205
      %v384 = vmul.f32 %v206, %v206
      %v385 = vmul.f32 %v207, %v207
      %v386 = vmul.f32 %v208, %v208
      %v387 = vmul.f32 %v209, %v209
      %v388 = vmul.f32 %v210, %v210
      %v389 = vmul.f32 %v211, %v211
      %v390 = vmul.f32 %v212, %v212
      %v391 = vmul.f32 %v213, %v213
      %v392 = vmul.f32 %v214, %v214
      %v393 = vmul.f32 %v215, %v215
      %v394 = vmul.f32 %v216, %v216
      %v395 = vmul.f32 %v217, %v217
      %v396 = vmul.f32 %v218, %v218
      %v397 = vmul.f32 %v219, %v219
      %v398 = vmul.f32 %v220, %v220
      %399 = vadd.xlane.f32.xlu0 %v383
      %v400 = vpop.xlane.xlu0 %399
      %401 = vadd.xlane.f32.xlu0 %v384
      %v402 = vpop.xlane.xlu0 %401
      %403 = vadd.xlane.f32.xlu0 %v385
      %v404 = vpop.xlane.xlu0 %403
      %405 = vadd.xlane.f32.xlu0 %v386
      %v406 = vpop.xlane.xlu0 %405
      %407 = vadd.xlane.f32.xlu0 %v387
      %v408 = vpop.xlane.xlu0 %407
      %409 = vadd.xlane.f32.xlu0 %v388
      %v410 = vpop.xlane.xlu0 %409
      %411 = vadd.xlane.f32.xlu0 %v389
      %v412 = vpop.xlane.xlu0 %411
      %413 = vadd.xlane.f32.xlu0 %v390
      %v414 = vpop.xlane.xlu0 %413
      %415 = vadd.xlane.f32.xlu0 %v391
      %v416 = vpop.xlane.xlu0 %415
      %417 = vadd.xlane.f32.xlu0 %v392
      %v418 = vpop.xlane.xlu0 %417
      %419 = vadd.xlane.f32.xlu0 %v393
      %v420 = vpop.xlane.xlu0 %419
      %421 = vadd.xlane.f32.xlu0 %v394
      %v422 = vpop.xlane.xlu0 %421
      %423 = vadd.xlane.f32.xlu0 %v395
      %v424 = vpop.xlane.xlu0 %423
      %425 = vadd.xlane.f32.xlu0 %v396
      %v426 = vpop.xlane.xlu0 %425
      %427 = vadd.xlane.f32.xlu0 %v397
      %v428 = vpop.xlane.xlu0 %427
      %429 = vadd.xlane.f32.xlu0 %v398
      %v430 = vpop.xlane.xlu0 %429
      %v431 = vmul.f32 %v221, %v221
      %v432 = vmul.f32 %v222, %v222
      %v433 = vmul.f32 %v223, %v223
      %v434 = vmul.f32 %v224, %v224
      %v435 = vmul.f32 %v225, %v225
      %v436 = vmul.f32 %v226, %v226
      %v437 = vmul.f32 %v227, %v227
      %v438 = vmul.f32 %v228, %v228
      %v439 = vmul.f32 %v229, %v229
      %v440 = vmul.f32 %v230, %v230
      %v441 = vmul.f32 %v231, %v231
      %v442 = vmul.f32 %v232, %v232
      %v443 = vmul.f32 %v233, %v233
      %v444 = vmul.f32 %v234, %v234
      %v445 = vmul.f32 %v235, %v235
      %v446 = vmul.f32 %v236, %v236
      %v447 = vmul.f32 %v237, %v237
      %v448 = vmul.f32 %v238, %v238
      %v449 = vmul.f32 %v239, %v239
      %v450 = vmul.f32 %v240, %v240
      %v451 = vmul.f32 %v241, %v241
      %v452 = vmul.f32 %v242, %v242
      %v453 = vmul.f32 %v243, %v243
      %v454 = vmul.f32 %v244, %v244
      %v455 = vmul.f32 %v245, %v245
      %v456 = vmul.f32 %v246, %v246
      %v457 = vmul.f32 %v247, %v247
      %v458 = vmul.f32 %v248, %v248
      %v459 = vmul.f32 %v249, %v249
      %v460 = vmul.f32 %v250, %v250
      %v461 = vmul.f32 %v251, %v251
      %v462 = vmul.f32 %v252, %v252
      %463 = vmatpush.xpose.msra.mxu0 %v446
      %464 = vmatpush.xpose.msra.mxu0 %v445
      %465 = vmatpush.xpose.msra.mxu0 %v444
      %466 = vmatpush.xpose.msra.mxu0 %v443
      %467 = vmatpush.xpose.msra.mxu0 %v442
      %468 = vmatpush.xpose.msra.mxu0 %v441
      %469 = vmatpush.xpose.msra.mxu0 %v440
      %470 = vmatpush.xpose.msra.mxu0 %v439
      %471 = vmatpush.xpose.msra.mxu0 %v438
      %472 = vmatpush.xpose.msra.mxu0 %v437
      %473 = vmatpush.xpose.msra.mxu0 %v436
      %474 = vmatpush.xpose.msra.mxu0 %v435
      %475 = vmatpush.xpose.msra.mxu0 %v434
      %476 = vmatpush.xpose.msra.mxu0 %v433
      %477 = vmatpush.xpose.msra.mxu0 %v432
      %478 = vmatpush.xpose.msra.mxu0 %v431
      %479 = vmatmul.f32.gmra.mxu0 1.0
      %v480 = vpop.f32.mrf.mxu0
      %v481 = vadd.f32 0.0, %v480
      %482 = vdwg.mxu0
      %483 = vmatpush.xpose.msra.mxu0 %v462
      %484 = vmatpush.xpose.msra.mxu0 %v461
      %485 = vmatpush.xpose.msra.mxu0 %v460
      %486 = vmatpush.xpose.msra.mxu0 %v459
      %487 = vmatpush.xpose.msra.mxu0 %v458
      %488 = vmatpush.xpose.msra.mxu0 %v457
      %489 = vmatpush.xpose.msra.mxu0 %v456
      %490 = vmatpush.xpose.msra.mxu0 %v455
      %491 = vmatpush.xpose.msra.mxu0 %v454
      %492 = vmatpush.xpose.msra.mxu0 %v453
      %493 = vmatpush.xpose.msra.mxu0 %v452
      %494 = vmatpush.xpose.msra.mxu0 %v451
      %495 = vmatpush.xpose.msra.mxu0 %v450
      %496 = vmatpush.xpose.msra.mxu0 %v449
      %497 = vmatpush.xpose.msra.mxu0 %v448
      %498 = vmatpush.xpose.msra.mxu0 %v447
      %499 = vmatmul.f32.gmra.mxu0 1.0
      %v500 = vpop.f32.mrf.mxu0
      %v501 = vadd.f32 0.0, %v500
      %502 = vdwg.mxu0
      %v503 = vmul.f32 %v271, 2.0
      %v504 = vmul.f32 %v336, 2.0
      %v505 = vmul.f32 %v274, 2.0
      %v506 = vmul.f32 %v339, 2.0
      %v507 = vmul.f32 %v277, 2.0
      %v508 = vmul.f32 %v342, 2.0
      %v509 = vmul.f32 %v280, 2.0
      %v510 = vmul.f32 %v345, 2.0
      %v511 = vmul.f32 %v283, 2.0
      %v512 = vmul.f32 %v348, 2.0
      %v513 = vmul.f32 %v286, 2.0
      %v514 = vmul.f32 %v351, 2.0
      %v515 = vmul.f32 %v289, 2.0
      %v516 = vmul.f32 %v354, 2.0
      %v517 = vmul.f32 %v292, 2.0
      %v518 = vmul.f32 %v357, 2.0
      %v519 = vmul.f32 %v295, 2.0
      %v520 = vmul.f32 %v360, 2.0
      %v521 = vmul.f32 %v298, 2.0
      %v522 = vmul.f32 %v363, 2.0
      %v523 = vmul.f32 %v301, 2.0
      %v524 = vmul.f32 %v366, 2.0
      %v525 = vmul.f32 %v304, 2.0
      %v526 = vmul.f32 %v369, 2.0
      %v527 = vmul.f32 %v307, 2.0
      %v528 = vmul.f32 %v372, 2.0
      %v529 = vmul.f32 %v310, 2.0
      %v530 = vmul.f32 %v375, 2.0
      %v531 = vmul.f32 %v313, 2.0
      %v532 = vmul.f32 %v378, 2.0
      %v533 = vmul.f32 %v316, 2.0
      %v534 = vmul.f32 %v381, 2.0
      %v535 = vsub.f32 %v503, %v400
      %v536 = vsub.f32 %v504, %v400
      %v537 = vsub.f32 %v505, %v402
      %v538 = vsub.f32 %v506, %v402
      %v539 = vsub.f32 %v507, %v404
      %v540 = vsub.f32 %v508, %v404
      %v541 = vsub.f32 %v509, %v406
      %v542 = vsub.f32 %v510, %v406
      %v543 = vsub.f32 %v511, %v408
      %v544 = vsub.f32 %v512, %v408
      %v545 = vsub.f32 %v513, %v410
      %v546 = vsub.f32 %v514, %v410
      %v547 = vsub.f32 %v515, %v412
      %v548 = vsub.f32 %v516, %v412
      %v549 = vsub.f32 %v517, %v414
      %v550 = vsub.f32 %v518, %v414
      %v551 = vsub.f32 %v519, %v416
      %v552 = vsub.f32 %v520, %v416
      %v553 = vsub.f32 %v521, %v418
      %v554 = vsub.f32 %v522, %v418
      %v555 = vsub.f32 %v523, %v420
      %v556 = vsub.f32 %v524, %v420
      %v557 = vsub.f32 %v525, %v422
      %v558 = vsub.f32 %v526, %v422
      %v559 = vsub.f32 %v527, %v424
      %v560 = vsub.f32 %v528, %v424
      %v561 = vsub.f32 %v529, %v426
      %v562 = vsub.f32 %v530, %v426
      %v563 = vsub.f32 %v531, %v428
      %v564 = vsub.f32 %v532, %v428
      %v565 = vsub.f32 %v533, %v430
      %v566 = vsub.f32 %v534, %v430
      %v567 = vperm.slane %v481, 0
      %v568 = vperm.slane %v501, 0
      %v569 = vsub.f32 %v535, %v567
      %v570 = vsub.f32 %v536, %v568
      %v571 = vsub.f32 %v537, %v567
      %v572 = vsub.f32 %v538, %v568
      %v573 = vsub.f32 %v539, %v567
      %v574 = vsub.f32 %v540, %v568
      %v575 = vsub.f32 %v541, %v567
      %v576 = vsub.f32 %v542, %v568
      %v577 = vsub.f32 %v543, %v567
      %v578 = vsub.f32 %v544, %v568
      %v579 = vsub.f32 %v545, %v567
      %v580 = vsub.f32 %v546, %v568
      %v581 = vsub.f32 %v547, %v567
      %v582 = vsub.f32 %v548, %v568
      %v583 = vsub.f32 %v549, %v567
      %v584 = vsub.f32 %v550, %v568
      %v585 = vsub.f32 %v551, %v567
      %v586 = vsub.f32 %v552, %v568
      %v587 = vsub.f32 %v553, %v567
      %v588 = vsub.f32 %v554, %v568
      %v589 = vsub.f32 %v555, %v567
      %v590 = vsub.f32 %v556, %v568
      %v591 = vsub.f32 %v557, %v567
      %v592 = vsub.f32 %v558, %v568
      %v593 = vsub.f32 %v559, %v567
      %v594 = vsub.f32 %v560, %v568
      %v595 = vsub.f32 %v561, %v567
      %v596 = vsub.f32 %v562, %v568
      %v597 = vsub.f32 %v563, %v567
      %v598 = vsub.f32 %v564, %v568
      %v599 = vsub.f32 %v565, %v567
      %v600 = vsub.f32 %v566, %v568
      %601 = vst [vmem:[%s203] sm:$0xff] %v569
      %602 = vst [vmem:[%s203 + $0x8] sm:$0xff] %v570
      %603 = vst [vmem:[%s203 + $0x10] sm:$0xff] %v571
      %604 = vst [vmem:[%s203 + $0x18] sm:$0xff] %v572
      %605 = vst [vmem:[%s203 + $0x20] sm:$0xff] %v573
      %606 = vst [vmem:[%s203 + $0x28] sm:$0xff] %v574
      %607 = vst [vmem:[%s203 + $0x30] sm:$0xff] %v575
      %608 = vst [vmem:[%s203 + $0x38] sm:$0xff] %v576
      %609 = vst [vmem:[%s203 + $0x40] sm:$0xff] %v577
      %610 = vst [vmem:[%s203 + $0x48] sm:$0xff] %v578
      %611 = vst [vmem:[%s203 + $0x50] sm:$0xff] %v579
      %612 = vst [vmem:[%s203 + $0x58] sm:$0xff] %v580
      %613 = vst [vmem:[%s203 + $0x60] sm:$0xff] %v581
      %614 = vst [vmem:[%s203 + $0x68] sm:$0xff] %v582
      %615 = vst [vmem:[%s203 + $0x70] sm:$0xff] %v583
      %616 = vst [vmem:[%s203 + $0x78] sm:$0xff] %v584
      %617 = vst [vmem:[%s203 + $0x80] sm:$0xff] %v585
      %618 = vst [vmem:[%s203 + $0x88] sm:$0xff] %v586
      %619 = vst [vmem:[%s203 + $0x90] sm:$0xff] %v587
      %620 = vst [vmem:[%s203 + $0x98] sm:$0xff] %v588
      %621 = vst [vmem:[%s203 + $0xa0] sm:$0xff] %v589
      %622 = vst [vmem:[%s203 + $0xa8] sm:$0xff] %v590
      %623 = vst [vmem:[%s203 + $0xb0] sm:$0xff] %v591
      %624 = vst [vmem:[%s203 + $0xb8] sm:$0xff] %v592
      %625 = vst [vmem:[%s203 + $0xc0] sm:$0xff] %v593
      %626 = vst [vmem:[%s203 + $0xc8] sm:$0xff] %v594
      %627 = vst [vmem:[%s203 + $0xd0] sm:$0xff] %v595
      %628 = vst [vmem:[%s203 + $0xd8] sm:$0xff] %v596
      %629 = vst [vmem:[%s203 + $0xe0] sm:$0xff] %v597
      %630 = vst [vmem:[%s203 + $0xe8] sm:$0xff] %v598
      %631 = vst [vmem:[%s203 + $0xf0] sm:$0xff] %v599
      %632 = vst [vmem:[%s203 + $0xf8] sm:$0xff] %v600
      %s633 = smul.u32 16, %s18
      %p634 = scmp.lt.s32.totalorder %s17, 1
      %s635 = scalar_select %p634, %s17, 1
      %p636 = scmp.lt.s32.totalorder %s633, 31
      %s637 = scalar_select %p636, %s633, 31
      %s638 = smul.addr %s637, 2
      %s639 = smul.addr %s635, 64
      %s640 = sadd.s32 %s638, %s639
      %s641 = smul.addr %s640, 8
      %s642 = scalar_lea.vmem %s2, %s641
      // Predicated region
      $region29: #{edgeconv_forward.2} parent=27 // pred_check
        %p643 = pneg %p99
      $region30: #{edgeconv_forward.2} parent=27 // pred_check_branch
        %645 = sbr.rel (%p643) target = $region32
      $region31: #{edgeconv_forward.2} parent=27 // pred_region
        %s646 = smul.u32 16, %s18
      $region32: #{edgeconv_forward.2} parent=27 // pred_fallthru
        _
    $region28: #{edgeconv_forward.2} parent=5 // pred_fallthru
      _
    %p647 = scmp.le.s32.totalorder 2, %s8
    // Predicated region
    $region33: #{edgeconv_forward.2} parent=5 // pred_check
      %p648 = pneg %p647
    $region34: #{edgeconv_forward.2} parent=5 // pred_check_branch
      %650 = sbr.rel (%p648) target = $region36
    $region35: #{edgeconv_forward.2} parent=5 // pred_region
      %s651 = ssub.s32 %s8, 2
      // Predicated region
      $region37: #{edgeconv_forward.2} parent=35 // pred_check
        %p652 = pneg %p105
      $region38: #{edgeconv_forward.2} parent=35 // pred_check_branch
        %654 = sbr.rel (%p652) target = $region40
      $region39: #{edgeconv_forward.2} parent=35 // pred_region
        %s655 = smul.u32 16, %s20
        %p656 = scmp.lt.s32.totalorder %s19, 1
        %s657 = scalar_select %p656, %s19, 1
        %p658 = scmp.lt.s32.totalorder %s655, 31
        %s659 = scalar_select %p658, %s655, 31
        %s660 = smul.addr %s659, 2
        %s661 = smul.addr %s657, 64
        %s662 = sadd.s32 %s660, %s661
        %s663 = smul.addr %s662, 8
        %s664 = scalar_lea.vmem %s2, %s663
      $region40: #{edgeconv_forward.2} parent=35 // pred_fallthru
        _
    $region36: #{edgeconv_forward.2} parent=5 // pred_fallthru
      _
  $region6: #{edgeconv_forward.2} parent=0 // loop_footer
    %s12 = sadd.s32 1, %s8
  $region7: #{edgeconv_forward.2} parent=0 // loop_footer_branch
    %7 = sbr.rel target = $region3
  $region8: #{edgeconv_forward.2} parent=0 // loop_exit
    _

// kernel: edgeconv_forward.3
$region0: #{edgeconv_forward.3}
  #allocation0 [shape = 'u32[]', space=smem, size = 0x4, offset = 0x4, fixed_abs, tag = 'smem constant byte address 0x4 - core index']
  #allocation1 [shape = 'u32[72,128]{1,0:T(1,128)}', space=vmem, size = 0x9000, scoped, tag = 'internal scratch']
  #allocation2 [shape = 'f32[256,128]{1,0:T(8,128)}', space=vmem, size = 0x20000, scoped, tag = 'scratch operand']
  #allocation3 [shape = 'f32[256,128]{1,0:T(8,128)}', space=vmem, size = 0x20000, scoped, tag = 'scratch operand']
  %s0 = inlined_call_operand.vmem [shape: f32[2,256,128], index: 0, kind: input, shape index: {}]
  %s1 = inlined_call_operand.vmem [shape: s32[2,256,8], index: 1, kind: input, shape index: {}]
  %s2 = inlined_call_operand.vmem [shape: bf16[128,128], index: 2, kind: input, shape index: {}]
  %s3 = inlined_call_operand.vmem [shape: bf16[128,128], index: 3, kind: input, shape index: {}]
  %s4 = inlined_call_operand.vmem [shape: f32[1,128], index: 4, kind: input, shape index: {}]
  %s5 = inlined_call_operand.vmem [shape: bf16[128,128], index: 5, kind: input, shape index: {}]
  %s6 = inlined_call_operand.vmem [shape: f32[1,128], index: 6, kind: input, shape index: {}]
  %s7 = inlined_call_operand.vmem [shape: f32[2,256,128], index: 7, kind: output, shape index: {}]
  %s8 = sld [smem:[#allocation0]]
  $region65: #{edgeconv_forward.3} parent=0
    _
  %s10 = ssub.s32 1, %s8
  %s11 = scalar_select 0, %s10, %s8
  loop: start=0, step=1, limit=6
  $region2: #{edgeconv_forward.3} parent=0 // loop_pre_header
    _
  $region3: #{edgeconv_forward.3} parent=0 // loop_header
    %s13 = sphi 0, %s17
    %p14 = scmp.ge.s32.totalorder %s13, 6
    %s20 = sphi 0, %s32
    %s21 = sphi 0, %s28
    %s22 = sphi 0, %s20
    %s23 = sphi 0, %s21
    %s24 = sphi 0, %s22
    %s25 = sphi 0, %s23
    %s35 = sphi 0, %s37
    %s38 = sphi 0, %s35
    %s39 = sphi 0, %s38
    %s55 = sphi 0, %s39
    %s63 = sphi 0, %s65
    %s66 = sphi 0, %s63
    %s67 = sphi 0, %s66
    %s83 = sphi 0, %s67
    %s87 = sphi 0, %s87
    %s89 = sphi 0, %s87
    %s90 = sphi 0, %s89
    %s104 = sphi 0, %s90
    %s108 = sphi 0, %s108
    %s110 = sphi 0, %s108
    %s111 = sphi 0, %s110
    %s125 = sphi 0, %s111
    %s129 = sphi 0, %s129
    %s131 = sphi 0, %s129
    %s132 = sphi 0, %s131
    %s146 = sphi 0, %s132
    %s150 = sphi 0, %s150
    %s152 = sphi 0, %s150
    %s153 = sphi 0, %s152
    %s167 = sphi 0, %s153
    %s171 = sphi 0, %s171
    %s173 = sphi 0, %s171
    %s174 = sphi 0, %s173
    %s188 = sphi 0, %s174
    %s196 = sphi 0, %s198
    %s199 = sphi 0, %s196
    %s200 = sphi 0, %s199
    %s216 = sphi 0, %s200
  $region4: #{edgeconv_forward.3} parent=0 // loop_header_branch
    %16 = sbr.rel (%p14) target = $region8
  $region5: #{edgeconv_forward.3} parent=0 // loop_body
    %s18 = ssub.s32 %s13, 1
    %s19 = ssub.s32 %s13, 2
    %s26 = sadd.s32 1, %s21
    %p27 = scmp.ge.s32.totalorder %s26, 2
    %s28 = scalar_select %p27, 0, %s26
    %s29 = sadd.s32 1, %s20
    %s30 = scalar_select %p27, %s29, %s20
    %p31 = scmp.ge.s32.totalorder %s30, 2
    %s32 = scalar_select %p31, 0, %s30
    %s33 = ssub.s32 %s20, %s32
    %p34 = scmp.eq.s32.totalorder %s33, 0
    %s36 = sadd.s32 %s35, 1
    %s37 = scalar_select %p34, %s35, %s36
    %p40 = pneg %p34
    %p41 = scmp.eq.s32.totalorder %s13, 3
    %p42 = por %p40, %p41
    %p43 = scmp.ne.s32.totalorder %s35, %s38
    %p44 = scmp.eq.s32.totalorder %s13, 0
    %p45 = por %p43, %p44
    %p46 = scmp.ne.s32.totalorder %s35, %s38
    %p47 = scmp.eq.s32.totalorder %s18, 3
    %p48 = por %p46, %p47
    %p49 = scmp.ne.s32.totalorder %s38, %s39
    %p50 = scmp.eq.s32.totalorder %s18, 0
    %p51 = por %p49, %p50
    %p52 = scmp.ne.s32.totalorder %s38, %s39
    %p53 = scmp.eq.s32.totalorder %s19, 3
    %p54 = por %p52, %p53
    %p56 = scmp.ne.s32.totalorder %s39, %s55
    %p57 = scmp.eq.s32.totalorder %s19, 0
    %p58 = por %p56, %p57
    %s59 = ssub.s32 %s20, %s32
    %s60 = ssub.s32 %s21, %s28
    %s61 = sor.u32 %s59, %s60
    %p62 = scmp.eq.s32.totalorder %s61, 0
    %s64 = sadd.s32 %s63, 1
    %s65 = scalar_select %p62, %s63, %s64
    %p68 = pneg %p62
    %p69 = scmp.eq.s32.totalorder %s13, 3
    %p70 = por %p68, %p69
    %p71 = scmp.ne.s32.totalorder %s63, %s66
    %p72 = scmp.eq.s32.totalorder %s13, 0
    %p73 = por %p71, %p72
    %p74 = scmp.ne.s32.totalorder %s63, %s66
    %p75 = scmp.eq.s32.totalorder %s18, 3
    %p76 = por %p74, %p75
    %p77 = scmp.ne.s32.totalorder %s66, %s67
    %p78 = scmp.eq.s32.totalorder %s18, 0
    %p79 = por %p77, %p78
    %p80 = scmp.ne.s32.totalorder %s66, %s67
    %p81 = scmp.eq.s32.totalorder %s19, 3
    %p82 = por %p80, %p81
    %p84 = scmp.ne.s32.totalorder %s67, %s83
    %p85 = scmp.eq.s32.totalorder %s19, 0
    %p86 = por %p84, %p85
    %s88 = sadd.s32 %s87, 1
    %p91 = scmp.eq.s32.totalorder %s13, 3
    %p92 = scmp.ne.s32.totalorder %s87, %s89
    %p93 = scmp.eq.s32.totalorder %s13, 0
    %p94 = por %p92, %p93
    %p95 = scmp.ne.s32.totalorder %s87, %s89
    %p96 = scmp.eq.s32.totalorder %s18, 3
    %p97 = por %p95, %p96
    %p98 = scmp.ne.s32.totalorder %s89, %s90
    %p99 = scmp.eq.s32.totalorder %s18, 0
    %p100 = por %p98, %p99
    %p101 = scmp.ne.s32.totalorder %s89, %s90
    %p102 = scmp.eq.s32.totalorder %s19, 3
    %p103 = por %p101, %p102
    %p105 = scmp.ne.s32.totalorder %s90, %s104
    %p106 = scmp.eq.s32.totalorder %s19, 0
    %p107 = por %p105, %p106
    %s109 = sadd.s32 %s108, 1
    %p112 = scmp.eq.s32.totalorder %s13, 3
    %p113 = scmp.ne.s32.totalorder %s108, %s110
    %p114 = scmp.eq.s32.totalorder %s13, 0
    %p115 = por %p113, %p114
    %p116 = scmp.ne.s32.totalorder %s108, %s110
    %p117 = scmp.eq.s32.totalorder %s18, 3
    %p118 = por %p116, %p117
    %p119 = scmp.ne.s32.totalorder %s110, %s111
    %p120 = scmp.eq.s32.totalorder %s18, 0
    %p121 = por %p119, %p120
    %p122 = scmp.ne.s32.totalorder %s110, %s111
    %p123 = scmp.eq.s32.totalorder %s19, 3
    %p124 = por %p122, %p123
    %p126 = scmp.ne.s32.totalorder %s111, %s125
    %p127 = scmp.eq.s32.totalorder %s19, 0
    %p128 = por %p126, %p127
    %s130 = sadd.s32 %s129, 1
    %p133 = scmp.eq.s32.totalorder %s13, 3
    %p134 = scmp.ne.s32.totalorder %s129, %s131
    %p135 = scmp.eq.s32.totalorder %s13, 0
    %p136 = por %p134, %p135
    %p137 = scmp.ne.s32.totalorder %s129, %s131
    %p138 = scmp.eq.s32.totalorder %s18, 3
    %p139 = por %p137, %p138
    %p140 = scmp.ne.s32.totalorder %s131, %s132
    %p141 = scmp.eq.s32.totalorder %s18, 0
    %p142 = por %p140, %p141
    %p143 = scmp.ne.s32.totalorder %s131, %s132
    %p144 = scmp.eq.s32.totalorder %s19, 3
    %p145 = por %p143, %p144
    %p147 = scmp.ne.s32.totalorder %s132, %s146
    %p148 = scmp.eq.s32.totalorder %s19, 0
    %p149 = por %p147, %p148
    %s151 = sadd.s32 %s150, 1
    %p154 = scmp.eq.s32.totalorder %s13, 3
    %p155 = scmp.ne.s32.totalorder %s150, %s152
    %p156 = scmp.eq.s32.totalorder %s13, 0
    %p157 = por %p155, %p156
    %p158 = scmp.ne.s32.totalorder %s150, %s152
    %p159 = scmp.eq.s32.totalorder %s18, 3
    %p160 = por %p158, %p159
    %p161 = scmp.ne.s32.totalorder %s152, %s153
    %p162 = scmp.eq.s32.totalorder %s18, 0
    %p163 = por %p161, %p162
    %p164 = scmp.ne.s32.totalorder %s152, %s153
    %p165 = scmp.eq.s32.totalorder %s19, 3
    %p166 = por %p164, %p165
    %p168 = scmp.ne.s32.totalorder %s153, %s167
    %p169 = scmp.eq.s32.totalorder %s19, 0
    %p170 = por %p168, %p169
    %s172 = sadd.s32 %s171, 1
    %p175 = scmp.eq.s32.totalorder %s13, 3
    %p176 = scmp.ne.s32.totalorder %s171, %s173
    %p177 = scmp.eq.s32.totalorder %s13, 0
    %p178 = por %p176, %p177
    %p179 = scmp.ne.s32.totalorder %s171, %s173
    %p180 = scmp.eq.s32.totalorder %s18, 3
    %p181 = por %p179, %p180
    %p182 = scmp.ne.s32.totalorder %s173, %s174
    %p183 = scmp.eq.s32.totalorder %s18, 0
    %p184 = por %p182, %p183
    %p185 = scmp.ne.s32.totalorder %s173, %s174
    %p186 = scmp.eq.s32.totalorder %s19, 3
    %p187 = por %p185, %p186
    %p189 = scmp.ne.s32.totalorder %s174, %s188
    %p190 = scmp.eq.s32.totalorder %s19, 0
    %p191 = por %p189, %p190
    %s192 = ssub.s32 %s20, %s32
    %s193 = ssub.s32 %s21, %s28
    %s194 = sor.u32 %s192, %s193
    %p195 = scmp.eq.s32.totalorder %s194, 0
    %s197 = sadd.s32 %s196, 1
    %s198 = scalar_select %p195, %s196, %s197
    %p201 = pneg %p195
    %p202 = scmp.eq.s32.totalorder %s13, 3
    %p203 = por %p201, %p202
    %p204 = scmp.ne.s32.totalorder %s196, %s199
    %p205 = scmp.eq.s32.totalorder %s13, 0
    %p206 = por %p204, %p205
    %p207 = scmp.ne.s32.totalorder %s196, %s199
    %p208 = scmp.eq.s32.totalorder %s18, 3
    %p209 = por %p207, %p208
    %p210 = scmp.ne.s32.totalorder %s199, %s200
    %p211 = scmp.eq.s32.totalorder %s18, 0
    %p212 = por %p210, %p211
    %p213 = scmp.ne.s32.totalorder %s199, %s200
    %p214 = scmp.eq.s32.totalorder %s19, 3
    %p215 = por %p213, %p214
    %p217 = scmp.ne.s32.totalorder %s200, %s216
    %p218 = scmp.eq.s32.totalorder %s19, 0
    %p219 = por %p217, %p218
    %p220 = scmp.le.s32.totalorder 1, %s13
    %p221 = scmp.lt.s32.totalorder %s13, 5
    %p222 = pnand %p220, %p221
    %p223 = pneg %p222
    // Predicated region
    $region9: #{edgeconv_forward.3} parent=5 // pred_check
      _
    $region10: #{edgeconv_forward.3} parent=5 // pred_check_branch
      %225 = sbr.rel (%p222) target = $region12
    $region11: #{edgeconv_forward.3} parent=5 // pred_region
      %s226 = ssub.s32 %s13, 1
      // Predicated region
      $region13: #{edgeconv_forward.3} parent=11 // pred_check
        %p227 = pneg %p100
      $region14: #{edgeconv_forward.3} parent=11 // pred_check_branch
        %229 = sbr.rel (%p227) target = $region16
      $region15: #{edgeconv_forward.3} parent=11 // pred_region
        _
      $region16: #{edgeconv_forward.3} parent=11 // pred_fallthru
        _
      // Predicated region
      $region17: #{edgeconv_forward.3} parent=11 // pred_check
        %p230 = pneg %p121
      $region18: #{edgeconv_forward.3} parent=11 // pred_check_branch
        %232 = sbr.rel (%p230) target = $region20
      $region19: #{edgeconv_forward.3} parent=11 // pred_region
        _
      $region20: #{edgeconv_forward.3} parent=11 // pred_fallthru
        _
      // Predicated region
      $region21: #{edgeconv_forward.3} parent=11 // pred_check
        %p233 = pneg %p142
      $region22: #{edgeconv_forward.3} parent=11 // pred_check_branch
        %235 = sbr.rel (%p233) target = $region24
      $region23: #{edgeconv_forward.3} parent=11 // pred_region
        _
      $region24: #{edgeconv_forward.3} parent=11 // pred_fallthru
        _
      // Predicated region
      $region25: #{edgeconv_forward.3} parent=11 // pred_check
        %p236 = pneg %p163
      $region26: #{edgeconv_forward.3} parent=11 // pred_check_branch
        %238 = sbr.rel (%p236) target = $region28
      $region27: #{edgeconv_forward.3} parent=11 // pred_region
        _
      $region28: #{edgeconv_forward.3} parent=11 // pred_fallthru
        _
      // Predicated region
      $region29: #{edgeconv_forward.3} parent=11 // pred_check
        %p239 = pneg %p184
      $region30: #{edgeconv_forward.3} parent=11 // pred_check_branch
        %241 = sbr.rel (%p239) target = $region32
      $region31: #{edgeconv_forward.3} parent=11 // pred_region
        _
      $region32: #{edgeconv_forward.3} parent=11 // pred_fallthru
        _
    $region12: #{edgeconv_forward.3} parent=5 // pred_fallthru
      _
    %p242 = scmp.lt.s32.totalorder %s13, 4
    // Predicated region
    $region33: #{edgeconv_forward.3} parent=5 // pred_check
      %p243 = pneg %p242
    $region34: #{edgeconv_forward.3} parent=5 // pred_check_branch
      %245 = sbr.rel (%p243) target = $region36
    $region35: #{edgeconv_forward.3} parent=5 // pred_region
      // Predicated region
      $region37: #{edgeconv_forward.3} parent=35 // pred_check
        %p246 = pneg %p45
      $region38: #{edgeconv_forward.3} parent=35 // pred_check_branch
        %248 = sbr.rel (%p246) target = $region40
      $region39: #{edgeconv_forward.3} parent=35 // pred_region
        %p249 = scmp.lt.s32.totalorder %s20, 1
        %s250 = scalar_select %p249, %s20, 1
        %s251 = smul.addr %s250, 32
        %s252 = smul.addr %s251, 8
        %s253 = scalar_lea.vmem %s0, %s252
      $region40: #{edgeconv_forward.3} parent=35 // pred_fallthru
        _
      // Predicated region
      $region41: #{edgeconv_forward.3} parent=35 // pred_check
        %p254 = pneg %p73
      $region42: #{edgeconv_forward.3} parent=35 // pred_check_branch
        %256 = sbr.rel (%p254) target = $region44
      $region43: #{edgeconv_forward.3} parent=35 // pred_region
        %s257 = smul.u32 16, %s21
        %p258 = scmp.lt.s32.totalorder %s20, 1
        %s259 = scalar_select %p258, %s20, 1
        %p260 = scmp.lt.s32.totalorder %s257, 31
        %s261 = scalar_select %p260, %s257, 31
        %s262 = smul.addr %s259, 32
        %s263 = sadd.s32 %s261, %s262
        %s264 = smul.addr %s263, 8
        %s265 = scalar_lea.vmem %s1, %s264
        %s266 = smul.u32 16, %s21
      $region44: #{edgeconv_forward.3} parent=35 // pred_fallthru
        _
    $region36: #{edgeconv_forward.3} parent=5 // pred_fallthru
      _
    %p267 = scmp.le.s32.totalorder 1, %s13
    %p268 = scmp.lt.s32.totalorder %s13, 5
    %p269 = pnand %p267, %p268
    %p270 = pneg %p269
    // Predicated region
    $region45: #{edgeconv_forward.3} parent=5 // pred_check
      _
    $region46: #{edgeconv_forward.3} parent=5 // pred_check_branch
      %272 = sbr.rel (%p269) target = $region48
    $region47: #{edgeconv_forward.3} parent=5 // pred_region
      %s273 = ssub.s32 %s13, 1
      %p274 = scmp.lt.s32.totalorder %s22, 1
      %s275 = scalar_select %p274, %s22, 1
      %s276 = smul.addr %s275, 32
      %s277 = smul.addr %s276, 8
      %s278 = scalar_lea.vmem %s0, %s277
      %p279 = pneg %p51
      %p280 = pneg %p48
      %s281 = smul.u32 16, %s23
      %p282 = scmp.lt.s32.totalorder %s22, 1
      %s283 = scalar_select %p282, %s22, 1
      %p284 = scmp.lt.s32.totalorder %s281, 31
      %s285 = scalar_select %p284, %s281, 31
      %s286 = smul.addr %s283, 32
      %s287 = sadd.s32 %s285, %s286
      %s288 = smul.addr %s287, 8
      %s289 = scalar_lea.vmem %s1, %s288
      %p290 = pneg %p79
      %p291 = pneg %p76
      %p292 = pneg %p100
      %p293 = pneg %p97
      %p294 = pneg %p121
      %p295 = pneg %p118
      %p296 = pneg %p142
      %p297 = pneg %p139
      %p298 = pneg %p163
      %p299 = pneg %p160
      %p300 = pneg %p184
      %p301 = pneg %p181
      %p302 = pneg %p212
      %p303 = pneg %p209
      %s304 = smul.u32 16, %s23
      %p305 = scmp.lt.s32.totalorder %s22, 1
      %s306 = scalar_select %p305, %s22, 1
      %p307 = scmp.lt.s32.totalorder %s304, 31
      %s308 = scalar_select %p307, %s304, 31
      %s309 = smul.addr %s306, 32
      %s310 = sadd.s32 %s308, %s309
      %s311 = smul.addr %s310, 8
      %s312 = scalar_lea.vmem %s7, %s311
      %p313 = scmp.lt.s32.totalorder %s22, 1
      %s314 = scalar_select %p313, %s22, 1
      %s315 = smul.addr %s314, 32
      %s316 = smul.addr %s315, 8
      %s317 = scalar_lea.vmem %s0, %s316
      %s318 = smul.u32 16, %s23
      %p319 = scmp.lt.s32.totalorder %s22, 1
      %s320 = scalar_select %p319, %s22, 1
      %p321 = scmp.lt.s32.totalorder %s318, 31
      %s322 = scalar_select %p321, %s318, 31
      %s323 = smul.addr %s320, 32
      %s324 = sadd.s32 %s322, %s323
      %s325 = smul.addr %s324, 8
      %s326 = scalar_lea.vmem %s1, %s325
      %s327 = smul.u32 16, %s23
      %s328 = smul.u32 16, %s23
      %p329 = scmp.lt.s32.totalorder %s22, 1
      %s330 = scalar_select %p329, %s22, 1
      %p331 = scmp.lt.s32.totalorder %s328, 31
      %s332 = scalar_select %p331, %s328, 31
      %s333 = smul.addr %s330, 32
      %s334 = sadd.s32 %s332, %s333
      %s335 = smul.addr %s334, 8
      %s336 = scalar_lea.vmem %s7, %s335
      %s337 = smul.u32 16, %s23
      %p338 = scmp.eq.s32.totalorder %s23, 0
      // Predicated region
      $region49: #{edgeconv_forward.3} parent=47 // pred_check
        %p339 = pneg %p338
      $region50: #{edgeconv_forward.3} parent=47 // pred_check_branch
        %341 = sbr.rel (%p339) target = $region52
      $region51: #{edgeconv_forward.3} parent=47 // pred_region
        %v342 = vld [vmem:[%s317] sm:$0xff]
        %v343 = vld [vmem:[%s317 + $0x8] sm:$0xff]
        %v344 = vld [vmem:[%s317 + $0x10] sm:$0xff]
        %v345 = vld [vmem:[%s317 + $0x18] sm:$0xff]
        %v346 = vld [vmem:[%s317 + $0x20] sm:$0xff]
        %v347 = vld [vmem:[%s317 + $0x28] sm:$0xff]
        %v348 = vld [vmem:[%s317 + $0x30] sm:$0xff]
        %v349 = vld [vmem:[%s317 + $0x38] sm:$0xff]
        %v350 = vld [vmem:[%s317 + $0x40] sm:$0xff]
        %v351 = vld [vmem:[%s317 + $0x48] sm:$0xff]
        %v352 = vld [vmem:[%s317 + $0x50] sm:$0xff]
        %v353 = vld [vmem:[%s317 + $0x58] sm:$0xff]
        %v354 = vld [vmem:[%s317 + $0x60] sm:$0xff]
        %v355 = vld [vmem:[%s317 + $0x68] sm:$0xff]
        %v356 = vld [vmem:[%s317 + $0x70] sm:$0xff]
        %v357 = vld [vmem:[%s317 + $0x78] sm:$0xff]
        %v358 = vld [vmem:[%s317 + $0x80] sm:$0xff]
        %v359 = vld [vmem:[%s317 + $0x88] sm:$0xff]
        %v360 = vld [vmem:[%s317 + $0x90] sm:$0xff]
        %v361 = vld [vmem:[%s317 + $0x98] sm:$0xff]
        %v362 = vld [vmem:[%s317 + $0xa0] sm:$0xff]
        %v363 = vld [vmem:[%s317 + $0xa8] sm:$0xff]
        %v364 = vld [vmem:[%s317 + $0xb0] sm:$0xff]
        %v365 = vld [vmem:[%s317 + $0xb8] sm:$0xff]
        %v366 = vld [vmem:[%s317 + $0xc0] sm:$0xff]
        %v367 = vld [vmem:[%s317 + $0xc8] sm:$0xff]
        %v368 = vld [vmem:[%s317 + $0xd0] sm:$0xff]
        %v369 = vld [vmem:[%s317 + $0xd8] sm:$0xff]
        %v370 = vld [vmem:[%s317 + $0xe0] sm:$0xff]
        %v371 = vld [vmem:[%s317 + $0xe8] sm:$0xff]
        %v372 = vld [vmem:[%s317 + $0xf0] sm:$0xff]
        %v373 = vld [vmem:[%s317 + $0xf8] sm:$0xff]
        %v374 = vpack.c.bf16 %v343, %v342
        %v375 = vpack.c.bf16 %v345, %v344
        %v376 = vpack.c.bf16 %v347, %v346
        %v377 = vpack.c.bf16 %v349, %v348
        %v378 = vpack.c.bf16 %v351, %v350
        %v379 = vpack.c.bf16 %v353, %v352
        %v380 = vpack.c.bf16 %v355, %v354
        %v381 = vpack.c.bf16 %v357, %v356
        %v382 = vpack.c.bf16 %v359, %v358
        %v383 = vpack.c.bf16 %v361, %v360
        %v384 = vpack.c.bf16 %v363, %v362
        %v385 = vpack.c.bf16 %v365, %v364
        %v386 = vpack.c.bf16 %v367, %v366
        %v387 = vpack.c.bf16 %v369, %v368
        %v388 = vpack.c.bf16 %v371, %v370
        %v389 = vpack.c.bf16 %v373, %v372
        %v390 = vld [vmem:[%s2] sm:$0xf]
        %v391 = vld [vmem:[%s2 + $0x4] sm:$0xf]
        %v392 = vld [vmem:[%s2 + $0x8] sm:$0xf]
        %v393 = vld [vmem:[%s2 + $0xc] sm:$0xf]
        %v394 = vld [vmem:[%s2 + $0x10] sm:$0xf]
        %v395 = vld [vmem:[%s2 + $0x14] sm:$0xf]
        %v396 = vld [vmem:[%s2 + $0x18] sm:$0xf]
        %v397 = vld [vmem:[%s2 + $0x1c] sm:$0xf]
        %v398 = vld [vmem:[%s2 + $0x20] sm:$0xf]
        %v399 = vld [vmem:[%s2 + $0x24] sm:$0xf]
        %v400 = vld [vmem:[%s2 + $0x28] sm:$0xf]
        %v401 = vld [vmem:[%s2 + $0x2c] sm:$0xf]
        %v402 = vld [vmem:[%s2 + $0x30] sm:$0xf]
        %v403 = vld [vmem:[%s2 + $0x34] sm:$0xf]
        %v404 = vld [vmem:[%s2 + $0x38] sm:$0xf]
        %v405 = vld [vmem:[%s2 + $0x3c] sm:$0xf]
        %v422 = vunpack.c.l.b16 %v390
        %v423 = vunpack.c.l.b16 %v391
        %v424 = vunpack.c.l.b16 %v392
        %v425 = vunpack.c.l.b16 %v393
        %v426 = vunpack.c.l.b16 %v394
        %v427 = vunpack.c.l.b16 %v395
        %v428 = vunpack.c.l.b16 %v396
        %v429 = vunpack.c.l.b16 %v397
        %v430 = vunpack.c.l.b16 %v398
        %v431 = vunpack.c.l.b16 %v399
        %v432 = vunpack.c.l.b16 %v400
        %v433 = vunpack.c.l.b16 %v401
        %v434 = vunpack.c.l.b16 %v402
        %v435 = vunpack.c.l.b16 %v403
        %v436 = vunpack.c.l.b16 %v404
        %v437 = vunpack.c.l.b16 %v405
        %v438 = vpack.c.b16 %v423, %v422
        %v439 = vpack.c.b16 %v425, %v424
        %v440 = vpack.c.b16 %v427, %v426
        %v441 = vpack.c.b16 %v429, %v428
        %v442 = vpack.c.b16 %v431, %v430
        %v443 = vpack.c.b16 %v433, %v432
        %v444 = vpack.c.b16 %v435, %v434
        %v445 = vpack.c.b16 %v437, %v436
        %454 = vmatpush.bf16.msra.mxu0 %v445
        %455 = vmatpush.bf16.msra.mxu0 %v444
        %456 = vmatpush.bf16.msra.mxu0 %v443
        %457 = vmatpush.bf16.msra.mxu0 %v442
        %458 = vmatpush.bf16.msra.mxu0 %v441
        %459 = vmatpush.bf16.msra.mxu0 %v440
        %460 = vmatpush.bf16.msra.mxu0 %v439
        %461 = vmatpush.bf16.msra.mxu0 %v438
        %462 = vmatmul.bf16.gmra.mxu0 %v374
        %v463 = vpop.f32.mrf.mxu0
        %v464 = vadd.f32 0.0, %v463
        %v465 = vpop.f32.mrf.mxu0
        %v466 = vadd.f32 0.0, %v465
        %467 = vmatmul.bf16.gmra.mxu0 %v375
        %v468 = vpop.f32.mrf.mxu0
        %v469 = vadd.f32 0.0, %v468
        %v470 = vpop.f32.mrf.mxu0
        %v471 = vadd.f32 0.0, %v470
        %472 = vmatmul.bf16.gmra.mxu0 %v376
        %v473 = vpop.f32.mrf.mxu0
        %v474 = vadd.f32 0.0, %v473
        %v475 = vpop.f32.mrf.mxu0
        %v476 = vadd.f32 0.0, %v475
        %477 = vmatmul.bf16.gmra.mxu0 %v377
        %v478 = vpop.f32.mrf.mxu0
        %v479 = vadd.f32 0.0, %v478
        %v480 = vpop.f32.mrf.mxu0
        %v481 = vadd.f32 0.0, %v480
        %482 = vmatmul.bf16.gmra.mxu0 %v378
        %v483 = vpop.f32.mrf.mxu0
        %v484 = vadd.f32 0.0, %v483
        %v485 = vpop.f32.mrf.mxu0
        %v486 = vadd.f32 0.0, %v485
        %487 = vmatmul.bf16.gmra.mxu0 %v379
        %v488 = vpop.f32.mrf.mxu0
        %v489 = vadd.f32 0.0, %v488
        %v490 = vpop.f32.mrf.mxu0
        %v491 = vadd.f32 0.0, %v490
        %492 = vmatmul.bf16.gmra.mxu0 %v380
        %v493 = vpop.f32.mrf.mxu0
        %v494 = vadd.f32 0.0, %v493
        %v495 = vpop.f32.mrf.mxu0
        %v496 = vadd.f32 0.0, %v495
        %497 = vmatmul.bf16.gmra.mxu0 %v381
        %v498 = vpop.f32.mrf.mxu0
        %v499 = vadd.f32 0.0, %v498
        %v500 = vpop.f32.mrf.mxu0
        %v501 = vadd.f32 0.0, %v500
        %502 = vmatmul.bf16.gmra.mxu0 %v382
        %v503 = vpop.f32.mrf.mxu0
        %v504 = vadd.f32 0.0, %v503
        %v505 = vpop.f32.mrf.mxu0
        %v506 = vadd.f32 0.0, %v505
        %507 = vmatmul.bf16.gmra.mxu0 %v383
        %v508 = vpop.f32.mrf.mxu0
        %v509 = vadd.f32 0.0, %v508
        %v510 = vpop.f32.mrf.mxu0
        %v511 = vadd.f32 0.0, %v510
        %512 = vmatmul.bf16.gmra.mxu0 %v384
        %v513 = vpop.f32.mrf.mxu0
        %v514 = vadd.f32 0.0, %v513
        %v515 = vpop.f32.mrf.mxu0
        %v516 = vadd.f32 0.0, %v515
        %517 = vmatmul.bf16.gmra.mxu0 %v385
        %v518 = vpop.f32.mrf.mxu0
        %v519 = vadd.f32 0.0, %v518
        %v520 = vpop.f32.mrf.mxu0
        %v521 = vadd.f32 0.0, %v520
        %522 = vmatmul.bf16.gmra.mxu0 %v386
        %v523 = vpop.f32.mrf.mxu0
        %v524 = vadd.f32 0.0, %v523
        %v525 = vpop.f32.mrf.mxu0
        %v526 = vadd.f32 0.0, %v525
        %527 = vmatmul.bf16.gmra.mxu0 %v387
        %v528 = vpop.f32.mrf.mxu0
        %v529 = vadd.f32 0.0, %v528
        %v530 = vpop.f32.mrf.mxu0
        %v531 = vadd.f32 0.0, %v530
        %532 = vmatmul.bf16.gmra.mxu0 %v388
        %v533 = vpop.f32.mrf.mxu0
        %v534 = vadd.f32 0.0, %v533
        %v535 = vpop.f32.mrf.mxu0
        %v536 = vadd.f32 0.0, %v535
        %537 = vmatmul.bf16.gmra.mxu0 %v389
        %v538 = vpop.f32.mrf.mxu0
        %v539 = vadd.f32 0.0, %v538
        %v540 = vpop.f32.mrf.mxu0
        %v541 = vadd.f32 0.0, %v540
        %542 = vdwg.mxu0
        %543 = vst [vmem:[#allocation2] sm:$0xff] %v464
        %544 = vst [vmem:[#allocation2 + $0x8] sm:$0xff] %v466
        %545 = vst [vmem:[#allocation2 + $0x10] sm:$0xff] %v469
        %546 = vst [vmem:[#allocation2 + $0x18] sm:$0xff] %v471
        %547 = vst [vmem:[#allocation2 + $0x20] sm:$0xff] %v474
        %548 = vst [vmem:[#allocation2 + $0x28] sm:$0xff] %v476
        %549 = vst [vmem:[#allocation2 + $0x30] sm:$0xff] %v479
        %550 = vst [vmem:[#allocation2 + $0x38] sm:$0xff] %v481
        %551 = vst [vmem:[#allocation2 + $0x40] sm:$0xff] %v484
        %552 = vst [vmem:[#allocation2 + $0x48] sm:$0xff] %v486
        %553 = vst [vmem:[#allocation2 + $0x50] sm:$0xff] %v489
        %554 = vst [vmem:[#allocation2 + $0x58] sm:$0xff] %v491
        %555 = vst [vmem:[#allocation2 + $0x60] sm:$0xff] %v494
        %556 = vst [vmem:[#allocation2 + $0x68] sm:$0xff] %v496
        %557 = vst [vmem:[#allocation2 + $0x70] sm:$0xff] %v499
        %558 = vst [vmem:[#allocation2 + $0x78] sm:$0xff] %v501
        %559 = vst [vmem:[#allocation2 + $0x80] sm:$0xff] %v504
        %560 = vst [vmem:[#allocation2 + $0x88] sm:$0xff] %v506
        %561 = vst [vmem:[#allocation2 + $0x90] sm:$0xff] %v509
        %562 = vst [vmem:[#allocation2 + $0x98] sm:$0xff] %v511
        %563 = vst [vmem:[#allocation2 + $0xa0] sm:$0xff] %v514
        %564 = vst [vmem:[#allocation2 + $0xa8] sm:$0xff] %v516
        %565 = vst [vmem:[#allocation2 + $0xb0] sm:$0xff] %v519
        %566 = vst [vmem:[#allocation2 + $0xb8] sm:$0xff] %v521
        %567 = vst [vmem:[#allocation2 + $0xc0] sm:$0xff] %v524
        %568 = vst [vmem:[#allocation2 + $0xc8] sm:$0xff] %v526
        %569 = vst [vmem:[#allocation2 + $0xd0] sm:$0xff] %v529
        %570 = vst [vmem:[#allocation2 + $0xd8] sm:$0xff] %v531
        %571 = vst [vmem:[#allocation2 + $0xe0] sm:$0xff] %v534
        %572 = vst [vmem:[#allocation2 + $0xe8] sm:$0xff] %v536
        %573 = vst [vmem:[#allocation2 + $0xf0] sm:$0xff] %v539
        %574 = vst [vmem:[#allocation2 + $0xf8] sm:$0xff] %v541
        %v575 = vld [vmem:[%s3] sm:$0xf]
        %v576 = vld [vmem:[%s3 + $0x4] sm:$0xf]
        %v577 = vld [vmem:[%s3 + $0x8] sm:$0xf]
        %v578 = vld [vmem:[%s3 + $0xc] sm:$0xf]
        %v579 = vld [vmem:[%s3 + $0x10] sm:$0xf]
        %v580 = vld [vmem:[%s3 + $0x14] sm:$0xf]
        %v581 = vld [vmem:[%s3 + $0x18] sm:$0xf]
        %v582 = vld [vmem:[%s3 + $0x1c] sm:$0xf]
        %v583 = vld [vmem:[%s3 + $0x20] sm:$0xf]
        %v584 = vld [vmem:[%s3 + $0x24] sm:$0xf]
        %v585 = vld [vmem:[%s3 + $0x28] sm:$0xf]
        %v586 = vld [vmem:[%s3 + $0x2c] sm:$0xf]
        %v587 = vld [vmem:[%s3 + $0x30] sm:$0xf]
        %v588 = vld [vmem:[%s3 + $0x34] sm:$0xf]
        %v589 = vld [vmem:[%s3 + $0x38] sm:$0xf]
        %v590 = vld [vmem:[%s3 + $0x3c] sm:$0xf]
        %v607 = vunpack.c.l.b16 %v575
        %v608 = vunpack.c.l.b16 %v576
        %v609 = vunpack.c.l.b16 %v577
        %v610 = vunpack.c.l.b16 %v578
        %v611 = vunpack.c.l.b16 %v579
        %v612 = vunpack.c.l.b16 %v580
        %v613 = vunpack.c.l.b16 %v581
        %v614 = vunpack.c.l.b16 %v582
        %v615 = vunpack.c.l.b16 %v583
        %v616 = vunpack.c.l.b16 %v584
        %v617 = vunpack.c.l.b16 %v585
        %v618 = vunpack.c.l.b16 %v586
        %v619 = vunpack.c.l.b16 %v587
        %v620 = vunpack.c.l.b16 %v588
        %v621 = vunpack.c.l.b16 %v589
        %v622 = vunpack.c.l.b16 %v590
        %v623 = vpack.c.b16 %v608, %v607
        %v624 = vpack.c.b16 %v610, %v609
        %v625 = vpack.c.b16 %v612, %v611
        %v626 = vpack.c.b16 %v614, %v613
        %v627 = vpack.c.b16 %v616, %v615
        %v628 = vpack.c.b16 %v618, %v617
        %v629 = vpack.c.b16 %v620, %v619
        %v630 = vpack.c.b16 %v622, %v621
        %639 = vmatpush.bf16.msra.mxu0 %v630
        %640 = vmatpush.bf16.msra.mxu0 %v629
        %641 = vmatpush.bf16.msra.mxu0 %v628
        %642 = vmatpush.bf16.msra.mxu0 %v627
        %643 = vmatpush.bf16.msra.mxu0 %v626
        %644 = vmatpush.bf16.msra.mxu0 %v625
        %645 = vmatpush.bf16.msra.mxu0 %v624
        %646 = vmatpush.bf16.msra.mxu0 %v623
        %647 = vmatmul.bf16.gmra.mxu0 %v374
        %v648 = vpop.f32.mrf.mxu0
        %v649 = vadd.f32 0.0, %v648
        %v650 = vpop.f32.mrf.mxu0
        %v651 = vadd.f32 0.0, %v650
        %652 = vmatmul.bf16.gmra.mxu0 %v375
        %v653 = vpop.f32.mrf.mxu0
        %v654 = vadd.f32 0.0, %v653
        %v655 = vpop.f32.mrf.mxu0
        %v656 = vadd.f32 0.0, %v655
        %657 = vmatmul.bf16.gmra.mxu0 %v376
        %v658 = vpop.f32.mrf.mxu0
        %v659 = vadd.f32 0.0, %v658
        %v660 = vpop.f32.mrf.mxu0
        %v661 = vadd.f32 0.0, %v660
        %662 = vmatmul.bf16.gmra.mxu0 %v377
        %v663 = vpop.f32.mrf.mxu0
        %v664 = vadd.f32 0.0, %v663
        %v665 = vpop.f32.mrf.mxu0
        %v666 = vadd.f32 0.0, %v665
        %667 = vmatmul.bf16.gmra.mxu0 %v378
        %v668 = vpop.f32.mrf.mxu0
        %v669 = vadd.f32 0.0, %v668
        %v670 = vpop.f32.mrf.mxu0
        %v671 = vadd.f32 0.0, %v670
        %672 = vmatmul.bf16.gmra.mxu0 %v379
        %v673 = vpop.f32.mrf.mxu0
        %v674 = vadd.f32 0.0, %v673
        %v675 = vpop.f32.mrf.mxu0
        %v676 = vadd.f32 0.0, %v675
        %677 = vmatmul.bf16.gmra.mxu0 %v380
        %v678 = vpop.f32.mrf.mxu0
        %v679 = vadd.f32 0.0, %v678
        %v680 = vpop.f32.mrf.mxu0
        %v681 = vadd.f32 0.0, %v680
        %682 = vmatmul.bf16.gmra.mxu0 %v381
        %v683 = vpop.f32.mrf.mxu0
        %v684 = vadd.f32 0.0, %v683
        %v685 = vpop.f32.mrf.mxu0
        %v686 = vadd.f32 0.0, %v685
        %687 = vmatmul.bf16.gmra.mxu0 %v382
        %v688 = vpop.f32.mrf.mxu0
        %v689 = vadd.f32 0.0, %v688
        %v690 = vpop.f32.mrf.mxu0
        %v691 = vadd.f32 0.0, %v690
        %692 = vmatmul.bf16.gmra.mxu0 %v383
        %v693 = vpop.f32.mrf.mxu0
        %v694 = vadd.f32 0.0, %v693
        %v695 = vpop.f32.mrf.mxu0
        %v696 = vadd.f32 0.0, %v695
        %697 = vmatmul.bf16.gmra.mxu0 %v384
        %v698 = vpop.f32.mrf.mxu0
        %v699 = vadd.f32 0.0, %v698
        %v700 = vpop.f32.mrf.mxu0
        %v701 = vadd.f32 0.0, %v700
        %702 = vmatmul.bf16.gmra.mxu0 %v385
        %v703 = vpop.f32.mrf.mxu0
        %v704 = vadd.f32 0.0, %v703
        %v705 = vpop.f32.mrf.mxu0
        %v706 = vadd.f32 0.0, %v705
        %707 = vmatmul.bf16.gmra.mxu0 %v386
        %v708 = vpop.f32.mrf.mxu0
        %v709 = vadd.f32 0.0, %v708
        %v710 = vpop.f32.mrf.mxu0
        %v711 = vadd.f32 0.0, %v710
        %712 = vmatmul.bf16.gmra.mxu0 %v387
        %v713 = vpop.f32.mrf.mxu0
        %v714 = vadd.f32 0.0, %v713
        %v715 = vpop.f32.mrf.mxu0
        %v716 = vadd.f32 0.0, %v715
        %717 = vmatmul.bf16.gmra.mxu0 %v388
        %v718 = vpop.f32.mrf.mxu0
        %v719 = vadd.f32 0.0, %v718
        %v720 = vpop.f32.mrf.mxu0
        %v721 = vadd.f32 0.0, %v720
        %722 = vmatmul.bf16.gmra.mxu0 %v389
        %v723 = vpop.f32.mrf.mxu0
        %v724 = vadd.f32 0.0, %v723
        %v725 = vpop.f32.mrf.mxu0
        %v726 = vadd.f32 0.0, %v725
        %727 = vdwg.mxu0
        %728 = vst [vmem:[#allocation3] sm:$0xff] %v649
        %729 = vst [vmem:[#allocation3 + $0x8] sm:$0xff] %v651
        %730 = vst [vmem:[#allocation3 + $0x10] sm:$0xff] %v654
        %731 = vst [vmem:[#allocation3 + $0x18] sm:$0xff] %v656
        %732 = vst [vmem:[#allocation3 + $0x20] sm:$0xff] %v659
        %733 = vst [vmem:[#allocation3 + $0x28] sm:$0xff] %v661
        %734 = vst [vmem:[#allocation3 + $0x30] sm:$0xff] %v664
        %735 = vst [vmem:[#allocation3 + $0x38] sm:$0xff] %v666
        %736 = vst [vmem:[#allocation3 + $0x40] sm:$0xff] %v669
        %737 = vst [vmem:[#allocation3 + $0x48] sm:$0xff] %v671
        %738 = vst [vmem:[#allocation3 + $0x50] sm:$0xff] %v674
        %739 = vst [vmem:[#allocation3 + $0x58] sm:$0xff] %v676
        %740 = vst [vmem:[#allocation3 + $0x60] sm:$0xff] %v679
        %741 = vst [vmem:[#allocation3 + $0x68] sm:$0xff] %v681
        %742 = vst [vmem:[#allocation3 + $0x70] sm:$0xff] %v684
        %743 = vst [vmem:[#allocation3 + $0x78] sm:$0xff] %v686
        %744 = vst [vmem:[#allocation3 + $0x80] sm:$0xff] %v689
        %745 = vst [vmem:[#allocation3 + $0x88] sm:$0xff] %v691
        %746 = vst [vmem:[#allocation3 + $0x90] sm:$0xff] %v694
        %747 = vst [vmem:[#allocation3 + $0x98] sm:$0xff] %v696
        %748 = vst [vmem:[#allocation3 + $0xa0] sm:$0xff] %v699
        %749 = vst [vmem:[#allocation3 + $0xa8] sm:$0xff] %v701
        %750 = vst [vmem:[#allocation3 + $0xb0] sm:$0xff] %v704
        %751 = vst [vmem:[#allocation3 + $0xb8] sm:$0xff] %v706
        %752 = vst [vmem:[#allocation3 + $0xc0] sm:$0xff] %v709
        %753 = vst [vmem:[#allocation3 + $0xc8] sm:$0xff] %v711
        %754 = vst [vmem:[#allocation3 + $0xd0] sm:$0xff] %v714
        %755 = vst [vmem:[#allocation3 + $0xd8] sm:$0xff] %v716
        %756 = vst [vmem:[#allocation3 + $0xe0] sm:$0xff] %v719
        %757 = vst [vmem:[#allocation3 + $0xe8] sm:$0xff] %v721
        %758 = vst [vmem:[#allocation3 + $0xf0] sm:$0xff] %v724
        %759 = vst [vmem:[#allocation3 + $0xf8] sm:$0xff] %v726
      $region52: #{edgeconv_forward.3} parent=47 // pred_fallthru
        _
      %v760 = vld [vmem:[#allocation2] sm:$0xff]
      %v761 = vld [vmem:[#allocation2 + $0x8] sm:$0xff]
      %v762 = vld [vmem:[#allocation2 + $0x10] sm:$0xff]
      %v763 = vld [vmem:[#allocation2 + $0x18] sm:$0xff]
      %v764 = vld [vmem:[#allocation2 + $0x20] sm:$0xff]
      %v765 = vld [vmem:[#allocation2 + $0x28] sm:$0xff]
      %v766 = vld [vmem:[#allocation2 + $0x30] sm:$0xff]
      %v767 = vld [vmem:[#allocation2 + $0x38] sm:$0xff]
      %v768 = vld [vmem:[#allocation2 + $0x40] sm:$0xff]
      %v769 = vld [vmem:[#allocation2 + $0x48] sm:$0xff]
      %v770 = vld [vmem:[#allocation2 + $0x50] sm:$0xff]
      %v771 = vld [vmem:[#allocation2 + $0x58] sm:$0xff]
      %v772 = vld [vmem:[#allocation2 + $0x60] sm:$0xff]
      %v773 = vld [vmem:[#allocation2 + $0x68] sm:$0xff]
      %v774 = vld [vmem:[#allocation2 + $0x70] sm:$0xff]
      %v775 = vld [vmem:[#allocation2 + $0x78] sm:$0xff]
      %v776 = vld [vmem:[#allocation2 + $0x80] sm:$0xff]
      %v777 = vld [vmem:[#allocation2 + $0x88] sm:$0xff]
      %v778 = vld [vmem:[#allocation2 + $0x90] sm:$0xff]
      %v779 = vld [vmem:[#allocation2 + $0x98] sm:$0xff]
      %v780 = vld [vmem:[#allocation2 + $0xa0] sm:$0xff]
      %v781 = vld [vmem:[#allocation2 + $0xa8] sm:$0xff]
      %v782 = vld [vmem:[#allocation2 + $0xb0] sm:$0xff]
      %v783 = vld [vmem:[#allocation2 + $0xb8] sm:$0xff]
      %v784 = vld [vmem:[#allocation2 + $0xc0] sm:$0xff]
      %v785 = vld [vmem:[#allocation2 + $0xc8] sm:$0xff]
      %v786 = vld [vmem:[#allocation2 + $0xd0] sm:$0xff]
      %v787 = vld [vmem:[#allocation2 + $0xd8] sm:$0xff]
      %v788 = vld [vmem:[#allocation2 + $0xe0] sm:$0xff]
      %v789 = vld [vmem:[#allocation2 + $0xe8] sm:$0xff]
      %v790 = vld [vmem:[#allocation2 + $0xf0] sm:$0xff]
      %v791 = vld [vmem:[#allocation2 + $0xf8] sm:$0xff]
      %s792 = smul.u32 %s23, 128
      %s793 = scalar_lea.vmem [#allocation3], %s792
      %v794 = vld [vmem:[%s793] sm:$0xff]
      %v795 = vld [vmem:[%s793 + $0x8] sm:$0xff]
      %v796 = vld [vmem:[%s793 + $0x10] sm:$0xff]
      %v797 = vld [vmem:[%s793 + $0x18] sm:$0xff]
      %v798 = vld [vmem:[%s793 + $0x20] sm:$0xff]
      %v799 = vld [vmem:[%s793 + $0x28] sm:$0xff]
      %v800 = vld [vmem:[%s793 + $0x30] sm:$0xff]
      %v801 = vld [vmem:[%s793 + $0x38] sm:$0xff]
      %v802 = vld [vmem:[%s793 + $0x40] sm:$0xff]
      %v803 = vld [vmem:[%s793 + $0x48] sm:$0xff]
      %v804 = vld [vmem:[%s793 + $0x50] sm:$0xff]
      %v805 = vld [vmem:[%s793 + $0x58] sm:$0xff]
      %v806 = vld [vmem:[%s793 + $0x60] sm:$0xff]
      %v807 = vld [vmem:[%s793 + $0x68] sm:$0xff]
      %v808 = vld [vmem:[%s793 + $0x70] sm:$0xff]
      %v809 = vld [vmem:[%s793 + $0x78] sm:$0xff]
      %v810 = vld [vmem:[%s4] sm:$0x1]
      %v811 = vld [vmem:[%s6] sm:$0x1]
      %v812 = vld [vmem:[%s5] sm:$0xf]
      %v813 = vld [vmem:[%s5 + $0x4] sm:$0xf]
      %v814 = vld [vmem:[%s5 + $0x8] sm:$0xf]
      %v815 = vld [vmem:[%s5 + $0xc] sm:$0xf]
      %v816 = vld [vmem:[%s5 + $0x10] sm:$0xf]
      %v817 = vld [vmem:[%s5 + $0x14] sm:$0xf]
      %v818 = vld [vmem:[%s5 + $0x18] sm:$0xf]
      %v819 = vld [vmem:[%s5 + $0x1c] sm:$0xf]
      %v820 = vld [vmem:[%s5 + $0x20] sm:$0xf]
      %v821 = vld [vmem:[%s5 + $0x24] sm:$0xf]
      %v822 = vld [vmem:[%s5 + $0x28] sm:$0xf]
      %v823 = vld [vmem:[%s5 + $0x2c] sm:$0xf]
      %v824 = vld [vmem:[%s5 + $0x30] sm:$0xf]
      %v825 = vld [vmem:[%s5 + $0x34] sm:$0xf]
      %v826 = vld [vmem:[%s5 + $0x38] sm:$0xf]
      %v827 = vld [vmem:[%s5 + $0x3c] sm:$0xf]
      %v828 = vld [vmem:[%s326] sm:$0xff]
      %v829 = vld [vmem:[%s326 + $0x8] sm:$0xff]
      %v830 = vld [vmem:[%s326 + $0x10] sm:$0xff]
      %v831 = vld [vmem:[%s326 + $0x18] sm:$0xff]
      %v832 = vld [vmem:[%s326 + $0x20] sm:$0xff]
      %v833 = vld [vmem:[%s326 + $0x28] sm:$0xff]
      %v834 = vld [vmem:[%s326 + $0x30] sm:$0xff]
      %v835 = vld [vmem:[%s326 + $0x38] sm:$0xff]
      %v836 = vld [vmem:[%s326 + $0x40] sm:$0xff]
      %v837 = vld [vmem:[%s326 + $0x48] sm:$0xff]
      %v838 = vld [vmem:[%s326 + $0x50] sm:$0xff]
      %v839 = vld [vmem:[%s326 + $0x58] sm:$0xff]
      %v840 = vld [vmem:[%s326 + $0x60] sm:$0xff]
      %v841 = vld [vmem:[%s326 + $0x68] sm:$0xff]
      %v842 = vld [vmem:[%s326 + $0x70] sm:$0xff]
      %v843 = vld [vmem:[%s326 + $0x78] sm:$0xff]
      %v844 = vlaneseq
      %v845 = vand.u32 %v844, 127
      %v846 = vadd.s32 %v845, 128
      %847 = vset.pattern.permute.xlu0 0
      %848 = vperm.xlu0 %847, %v828
      %v849 = vpop.permute.xlu0 %848
      %850 = vset.pattern.permute.xlu0 0
      %851 = vperm.xlu0 %850, %v829
      %v852 = vpop.permute.xlu0 %851
      %853 = vset.pattern.permute.xlu0 0
      %854 = vperm.xlu0 %853, %v830
      %v855 = vpop.permute.xlu0 %854
      %856 = vset.pattern.permute.xlu0 0
      %857 = vperm.xlu0 %856, %v831
      %v858 = vpop.permute.xlu0 %857
      %859 = vset.pattern.permute.xlu0 0
      %860 = vperm.xlu0 %859, %v832
      %v861 = vpop.permute.xlu0 %860
      %862 = vset.pattern.permute.xlu0 0
      %863 = vperm.xlu0 %862, %v833
      %v864 = vpop.permute.xlu0 %863
      %865 = vset.pattern.permute.xlu0 0
      %866 = vperm.xlu0 %865, %v834
      %v867 = vpop.permute.xlu0 %866
      %868 = vset.pattern.permute.xlu0 0
      %869 = vperm.xlu0 %868, %v835
      %v870 = vpop.permute.xlu0 %869
      %871 = vset.pattern.permute.xlu0 0
      %872 = vperm.xlu0 %871, %v836
      %v873 = vpop.permute.xlu0 %872
      %874 = vset.pattern.permute.xlu0 0
      %875 = vperm.xlu0 %874, %v837
      %v876 = vpop.permute.xlu0 %875
      %877 = vset.pattern.permute.xlu0 0
      %878 = vperm.xlu0 %877, %v838
      %v879 = vpop.permute.xlu0 %878
      %880 = vset.pattern.permute.xlu0 0
      %881 = vperm.xlu0 %880, %v839
      %v882 = vpop.permute.xlu0 %881
      %883 = vset.pattern.permute.xlu0 0
      %884 = vperm.xlu0 %883, %v840
      %v885 = vpop.permute.xlu0 %884
      %886 = vset.pattern.permute.xlu0 0
      %887 = vperm.xlu0 %886, %v841
      %v888 = vpop.permute.xlu0 %887
      %889 = vset.pattern.permute.xlu0 0
      %890 = vperm.xlu0 %889, %v842
      %v891 = vpop.permute.xlu0 %890
      %892 = vset.pattern.permute.xlu0 0
      %893 = vperm.xlu0 %892, %v843
      %v894 = vpop.permute.xlu0 %893
      %vm895 = vcmp.eq.s32.totalorder %v849, %v845
      %vm896 = vcmp.eq.s32.totalorder %v849, %v846
      %vm897 = vcmp.eq.s32.totalorder %v852, %v845
      %vm898 = vcmp.eq.s32.totalorder %v852, %v846
      %vm899 = vcmp.eq.s32.totalorder %v855, %v845
      %vm900 = vcmp.eq.s32.totalorder %v855, %v846
      %vm901 = vcmp.eq.s32.totalorder %v858, %v845
      %vm902 = vcmp.eq.s32.totalorder %v858, %v846
      %vm903 = vcmp.eq.s32.totalorder %v861, %v845
      %vm904 = vcmp.eq.s32.totalorder %v861, %v846
      %vm905 = vcmp.eq.s32.totalorder %v864, %v845
      %vm906 = vcmp.eq.s32.totalorder %v864, %v846
      %vm907 = vcmp.eq.s32.totalorder %v867, %v845
      %vm908 = vcmp.eq.s32.totalorder %v867, %v846
      %vm909 = vcmp.eq.s32.totalorder %v870, %v845
      %vm910 = vcmp.eq.s32.totalorder %v870, %v846
      %vm911 = vcmp.eq.s32.totalorder %v873, %v845
      %vm912 = vcmp.eq.s32.totalorder %v873, %v846
      %vm913 = vcmp.eq.s32.totalorder %v876, %v845
      %vm914 = vcmp.eq.s32.totalorder %v876, %v846
      %vm915 = vcmp.eq.s32.totalorder %v879, %v845
      %vm916 = vcmp.eq.s32.totalorder %v879, %v846
      %vm917 = vcmp.eq.s32.totalorder %v882, %v845
      %vm918 = vcmp.eq.s32.totalorder %v882, %v846
      %vm919 = vcmp.eq.s32.totalorder %v885, %v845
      %vm920 = vcmp.eq.s32.totalorder %v885, %v846
      %vm921 = vcmp.eq.s32.totalorder %v888, %v845
      %vm922 = vcmp.eq.s32.totalorder %v888, %v846
      %vm923 = vcmp.eq.s32.totalorder %v891, %v845
      %vm924 = vcmp.eq.s32.totalorder %v891, %v846
      %vm925 = vcmp.eq.s32.totalorder %v894, %v845
      %vm926 = vcmp.eq.s32.totalorder %v894, %v846
      %v927 = vsel %vm895, 1, 0
      %v928 = vsel %vm896, 1, 0
      %v929 = vsel %vm897, 1, 0
      %v930 = vsel %vm898, 1, 0
      %v931 = vsel %vm899, 1, 0
      %v932 = vsel %vm900, 1, 0
      %v933 = vsel %vm901, 1, 0
      %v934 = vsel %vm902, 1, 0
      %v935 = vsel %vm903, 1, 0
      %v936 = vsel %vm904, 1, 0
      %v937 = vsel %vm905, 1, 0
      %v938 = vsel %vm906, 1, 0
      %v939 = vsel %vm907, 1, 0
      %v940 = vsel %vm908, 1, 0
      %v941 = vsel %vm909, 1, 0
      %v942 = vsel %vm910, 1, 0
      %v943 = vsel %vm911, 1, 0
      %v944 = vsel %vm912, 1, 0
      %v945 = vsel %vm913, 1, 0
      %v946 = vsel %vm914, 1, 0
      %v947 = vsel %vm915, 1, 0
      %v948 = vsel %vm916, 1, 0
      %v949 = vsel %vm917, 1, 0
      %v950 = vsel %vm918, 1, 0
      %v951 = vsel %vm919, 1, 0
      %v952 = vsel %vm920, 1, 0
      %v953 = vsel %vm921, 1, 0
      %v954 = vsel %vm922, 1, 0
      %v955 = vsel %vm923, 1, 0
      %v956 = vsel %vm924, 1, 0
      %v957 = vsel %vm925, 1, 0
      %v958 = vsel %vm926, 1, 0
      %v959 = vcvt.s32.f32 %v927
      %v960 = vcvt.s32.f32 %v928
      %v961 = vcvt.s32.f32 %v929
      %v962 = vcvt.s32.f32 %v930
      %v963 = vcvt.s32.f32 %v931
      %v964 = vcvt.s32.f32 %v932
      %v965 = vcvt.s32.f32 %v933
      %v966 = vcvt.s32.f32 %v934
      %v967 = vcvt.s32.f32 %v935
      %v968 = vcvt.s32.f32 %v936
      %v969 = vcvt.s32.f32 %v937
      %v970 = vcvt.s32.f32 %v938
      %v971 = vcvt.s32.f32 %v939
      %v972 = vcvt.s32.f32 %v940
      %v973 = vcvt.s32.f32 %v941
      %v974 = vcvt.s32.f32 %v942
      %v975 = vcvt.s32.f32 %v943
      %v976 = vcvt.s32.f32 %v944
      %v977 = vcvt.s32.f32 %v945
      %v978 = vcvt.s32.f32 %v946
      %v979 = vcvt.s32.f32 %v947
      %v980 = vcvt.s32.f32 %v948
      %v981 = vcvt.s32.f32 %v949
      %v982 = vcvt.s32.f32 %v950
      %v983 = vcvt.s32.f32 %v951
      %v984 = vcvt.s32.f32 %v952
      %v985 = vcvt.s32.f32 %v953
      %v986 = vcvt.s32.f32 %v954
      %v987 = vcvt.s32.f32 %v955
      %v988 = vcvt.s32.f32 %v956
      %v989 = vcvt.s32.f32 %v957
      %v990 = vcvt.s32.f32 %v958
      %991 = vmatpush.msra.mxu0 %v775
      %992 = vmatpush.msra.mxu0 %v774
      %993 = vmatpush.msra.mxu0 %v773
      %994 = vmatpush.msra.mxu0 %v772
      %995 = vmatpush.msra.mxu0 %v771
      %996 = vmatpush.msra.mxu0 %v770
      %997 = vmatpush.msra.mxu0 %v769
      %998 = vmatpush.msra.mxu0 %v768
      %999 = vmatpush.msra.mxu0 %v767
      %1000 = vmatpush.msra.mxu0 %v766
      %1001 = vmatpush.msra.mxu0 %v765
      %1002 = vmatpush.msra.mxu0 %v764
      %1003 = vmatpush.msra.mxu0 %v763
      %1004 = vmatpush.msra.mxu0 %v762
      %1005 = vmatpush.msra.mxu0 %v761
      %1006 = vmatpush.msra.mxu0 %v760
      %1007 = vmatmul.f32.gmra.mxu0 %v959
      %v1008 = vpop.f32.mrf.mxu0
      %v1009 = vadd.f32 %v794, %v1008
      %1010 = vmatmul.f32.gmra.mxu0 %v961
      %v1011 = vpop.f32.mrf.mxu0
      %v1012 = vadd.f32 %v795, %v1011
      %1013 = vmatmul.f32.gmra.mxu0 %v963
      %v1014 = vpop.f32.mrf.mxu0
      %v1015 = vadd.f32 %v796, %v1014
      %1016 = vmatmul.f32.gmra.mxu0 %v965
      %v1017 = vpop.f32.mrf.mxu0
      %v1018 = vadd.f32 %v797, %v1017
      %1019 = vmatmul.f32.gmra.mxu0 %v967
      %v1020 = vpop.f32.mrf.mxu0
      %v1021 = vadd.f32 %v798, %v1020
      %1022 = vmatmul.f32.gmra.mxu0 %v969
      %v1023 = vpop.f32.mrf.mxu0
      %v1024 = vadd.f32 %v799, %v1023
      %1025 = vmatmul.f32.gmra.mxu0 %v971
      %v1026 = vpop.f32.mrf.mxu0
      %v1027 = vadd.f32 %v800, %v1026
      %1028 = vmatmul.f32.gmra.mxu0 %v973
      %v1029 = vpop.f32.mrf.mxu0
      %v1030 = vadd.f32 %v801, %v1029
      %1031 = vmatmul.f32.gmra.mxu0 %v975
      %v1032 = vpop.f32.mrf.mxu0
      %v1033 = vadd.f32 %v802, %v1032
      %1034 = vmatmul.f32.gmra.mxu0 %v977
      %v1035 = vpop.f32.mrf.mxu0
      %v1036 = vadd.f32 %v803, %v1035
      %1037 = vmatmul.f32.gmra.mxu0 %v979
      %v1038 = vpop.f32.mrf.mxu0
      %v1039 = vadd.f32 %v804, %v1038
      %1040 = vmatmul.f32.gmra.mxu0 %v981
      %v1041 = vpop.f32.mrf.mxu0
      %v1042 = vadd.f32 %v805, %v1041
      %1043 = vmatmul.f32.gmra.mxu0 %v983
      %v1044 = vpop.f32.mrf.mxu0
      %v1045 = vadd.f32 %v806, %v1044
      %1046 = vmatmul.f32.gmra.mxu0 %v985
      %v1047 = vpop.f32.mrf.mxu0
      %v1048 = vadd.f32 %v807, %v1047
      %1049 = vmatmul.f32.gmra.mxu0 %v987
      %v1050 = vpop.f32.mrf.mxu0
      %v1051 = vadd.f32 %v808, %v1050
      %1052 = vmatmul.f32.gmra.mxu0 %v989
      %v1053 = vpop.f32.mrf.mxu0
      %v1054 = vadd.f32 %v809, %v1053
      %1055 = vdwg.mxu0
      %1056 = vmatpush.msra.mxu0 %v791
      %1057 = vmatpush.msra.mxu0 %v790
      %1058 = vmatpush.msra.mxu0 %v789
      %1059 = vmatpush.msra.mxu0 %v788
      %1060 = vmatpush.msra.mxu0 %v787
      %1061 = vmatpush.msra.mxu0 %v786
      %1062 = vmatpush.msra.mxu0 %v785
      %1063 = vmatpush.msra.mxu0 %v784
      %1064 = vmatpush.msra.mxu0 %v783
      %1065 = vmatpush.msra.mxu0 %v782
      %1066 = vmatpush.msra.mxu0 %v781
      %1067 = vmatpush.msra.mxu0 %v780
      %1068 = vmatpush.msra.mxu0 %v779
      %1069 = vmatpush.msra.mxu0 %v778
      %1070 = vmatpush.msra.mxu0 %v777
      %1071 = vmatpush.msra.mxu0 %v776
      %1072 = vmatmul.f32.gmra.mxu0 %v960
      %v1073 = vpop.f32.mrf.mxu0
      %v1074 = vadd.f32 %v1009, %v1073
      %1075 = vmatmul.f32.gmra.mxu0 %v962
      %v1076 = vpop.f32.mrf.mxu0
      %v1077 = vadd.f32 %v1012, %v1076
      %1078 = vmatmul.f32.gmra.mxu0 %v964
      %v1079 = vpop.f32.mrf.mxu0
      %v1080 = vadd.f32 %v1015, %v1079
      %1081 = vmatmul.f32.gmra.mxu0 %v966
      %v1082 = vpop.f32.mrf.mxu0
      %v1083 = vadd.f32 %v1018, %v1082
      %1084 = vmatmul.f32.gmra.mxu0 %v968
      %v1085 = vpop.f32.mrf.mxu0
      %v1086 = vadd.f32 %v1021, %v1085
      %1087 = vmatmul.f32.gmra.mxu0 %v970
      %v1088 = vpop.f32.mrf.mxu0
      %v1089 = vadd.f32 %v1024, %v1088
      %1090 = vmatmul.f32.gmra.mxu0 %v972
      %v1091 = vpop.f32.mrf.mxu0
      %v1092 = vadd.f32 %v1027, %v1091
      %1093 = vmatmul.f32.gmra.mxu0 %v974
      %v1094 = vpop.f32.mrf.mxu0
      %v1095 = vadd.f32 %v1030, %v1094
      %1096 = vmatmul.f32.gmra.mxu0 %v976
      %v1097 = vpop.f32.mrf.mxu0
      %v1098 = vadd.f32 %v1033, %v1097
      %1099 = vmatmul.f32.gmra.mxu0 %v978
      %v1100 = vpop.f32.mrf.mxu0
      %v1101 = vadd.f32 %v1036, %v1100
      %1102 = vmatmul.f32.gmra.mxu0 %v980
      %v1103 = vpop.f32.mrf.mxu0
      %v1104 = vadd.f32 %v1039, %v1103
      %1105 = vmatmul.f32.gmra.mxu0 %v982
      %v1106 = vpop.f32.mrf.mxu0
      %v1107 = vadd.f32 %v1042, %v1106
      %1108 = vmatmul.f32.gmra.mxu0 %v984
      %v1109 = vpop.f32.mrf.mxu0
      %v1110 = vadd.f32 %v1045, %v1109
      %1111 = vmatmul.f32.gmra.mxu0 %v986
      %v1112 = vpop.f32.mrf.mxu0
      %v1113 = vadd.f32 %v1048, %v1112
      %1114 = vmatmul.f32.gmra.mxu0 %v988
      %v1115 = vpop.f32.mrf.mxu0
      %v1116 = vadd.f32 %v1051, %v1115
      %1117 = vmatmul.f32.gmra.mxu0 %v990
      %v1118 = vpop.f32.mrf.mxu0
      %v1119 = vadd.f32 %v1054, %v1118
      %1120 = vdwg.mxu0
      %v1122 = vperm.slane %v810, 0
      %v1124 = vadd.f32 %v1074, %v1122
      %v1125 = vadd.f32 %v1077, %v1122
      %v1126 = vadd.f32 %v1080, %v1122
      %v1127 = vadd.f32 %v1083, %v1122
      %v1128 = vadd.f32 %v1086, %v1122
      %v1129 = vadd.f32 %v1089, %v1122
      %v1130 = vadd.f32 %v1092, %v1122
      %v1131 = vadd.f32 %v1095, %v1122
      %v1132 = vadd.f32 %v1098, %v1122
      %v1133 = vadd.f32 %v1101, %v1122
      %v1134 = vadd.f32 %v1104, %v1122
      %v1135 = vadd.f32 %v1107, %v1122
      %v1136 = vadd.f32 %v1110, %v1122
      %v1137 = vadd.f32 %v1113, %v1122
      %v1138 = vadd.f32 %v1116, %v1122
      %v1139 = vadd.f32 %v1119, %v1122
      %v1140 = vmax.f32 %v1124, 0.0
      %v1141 = vmax.f32 %v1125, 0.0
      %v1142 = vmax.f32 %v1126, 0.0
      %v1143 = vmax.f32 %v1127, 0.0
      %v1144 = vmax.f32 %v1128, 0.0
      %v1145 = vmax.f32 %v1129, 0.0
      %v1146 = vmax.f32 %v1130, 0.0
      %v1147 = vmax.f32 %v1131, 0.0
      %v1148 = vmax.f32 %v1132, 0.0
      %v1149 = vmax.f32 %v1133, 0.0
      %v1150 = vmax.f32 %v1134, 0.0
      %v1151 = vmax.f32 %v1135, 0.0
      %v1152 = vmax.f32 %v1136, 0.0
      %v1153 = vmax.f32 %v1137, 0.0
      %v1154 = vmax.f32 %v1138, 0.0
      %v1155 = vmax.f32 %v1139, 0.0
      %v1156 = vpack.c.bf16 %v1141, %v1140
      %v1157 = vpack.c.bf16 %v1143, %v1142
      %v1158 = vpack.c.bf16 %v1145, %v1144
      %v1159 = vpack.c.bf16 %v1147, %v1146
      %v1160 = vpack.c.bf16 %v1149, %v1148
      %v1161 = vpack.c.bf16 %v1151, %v1150
      %v1162 = vpack.c.bf16 %v1153, %v1152
      %v1163 = vpack.c.bf16 %v1155, %v1154
      %v1165 = vperm.slane %v811, 0
      %v1183 = vunpack.c.l.b16 %v812
      %v1184 = vunpack.c.l.b16 %v813
      %v1185 = vunpack.c.l.b16 %v814
      %v1186 = vunpack.c.l.b16 %v815
      %v1187 = vunpack.c.l.b16 %v816
      %v1188 = vunpack.c.l.b16 %v817
      %v1189 = vunpack.c.l.b16 %v818
      %v1190 = vunpack.c.l.b16 %v819
      %v1191 = vunpack.c.l.b16 %v820
      %v1192 = vunpack.c.l.b16 %v821
      %v1193 = vunpack.c.l.b16 %v822
      %v1194 = vunpack.c.l.b16 %v823
      %v1195 = vunpack.c.l.b16 %v824
      %v1196 = vunpack.c.l.b16 %v825
      %v1197 = vunpack.c.l.b16 %v826
      %v1198 = vunpack.c.l.b16 %v827
      %v1199 = vpack.c.b16 %v1184, %v1183
      %v1200 = vpack.c.b16 %v1186, %v1185
      %v1201 = vpack.c.b16 %v1188, %v1187
      %v1202 = vpack.c.b16 %v1190, %v1189
      %v1203 = vpack.c.b16 %v1192, %v1191
      %v1204 = vpack.c.b16 %v1194, %v1193
      %v1205 = vpack.c.b16 %v1196, %v1195
      %v1206 = vpack.c.b16 %v1198, %v1197
      %1215 = vmatpush.bf16.msra.mxu0 %v1206
      %1216 = vmatpush.bf16.msra.mxu0 %v1205
      %1217 = vmatpush.bf16.msra.mxu0 %v1204
      %1218 = vmatpush.bf16.msra.mxu0 %v1203
      %1219 = vmatpush.bf16.msra.mxu0 %v1202
      %1220 = vmatpush.bf16.msra.mxu0 %v1201
      %1221 = vmatpush.bf16.msra.mxu0 %v1200
      %1222 = vmatpush.bf16.msra.mxu0 %v1199
      %1223 = vmatmul.bf16.gmra.mxu0 %v1156
      %v1224 = vpop.f32.mrf.mxu0
      %v1225 = vadd.f32 %v1165, %v1224
      %v1226 = vpop.f32.mrf.mxu0
      %v1227 = vadd.f32 %v1165, %v1226
      %1228 = vmatmul.bf16.gmra.mxu0 %v1157
      %v1229 = vpop.f32.mrf.mxu0
      %v1230 = vadd.f32 %v1165, %v1229
      %v1231 = vpop.f32.mrf.mxu0
      %v1232 = vadd.f32 %v1165, %v1231
      %1233 = vmatmul.bf16.gmra.mxu0 %v1158
      %v1234 = vpop.f32.mrf.mxu0
      %v1235 = vadd.f32 %v1165, %v1234
      %v1236 = vpop.f32.mrf.mxu0
      %v1237 = vadd.f32 %v1165, %v1236
      %1238 = vmatmul.bf16.gmra.mxu0 %v1159
      %v1239 = vpop.f32.mrf.mxu0
      %v1240 = vadd.f32 %v1165, %v1239
      %v1241 = vpop.f32.mrf.mxu0
      %v1242 = vadd.f32 %v1165, %v1241
      %1243 = vmatmul.bf16.gmra.mxu0 %v1160
      %v1244 = vpop.f32.mrf.mxu0
      %v1245 = vadd.f32 %v1165, %v1244
      %v1246 = vpop.f32.mrf.mxu0
      %v1247 = vadd.f32 %v1165, %v1246
      %1248 = vmatmul.bf16.gmra.mxu0 %v1161
      %v1249 = vpop.f32.mrf.mxu0
      %v1250 = vadd.f32 %v1165, %v1249
      %v1251 = vpop.f32.mrf.mxu0
      %v1252 = vadd.f32 %v1165, %v1251
      %1253 = vmatmul.bf16.gmra.mxu0 %v1162
      %v1254 = vpop.f32.mrf.mxu0
      %v1255 = vadd.f32 %v1165, %v1254
      %v1256 = vpop.f32.mrf.mxu0
      %v1257 = vadd.f32 %v1165, %v1256
      %1258 = vmatmul.bf16.gmra.mxu0 %v1163
      %v1259 = vpop.f32.mrf.mxu0
      %v1260 = vadd.f32 %v1165, %v1259
      %v1261 = vpop.f32.mrf.mxu0
      %v1262 = vadd.f32 %v1165, %v1261
      %1263 = vdwg.mxu0
      %v1264 = vmax.f32 %v1225, 0.0
      %v1265 = vmax.f32 %v1227, 0.0
      %v1266 = vmax.f32 %v1230, 0.0
      %v1267 = vmax.f32 %v1232, 0.0
      %v1268 = vmax.f32 %v1235, 0.0
      %v1269 = vmax.f32 %v1237, 0.0
      %v1270 = vmax.f32 %v1240, 0.0
      %v1271 = vmax.f32 %v1242, 0.0
      %v1272 = vmax.f32 %v1245, 0.0
      %v1273 = vmax.f32 %v1247, 0.0
      %v1274 = vmax.f32 %v1250, 0.0
      %v1275 = vmax.f32 %v1252, 0.0
      %v1276 = vmax.f32 %v1255, 0.0
      %v1277 = vmax.f32 %v1257, 0.0
      %v1278 = vmax.f32 %v1260, 0.0
      %v1279 = vmax.f32 %v1262, 0.0
      %1280 = vset.pattern.permute.xlu0 1
      %1281 = vperm.xlu0 %1280, %v828
      %v1282 = vpop.permute.xlu0 %1281
      %1283 = vset.pattern.permute.xlu0 1
      %1284 = vperm.xlu0 %1283, %v829
      %v1285 = vpop.permute.xlu0 %1284
      %1286 = vset.pattern.permute.xlu0 1
      %1287 = vperm.xlu0 %1286, %v830
      %v1288 = vpop.permute.xlu0 %1287
      %1289 = vset.pattern.permute.xlu0 1
      %1290 = vperm.xlu0 %1289, %v831
      %v1291 = vpop.permute.xlu0 %1290
      %1292 = vset.pattern.permute.xlu0 1
      %1293 = vperm.xlu0 %1292, %v832
      %v1294 = vpop.permute.xlu0 %1293
      %1295 = vset.pattern.permute.xlu0 1
      %1296 = vperm.xlu0 %1295, %v833
      %v1297 = vpop.permute.xlu0 %1296
      %1298 = vset.pattern.permute.xlu0 1
      %1299 = vperm.xlu0 %1298, %v834
      %v1300 = vpop.permute.xlu0 %1299
      %1301 = vset.pattern.permute.xlu0 1
      %1302 = vperm.xlu0 %1301, %v835
      %v1303 = vpop.permute.xlu0 %1302
      %1304 = vset.pattern.permute.xlu0 1
      %1305 = vperm.xlu0 %1304, %v836
      %v1306 = vpop.permute.xlu0 %1305
      %1307 = vset.pattern.permute.xlu0 1
      %1308 = vperm.xlu0 %1307, %v837
      %v1309 = vpop.permute.xlu0 %1308
      %1310 = vset.pattern.permute.xlu0 1
      %1311 = vperm.xlu0 %1310, %v838
      %v1312 = vpop.permute.xlu0 %1311
      %1313 = vset.pattern.permute.xlu0 1
      %1314 = vperm.xlu0 %1313, %v839
      %v1315 = vpop.permute.xlu0 %1314
      %1316 = vset.pattern.permute.xlu0 1
      %1317 = vperm.xlu0 %1316, %v840
      %v1318 = vpop.permute.xlu0 %1317
      %1319 = vset.pattern.permute.xlu0 1
      %1320 = vperm.xlu0 %1319, %v841
      %v1321 = vpop.permute.xlu0 %1320
      %1322 = vset.pattern.permute.xlu0 1
      %1323 = vperm.xlu0 %1322, %v842
      %v1324 = vpop.permute.xlu0 %1323
      %1325 = vset.pattern.permute.xlu0 1
      %1326 = vperm.xlu0 %1325, %v843
      %v1327 = vpop.permute.xlu0 %1326
      %vm1328 = vcmp.eq.s32.totalorder %v1282, %v845
      %vm1329 = vcmp.eq.s32.totalorder %v1282, %v846
      %vm1330 = vcmp.eq.s32.totalorder %v1285, %v845
      %vm1331 = vcmp.eq.s32.totalorder %v1285, %v846
      %vm1332 = vcmp.eq.s32.totalorder %v1288, %v845
      %vm1333 = vcmp.eq.s32.totalorder %v1288, %v846
      %vm1334 = vcmp.eq.s32.totalorder %v1291, %v845
      %vm1335 = vcmp.eq.s32.totalorder %v1291, %v846
      %vm1336 = vcmp.eq.s32.totalorder %v1294, %v845
      %vm1337 = vcmp.eq.s32.totalorder %v1294, %v846
      %vm1338 = vcmp.eq.s32.totalorder %v1297, %v845
      %vm1339 = vcmp.eq.s32.totalorder %v1297, %v846
      %vm1340 = vcmp.eq.s32.totalorder %v1300, %v845
      %vm1341 = vcmp.eq.s32.totalorder %v1300, %v846
      %vm1342 = vcmp.eq.s32.totalorder %v1303, %v845
      %vm1343 = vcmp.eq.s32.totalorder %v1303, %v846
      %vm1344 = vcmp.eq.s32.totalorder %v1306, %v845
      %vm1345 = vcmp.eq.s32.totalorder %v1306, %v846
      %vm1346 = vcmp.eq.s32.totalorder %v1309, %v845
      %vm1347 = vcmp.eq.s32.totalorder %v1309, %v846
      %vm1348 = vcmp.eq.s32.totalorder %v1312, %v845
      %vm1349 = vcmp.eq.s32.totalorder %v1312, %v846
      %vm1350 = vcmp.eq.s32.totalorder %v1315, %v845
      %vm1351 = vcmp.eq.s32.totalorder %v1315, %v846
      %vm1352 = vcmp.eq.s32.totalorder %v1318, %v845
      %vm1353 = vcmp.eq.s32.totalorder %v1318, %v846
      %vm1354 = vcmp.eq.s32.totalorder %v1321, %v845
      %vm1355 = vcmp.eq.s32.totalorder %v1321, %v846
      %vm1356 = vcmp.eq.s32.totalorder %v1324, %v845
      %vm1357 = vcmp.eq.s32.totalorder %v1324, %v846
      %vm1358 = vcmp.eq.s32.totalorder %v1327, %v845
      %vm1359 = vcmp.eq.s32.totalorder %v1327, %v846
      %v1360 = vsel %vm1328, 1, 0
      %v1361 = vsel %vm1329, 1, 0
      %v1362 = vsel %vm1330, 1, 0
      %v1363 = vsel %vm1331, 1, 0
      %v1364 = vsel %vm1332, 1, 0
      %v1365 = vsel %vm1333, 1, 0
      %v1366 = vsel %vm1334, 1, 0
      %v1367 = vsel %vm1335, 1, 0
      %v1368 = vsel %vm1336, 1, 0
      %v1369 = vsel %vm1337, 1, 0
      %v1370 = vsel %vm1338, 1, 0
      %v1371 = vsel %vm1339, 1, 0
      %v1372 = vsel %vm1340, 1, 0
      %v1373 = vsel %vm1341, 1, 0
      %v1374 = vsel %vm1342, 1, 0
      %v1375 = vsel %vm1343, 1, 0
      %v1376 = vsel %vm1344, 1, 0
      %v1377 = vsel %vm1345, 1, 0
      %v1378 = vsel %vm1346, 1, 0
      %v1379 = vsel %vm1347, 1, 0
      %v1380 = vsel %vm1348, 1, 0
      %v1381 = vsel %vm1349, 1, 0
      %v1382 = vsel %vm1350, 1, 0
      %v1383 = vsel %vm1351, 1, 0
      %v1384 = vsel %vm1352, 1, 0
      %v1385 = vsel %vm1353, 1, 0
      %v1386 = vsel %vm1354, 1, 0
      %v1387 = vsel %vm1355, 1, 0
      %v1388 = vsel %vm1356, 1, 0
      %v1389 = vsel %vm1357, 1, 0
      %v1390 = vsel %vm1358, 1, 0
      %v1391 = vsel %vm1359, 1, 0
      %v1392 = vcvt.s32.f32 %v1360
      %v1393 = vcvt.s32.f32 %v1361
      %v1394 = vcvt.s32.f32 %v1362
      %v1395 = vcvt.s32.f32 %v1363
      %v1396 = vcvt.s32.f32 %v1364
      %v1397 = vcvt.s32.f32 %v1365
      %v1398 = vcvt.s32.f32 %v1366
      %v1399 = vcvt.s32.f32 %v1367
      %v1400 = vcvt.s32.f32 %v1368
      %v1401 = vcvt.s32.f32 %v1369
      %v1402 = vcvt.s32.f32 %v1370
      %v1403 = vcvt.s32.f32 %v1371
      %v1404 = vcvt.s32.f32 %v1372
      %v1405 = vcvt.s32.f32 %v1373
      %v1406 = vcvt.s32.f32 %v1374
      %v1407 = vcvt.s32.f32 %v1375
      %v1408 = vcvt.s32.f32 %v1376
      %v1409 = vcvt.s32.f32 %v1377
      %v1410 = vcvt.s32.f32 %v1378
      %v1411 = vcvt.s32.f32 %v1379
      %v1412 = vcvt.s32.f32 %v1380
      %v1413 = vcvt.s32.f32 %v1381
      %v1414 = vcvt.s32.f32 %v1382
      %v1415 = vcvt.s32.f32 %v1383
      %v1416 = vcvt.s32.f32 %v1384
      %v1417 = vcvt.s32.f32 %v1385
      %v1418 = vcvt.s32.f32 %v1386
      %v1419 = vcvt.s32.f32 %v1387
      %v1420 = vcvt.s32.f32 %v1388
      %v1421 = vcvt.s32.f32 %v1389
      %v1422 = vcvt.s32.f32 %v1390
      %v1423 = vcvt.s32.f32 %v1391
      %1424 = vmatpush.msra.mxu0 %v775
      %1425 = vmatpush.msra.mxu0 %v774
      %1426 = vmatpush.msra.mxu0 %v773
      %1427 = vmatpush.msra.mxu0 %v772
      %1428 = vmatpush.msra.mxu0 %v771
      %1429 = vmatpush.msra.mxu0 %v770
      %1430 = vmatpush.msra.mxu0 %v769
      %1431 = vmatpush.msra.mxu0 %v768
      %1432 = vmatpush.msra.mxu0 %v767
      %1433 = vmatpush.msra.mxu0 %v766
      %1434 = vmatpush.msra.mxu0 %v765
      %1435 = vmatpush.msra.mxu0 %v764
      %1436 = vmatpush.msra.mxu0 %v763
      %1437 = vmatpush.msra.mxu0 %v762
      %1438 = vmatpush.msra.mxu0 %v761
      %1439 = vmatpush.msra.mxu0 %v760
      %1440 = vmatmul.f32.gmra.mxu0 %v1392
      %v1441 = vpop.f32.mrf.mxu0
      %v1442 = vadd.f32 %v794, %v1441
      %1443 = vmatmul.f32.gmra.mxu0 %v1394
      %v1444 = vpop.f32.mrf.mxu0
      %v1445 = vadd.f32 %v795, %v1444
      %1446 = vmatmul.f32.gmra.mxu0 %v1396
      %v1447 = vpop.f32.mrf.mxu0
      %v1448 = vadd.f32 %v796, %v1447
      %1449 = vmatmul.f32.gmra.mxu0 %v1398
      %v1450 = vpop.f32.mrf.mxu0
      %v1451 = vadd.f32 %v797, %v1450
      %1452 = vmatmul.f32.gmra.mxu0 %v1400
      %v1453 = vpop.f32.mrf.mxu0
      %v1454 = vadd.f32 %v798, %v1453
      %1455 = vmatmul.f32.gmra.mxu0 %v1402
      %v1456 = vpop.f32.mrf.mxu0
      %v1457 = vadd.f32 %v799, %v1456
      %1458 = vmatmul.f32.gmra.mxu0 %v1404
      %v1459 = vpop.f32.mrf.mxu0
      %v1460 = vadd.f32 %v800, %v1459
      %1461 = vmatmul.f32.gmra.mxu0 %v1406
      %v1462 = vpop.f32.mrf.mxu0
      %v1463 = vadd.f32 %v801, %v1462
      %1464 = vmatmul.f32.gmra.mxu0 %v1408
      %v1465 = vpop.f32.mrf.mxu0
      %v1466 = vadd.f32 %v802, %v1465
      %1467 = vmatmul.f32.gmra.mxu0 %v1410
      %v1468 = vpop.f32.mrf.mxu0
      %v1469 = vadd.f32 %v803, %v1468
      %1470 = vmatmul.f32.gmra.mxu0 %v1412
      %v1471 = vpop.f32.mrf.mxu0
      %v1472 = vadd.f32 %v804, %v1471
      %1473 = vmatmul.f32.gmra.mxu0 %v1414
      %v1474 = vpop.f32.mrf.mxu0
      %v1475 = vadd.f32 %v805, %v1474
      %1476 = vmatmul.f32.gmra.mxu0 %v1416
      %v1477 = vpop.f32.mrf.mxu0
      %v1478 = vadd.f32 %v806, %v1477
      %1479 = vmatmul.f32.gmra.mxu0 %v1418
      %v1480 = vpop.f32.mrf.mxu0
      %v1481 = vadd.f32 %v807, %v1480
      %1482 = vmatmul.f32.gmra.mxu0 %v1420
      %v1483 = vpop.f32.mrf.mxu0
      %v1484 = vadd.f32 %v808, %v1483
      %1485 = vmatmul.f32.gmra.mxu0 %v1422
      %v1486 = vpop.f32.mrf.mxu0
      %v1487 = vadd.f32 %v809, %v1486
      %1488 = vdwg.mxu0
      %1489 = vmatpush.msra.mxu0 %v791
      %1490 = vmatpush.msra.mxu0 %v790
      %1491 = vmatpush.msra.mxu0 %v789
      %1492 = vmatpush.msra.mxu0 %v788
      %1493 = vmatpush.msra.mxu0 %v787
      %1494 = vmatpush.msra.mxu0 %v786
      %1495 = vmatpush.msra.mxu0 %v785
      %1496 = vmatpush.msra.mxu0 %v784
      %1497 = vmatpush.msra.mxu0 %v783
      %1498 = vmatpush.msra.mxu0 %v782
      %1499 = vmatpush.msra.mxu0 %v781
      %1500 = vmatpush.msra.mxu0 %v780
      %1501 = vmatpush.msra.mxu0 %v779
      %1502 = vmatpush.msra.mxu0 %v778
      %1503 = vmatpush.msra.mxu0 %v777
      %1504 = vmatpush.msra.mxu0 %v776
      %1505 = vmatmul.f32.gmra.mxu0 %v1393
      %v1506 = vpop.f32.mrf.mxu0
      %v1507 = vadd.f32 %v1442, %v1506
      %1508 = vmatmul.f32.gmra.mxu0 %v1395
      %v1509 = vpop.f32.mrf.mxu0
      %v1510 = vadd.f32 %v1445, %v1509
      %1511 = vmatmul.f32.gmra.mxu0 %v1397
      %v1512 = vpop.f32.mrf.mxu0
      %v1513 = vadd.f32 %v1448, %v1512
      %1514 = vmatmul.f32.gmra.mxu0 %v1399
      %v1515 = vpop.f32.mrf.mxu0
      %v1516 = vadd.f32 %v1451, %v1515
      %1517 = vmatmul.f32.gmra.mxu0 %v1401
      %v1518 = vpop.f32.mrf.mxu0
      %v1519 = vadd.f32 %v1454, %v1518
      %1520 = vmatmul.f32.gmra.mxu0 %v1403
      %v1521 = vpop.f32.mrf.mxu0
      %v1522 = vadd.f32 %v1457, %v1521
      %1523 = vmatmul.f32.gmra.mxu0 %v1405
      %v1524 = vpop.f32.mrf.mxu0
      %v1525 = vadd.f32 %v1460, %v1524
      %1526 = vmatmul.f32.gmra.mxu0 %v1407
      %v1527 = vpop.f32.mrf.mxu0
      %v1528 = vadd.f32 %v1463, %v1527
      %1529 = vmatmul.f32.gmra.mxu0 %v1409
      %v1530 = vpop.f32.mrf.mxu0
      %v1531 = vadd.f32 %v1466, %v1530
      %1532 = vmatmul.f32.gmra.mxu0 %v1411
      %v1533 = vpop.f32.mrf.mxu0
      %v1534 = vadd.f32 %v1469, %v1533
      %1535 = vmatmul.f32.gmra.mxu0 %v1413
      %v1536 = vpop.f32.mrf.mxu0
      %v1537 = vadd.f32 %v1472, %v1536
      %1538 = vmatmul.f32.gmra.mxu0 %v1415
      %v1539 = vpop.f32.mrf.mxu0
      %v1540 = vadd.f32 %v1475, %v1539
      %1541 = vmatmul.f32.gmra.mxu0 %v1417
      %v1542 = vpop.f32.mrf.mxu0
      %v1543 = vadd.f32 %v1478, %v1542
      %1544 = vmatmul.f32.gmra.mxu0 %v1419
      %v1545 = vpop.f32.mrf.mxu0
      %v1546 = vadd.f32 %v1481, %v1545
      %1547 = vmatmul.f32.gmra.mxu0 %v1421
      %v1548 = vpop.f32.mrf.mxu0
      %v1549 = vadd.f32 %v1484, %v1548
      %1550 = vmatmul.f32.gmra.mxu0 %v1423
      %v1551 = vpop.f32.mrf.mxu0
      %v1552 = vadd.f32 %v1487, %v1551
      %1553 = vdwg.mxu0
      %v1554 = vadd.f32 %v1507, %v1122
      %v1555 = vadd.f32 %v1510, %v1122
      %v1556 = vadd.f32 %v1513, %v1122
      %v1557 = vadd.f32 %v1516, %v1122
      %v1558 = vadd.f32 %v1519, %v1122
      %v1559 = vadd.f32 %v1522, %v1122
      %v1560 = vadd.f32 %v1525, %v1122
      %v1561 = vadd.f32 %v1528, %v1122
      %v1562 = vadd.f32 %v1531, %v1122
      %v1563 = vadd.f32 %v1534, %v1122
      %v1564 = vadd.f32 %v1537, %v1122
      %v1565 = vadd.f32 %v1540, %v1122
      %v1566 = vadd.f32 %v1543, %v1122
      %v1567 = vadd.f32 %v1546, %v1122
      %v1568 = vadd.f32 %v1549, %v1122
      %v1569 = vadd.f32 %v1552, %v1122
      %v1570 = vmax.f32 %v1554, 0.0
      %v1571 = vmax.f32 %v1555, 0.0
      %v1572 = vmax.f32 %v1556, 0.0
      %v1573 = vmax.f32 %v1557, 0.0
      %v1574 = vmax.f32 %v1558, 0.0
      %v1575 = vmax.f32 %v1559, 0.0
      %v1576 = vmax.f32 %v1560, 0.0
      %v1577 = vmax.f32 %v1561, 0.0
      %v1578 = vmax.f32 %v1562, 0.0
      %v1579 = vmax.f32 %v1563, 0.0
      %v1580 = vmax.f32 %v1564, 0.0
      %v1581 = vmax.f32 %v1565, 0.0
      %v1582 = vmax.f32 %v1566, 0.0
      %v1583 = vmax.f32 %v1567, 0.0
      %v1584 = vmax.f32 %v1568, 0.0
      %v1585 = vmax.f32 %v1569, 0.0
      %v1586 = vpack.c.bf16 %v1571, %v1570
      %v1587 = vpack.c.bf16 %v1573, %v1572
      %v1588 = vpack.c.bf16 %v1575, %v1574
      %v1589 = vpack.c.bf16 %v1577, %v1576
      %v1590 = vpack.c.bf16 %v1579, %v1578
      %v1591 = vpack.c.bf16 %v1581, %v1580
      %v1592 = vpack.c.bf16 %v1583, %v1582
      %v1593 = vpack.c.bf16 %v1585, %v1584
      %1594 = vmatpush.bf16.msra.mxu0 %v1206
      %1595 = vmatpush.bf16.msra.mxu0 %v1205
      %1596 = vmatpush.bf16.msra.mxu0 %v1204
      %1597 = vmatpush.bf16.msra.mxu0 %v1203
      %1598 = vmatpush.bf16.msra.mxu0 %v1202
      %1599 = vmatpush.bf16.msra.mxu0 %v1201
      %1600 = vmatpush.bf16.msra.mxu0 %v1200
      %1601 = vmatpush.bf16.msra.mxu0 %v1199
      %1602 = vmatmul.bf16.gmra.mxu0 %v1586
      %v1603 = vpop.f32.mrf.mxu0
      %v1604 = vadd.f32 %v1165, %v1603
      %v1605 = vpop.f32.mrf.mxu0
      %v1606 = vadd.f32 %v1165, %v1605
      %1607 = vmatmul.bf16.gmra.mxu0 %v1587
      %v1608 = vpop.f32.mrf.mxu0
      %v1609 = vadd.f32 %v1165, %v1608
      %v1610 = vpop.f32.mrf.mxu0
      %v1611 = vadd.f32 %v1165, %v1610
      %1612 = vmatmul.bf16.gmra.mxu0 %v1588
      %v1613 = vpop.f32.mrf.mxu0
      %v1614 = vadd.f32 %v1165, %v1613
      %v1615 = vpop.f32.mrf.mxu0
      %v1616 = vadd.f32 %v1165, %v1615
      %1617 = vmatmul.bf16.gmra.mxu0 %v1589
      %v1618 = vpop.f32.mrf.mxu0
      %v1619 = vadd.f32 %v1165, %v1618
      %v1620 = vpop.f32.mrf.mxu0
      %v1621 = vadd.f32 %v1165, %v1620
      %1622 = vmatmul.bf16.gmra.mxu0 %v1590
      %v1623 = vpop.f32.mrf.mxu0
      %v1624 = vadd.f32 %v1165, %v1623
      %v1625 = vpop.f32.mrf.mxu0
      %v1626 = vadd.f32 %v1165, %v1625
      %1627 = vmatmul.bf16.gmra.mxu0 %v1591
      %v1628 = vpop.f32.mrf.mxu0
      %v1629 = vadd.f32 %v1165, %v1628
      %v1630 = vpop.f32.mrf.mxu0
      %v1631 = vadd.f32 %v1165, %v1630
      %1632 = vmatmul.bf16.gmra.mxu0 %v1592
      %v1633 = vpop.f32.mrf.mxu0
      %v1634 = vadd.f32 %v1165, %v1633
      %v1635 = vpop.f32.mrf.mxu0
      %v1636 = vadd.f32 %v1165, %v1635
      %1637 = vmatmul.bf16.gmra.mxu0 %v1593
      %v1638 = vpop.f32.mrf.mxu0
      %v1639 = vadd.f32 %v1165, %v1638
      %v1640 = vpop.f32.mrf.mxu0
      %v1641 = vadd.f32 %v1165, %v1640
      %1642 = vdwg.mxu0
      %v1643 = vmax.f32 %v1604, 0.0
      %v1644 = vmax.f32 %v1606, 0.0
      %v1645 = vmax.f32 %v1609, 0.0
      %v1646 = vmax.f32 %v1611, 0.0
      %v1647 = vmax.f32 %v1614, 0.0
      %v1648 = vmax.f32 %v1616, 0.0
      %v1649 = vmax.f32 %v1619, 0.0
      %v1650 = vmax.f32 %v1621, 0.0
      %v1651 = vmax.f32 %v1624, 0.0
      %v1652 = vmax.f32 %v1626, 0.0
      %v1653 = vmax.f32 %v1629, 0.0
      %v1654 = vmax.f32 %v1631, 0.0
      %v1655 = vmax.f32 %v1634, 0.0
      %v1656 = vmax.f32 %v1636, 0.0
      %v1657 = vmax.f32 %v1639, 0.0
      %v1658 = vmax.f32 %v1641, 0.0
      %v1659 = vmax.f32 %v1264, %v1643
      %v1660 = vmax.f32 %v1265, %v1644
      %v1661 = vmax.f32 %v1266, %v1645
      %v1662 = vmax.f32 %v1267, %v1646
      %v1663 = vmax.f32 %v1268, %v1647
      %v1664 = vmax.f32 %v1269, %v1648
      %v1665 = vmax.f32 %v1270, %v1649
      %v1666 = vmax.f32 %v1271, %v1650
      %v1667 = vmax.f32 %v1272, %v1651
      %v1668 = vmax.f32 %v1273, %v1652
      %v1669 = vmax.f32 %v1274, %v1653
      %v1670 = vmax.f32 %v1275, %v1654
      %v1671 = vmax.f32 %v1276, %v1655
      %v1672 = vmax.f32 %v1277, %v1656
      %v1673 = vmax.f32 %v1278, %v1657
      %v1674 = vmax.f32 %v1279, %v1658
      %1675 = vset.pattern.permute.xlu0 2
      %1676 = vperm.xlu0 %1675, %v828
      %v1677 = vpop.permute.xlu0 %1676
      %1678 = vset.pattern.permute.xlu0 2
      %1679 = vperm.xlu0 %1678, %v829
      %v1680 = vpop.permute.xlu0 %1679
      %1681 = vset.pattern.permute.xlu0 2
      %1682 = vperm.xlu0 %1681, %v830
      %v1683 = vpop.permute.xlu0 %1682
      %1684 = vset.pattern.permute.xlu0 2
      %1685 = vperm.xlu0 %1684, %v831
      %v1686 = vpop.permute.xlu0 %1685
      %1687 = vset.pattern.permute.xlu0 2
      %1688 = vperm.xlu0 %1687, %v832
      %v1689 = vpop.permute.xlu0 %1688
      %1690 = vset.pattern.permute.xlu0 2
      %1691 = vperm.xlu0 %1690, %v833
      %v1692 = vpop.permute.xlu0 %1691
      %1693 = vset.pattern.permute.xlu0 2
      %1694 = vperm.xlu0 %1693, %v834
      %v1695 = vpop.permute.xlu0 %1694
      %1696 = vset.pattern.permute.xlu0 2
      %1697 = vperm.xlu0 %1696, %v835
      %v1698 = vpop.permute.xlu0 %1697
      %1699 = vset.pattern.permute.xlu0 2
      %1700 = vperm.xlu0 %1699, %v836
      %v1701 = vpop.permute.xlu0 %1700
      %1702 = vset.pattern.permute.xlu0 2
      %1703 = vperm.xlu0 %1702, %v837
      %v1704 = vpop.permute.xlu0 %1703
      %1705 = vset.pattern.permute.xlu0 2
      %1706 = vperm.xlu0 %1705, %v838
      %v1707 = vpop.permute.xlu0 %1706
      %1708 = vset.pattern.permute.xlu0 2
      %1709 = vperm.xlu0 %1708, %v839
      %v1710 = vpop.permute.xlu0 %1709
      %1711 = vset.pattern.permute.xlu0 2
      %1712 = vperm.xlu0 %1711, %v840
      %v1713 = vpop.permute.xlu0 %1712
      %1714 = vset.pattern.permute.xlu0 2
      %1715 = vperm.xlu0 %1714, %v841
      %v1716 = vpop.permute.xlu0 %1715
      %1717 = vset.pattern.permute.xlu0 2
      %1718 = vperm.xlu0 %1717, %v842
      %v1719 = vpop.permute.xlu0 %1718
      %1720 = vset.pattern.permute.xlu0 2
      %1721 = vperm.xlu0 %1720, %v843
      %v1722 = vpop.permute.xlu0 %1721
      %vm1723 = vcmp.eq.s32.totalorder %v1677, %v845
      %vm1724 = vcmp.eq.s32.totalorder %v1677, %v846
      %vm1725 = vcmp.eq.s32.totalorder %v1680, %v845
      %vm1726 = vcmp.eq.s32.totalorder %v1680, %v846
      %vm1727 = vcmp.eq.s32.totalorder %v1683, %v845
      %vm1728 = vcmp.eq.s32.totalorder %v1683, %v846
      %vm1729 = vcmp.eq.s32.totalorder %v1686, %v845
      %vm1730 = vcmp.eq.s32.totalorder %v1686, %v846
      %vm1731 = vcmp.eq.s32.totalorder %v1689, %v845
      %vm1732 = vcmp.eq.s32.totalorder %v1689, %v846
      %vm1733 = vcmp.eq.s32.totalorder %v1692, %v845
      %vm1734 = vcmp.eq.s32.totalorder %v1692, %v846
      %vm1735 = vcmp.eq.s32.totalorder %v1695, %v845
      %vm1736 = vcmp.eq.s32.totalorder %v1695, %v846
      %vm1737 = vcmp.eq.s32.totalorder %v1698, %v845
      %vm1738 = vcmp.eq.s32.totalorder %v1698, %v846
      %vm1739 = vcmp.eq.s32.totalorder %v1701, %v845
      %vm1740 = vcmp.eq.s32.totalorder %v1701, %v846
      %vm1741 = vcmp.eq.s32.totalorder %v1704, %v845
      %vm1742 = vcmp.eq.s32.totalorder %v1704, %v846
      %vm1743 = vcmp.eq.s32.totalorder %v1707, %v845
      %vm1744 = vcmp.eq.s32.totalorder %v1707, %v846
      %vm1745 = vcmp.eq.s32.totalorder %v1710, %v845
      %vm1746 = vcmp.eq.s32.totalorder %v1710, %v846
      %vm1747 = vcmp.eq.s32.totalorder %v1713, %v845
      %vm1748 = vcmp.eq.s32.totalorder %v1713, %v846
      %vm1749 = vcmp.eq.s32.totalorder %v1716, %v845
      %vm1750 = vcmp.eq.s32.totalorder %v1716, %v846
      %vm1751 = vcmp.eq.s32.totalorder %v1719, %v845
      %vm1752 = vcmp.eq.s32.totalorder %v1719, %v846
      %vm1753 = vcmp.eq.s32.totalorder %v1722, %v845
      %vm1754 = vcmp.eq.s32.totalorder %v1722, %v846
      %v1755 = vsel %vm1723, 1, 0
      %v1756 = vsel %vm1724, 1, 0
      %v1757 = vsel %vm1725, 1, 0
      %v1758 = vsel %vm1726, 1, 0
      %v1759 = vsel %vm1727, 1, 0
      %v1760 = vsel %vm1728, 1, 0
      %v1761 = vsel %vm1729, 1, 0
      %v1762 = vsel %vm1730, 1, 0
      %v1763 = vsel %vm1731, 1, 0
      %v1764 = vsel %vm1732, 1, 0
      %v1765 = vsel %vm1733, 1, 0
      %v1766 = vsel %vm1734, 1, 0
      %v1767 = vsel %vm1735, 1, 0
      %v1768 = vsel %vm1736, 1, 0
      %v1769 = vsel %vm1737, 1, 0
      %v1770 = vsel %vm1738, 1, 0
      %v1771 = vsel %vm1739, 1, 0
      %v1772 = vsel %vm1740, 1, 0
      %v1773 = vsel %vm1741, 1, 0
      %v1774 = vsel %vm1742, 1, 0
      %v1775 = vsel %vm1743, 1, 0
      %v1776 = vsel %vm1744, 1, 0
      %v1777 = vsel %vm1745, 1, 0
      %v1778 = vsel %vm1746, 1, 0
      %v1779 = vsel %vm1747, 1, 0
      %v1780 = vsel %vm1748, 1, 0
      %v1781 = vsel %vm1749, 1, 0
      %v1782 = vsel %vm1750, 1, 0
      %v1783 = vsel %vm1751, 1, 0
      %v1784 = vsel %vm1752, 1, 0
      %v1785 = vsel %vm1753, 1, 0
      %v1786 = vsel %vm1754, 1, 0
      %v1787 = vcvt.s32.f32 %v1755
      %v1788 = vcvt.s32.f32 %v1756
      %v1789 = vcvt.s32.f32 %v1757
      %v1790 = vcvt.s32.f32 %v1758
      %v1791 = vcvt.s32.f32 %v1759
      %v1792 = vcvt.s32.f32 %v1760
      %v1793 = vcvt.s32.f32 %v1761
      %v1794 = vcvt.s32.f32 %v1762
      %v1795 = vcvt.s32.f32 %v1763
      %v1796 = vcvt.s32.f32 %v1764
      %v1797 = vcvt.s32.f32 %v1765
      %v1798 = vcvt.s32.f32 %v1766
      %v1799 = vcvt.s32.f32 %v1767
      %v1800 = vcvt.s32.f32 %v1768
      %v1801 = vcvt.s32.f32 %v1769
      %v1802 = vcvt.s32.f32 %v1770
      %v1803 = vcvt.s32.f32 %v1771
      %v1804 = vcvt.s32.f32 %v1772
      %v1805 = vcvt.s32.f32 %v1773
      %v1806 = vcvt.s32.f32 %v1774
      %v1807 = vcvt.s32.f32 %v1775
      %v1808 = vcvt.s32.f32 %v1776
      %v1809 = vcvt.s32.f32 %v1777
      %v1810 = vcvt.s32.f32 %v1778
      %v1811 = vcvt.s32.f32 %v1779
      %v1812 = vcvt.s32.f32 %v1780
      %v1813 = vcvt.s32.f32 %v1781
      %v1814 = vcvt.s32.f32 %v1782
      %v1815 = vcvt.s32.f32 %v1783
      %v1816 = vcvt.s32.f32 %v1784
      %v1817 = vcvt.s32.f32 %v1785
      %v1818 = vcvt.s32.f32 %v1786
      %1819 = vmatpush.msra.mxu0 %v775
      %1820 = vmatpush.msra.mxu0 %v774
      %1821 = vmatpush.msra.mxu0 %v773
      %1822 = vmatpush.msra.mxu0 %v772
      %1823 = vmatpush.msra.mxu0 %v771
      %1824 = vmatpush.msra.mxu0 %v770
      %1825 = vmatpush.msra.mxu0 %v769
      %1826 = vmatpush.msra.mxu0 %v768
      %1827 = vmatpush.msra.mxu0 %v767
      %1828 = vmatpush.msra.mxu0 %v766
      %1829 = vmatpush.msra.mxu0 %v765
      %1830 = vmatpush.msra.mxu0 %v764
      %1831 = vmatpush.msra.mxu0 %v763
      %1832 = vmatpush.msra.mxu0 %v762
      %1833 = vmatpush.msra.mxu0 %v761
      %1834 = vmatpush.msra.mxu0 %v760
      %1835 = vmatmul.f32.gmra.mxu0 %v1787
      %v1836 = vpop.f32.mrf.mxu0
      %v1837 = vadd.f32 %v794, %v1836
      %1838 = vmatmul.f32.gmra.mxu0 %v1789
      %v1839 = vpop.f32.mrf.mxu0
      %v1840 = vadd.f32 %v795, %v1839
      %1841 = vmatmul.f32.gmra.mxu0 %v1791
      %v1842 = vpop.f32.mrf.mxu0
      %v1843 = vadd.f32 %v796, %v1842
      %1844 = vmatmul.f32.gmra.mxu0 %v1793
      %v1845 = vpop.f32.mrf.mxu0
      %v1846 = vadd.f32 %v797, %v1845
      %1847 = vmatmul.f32.gmra.mxu0 %v1795
      %v1848 = vpop.f32.mrf.mxu0
      %v1849 = vadd.f32 %v798, %v1848
      %1850 = vmatmul.f32.gmra.mxu0 %v1797
      %v1851 = vpop.f32.mrf.mxu0
      %v1852 = vadd.f32 %v799, %v1851
      %1853 = vmatmul.f32.gmra.mxu0 %v1799
      %v1854 = vpop.f32.mrf.mxu0
      %v1855 = vadd.f32 %v800, %v1854
      %1856 = vmatmul.f32.gmra.mxu0 %v1801
      %v1857 = vpop.f32.mrf.mxu0
      %v1858 = vadd.f32 %v801, %v1857
      %1859 = vmatmul.f32.gmra.mxu0 %v1803
      %v1860 = vpop.f32.mrf.mxu0
      %v1861 = vadd.f32 %v802, %v1860
      %1862 = vmatmul.f32.gmra.mxu0 %v1805
      %v1863 = vpop.f32.mrf.mxu0
      %v1864 = vadd.f32 %v803, %v1863
      %1865 = vmatmul.f32.gmra.mxu0 %v1807
      %v1866 = vpop.f32.mrf.mxu0
      %v1867 = vadd.f32 %v804, %v1866
      %1868 = vmatmul.f32.gmra.mxu0 %v1809
      %v1869 = vpop.f32.mrf.mxu0
      %v1870 = vadd.f32 %v805, %v1869
      %1871 = vmatmul.f32.gmra.mxu0 %v1811
      %v1872 = vpop.f32.mrf.mxu0
      %v1873 = vadd.f32 %v806, %v1872
      %1874 = vmatmul.f32.gmra.mxu0 %v1813
      %v1875 = vpop.f32.mrf.mxu0
      %v1876 = vadd.f32 %v807, %v1875
      %1877 = vmatmul.f32.gmra.mxu0 %v1815
      %v1878 = vpop.f32.mrf.mxu0
      %v1879 = vadd.f32 %v808, %v1878
      %1880 = vmatmul.f32.gmra.mxu0 %v1817
      %v1881 = vpop.f32.mrf.mxu0
      %v1882 = vadd.f32 %v809, %v1881
      %1883 = vdwg.mxu0
      %1884 = vmatpush.msra.mxu0 %v791
      %1885 = vmatpush.msra.mxu0 %v790
      %1886 = vmatpush.msra.mxu0 %v789
      %1887 = vmatpush.msra.mxu0 %v788
      %1888 = vmatpush.msra.mxu0 %v787
      %1889 = vmatpush.msra.mxu0 %v786
      %1890 = vmatpush.msra.mxu0 %v785
      %1891 = vmatpush.msra.mxu0 %v784
      %1892 = vmatpush.msra.mxu0 %v783
      %1893 = vmatpush.msra.mxu0 %v782
      %1894 = vmatpush.msra.mxu0 %v781
      %1895 = vmatpush.msra.mxu0 %v780
      %1896 = vmatpush.msra.mxu0 %v779
      %1897 = vmatpush.msra.mxu0 %v778
      %1898 = vmatpush.msra.mxu0 %v777
      %1899 = vmatpush.msra.mxu0 %v776
      %1900 = vmatmul.f32.gmra.mxu0 %v1788
      %v1901 = vpop.f32.mrf.mxu0
      %v1902 = vadd.f32 %v1837, %v1901
      %1903 = vmatmul.f32.gmra.mxu0 %v1790
      %v1904 = vpop.f32.mrf.mxu0
      %v1905 = vadd.f32 %v1840, %v1904
      %1906 = vmatmul.f32.gmra.mxu0 %v1792
      %v1907 = vpop.f32.mrf.mxu0
      %v1908 = vadd.f32 %v1843, %v1907
      %1909 = vmatmul.f32.gmra.mxu0 %v1794
      %v1910 = vpop.f32.mrf.mxu0
      %v1911 = vadd.f32 %v1846, %v1910
      %1912 = vmatmul.f32.gmra.mxu0 %v1796
      %v1913 = vpop.f32.mrf.mxu0
      %v1914 = vadd.f32 %v1849, %v1913
      %1915 = vmatmul.f32.gmra.mxu0 %v1798
      %v1916 = vpop.f32.mrf.mxu0
      %v1917 = vadd.f32 %v1852, %v1916
      %1918 = vmatmul.f32.gmra.mxu0 %v1800
      %v1919 = vpop.f32.mrf.mxu0
      %v1920 = vadd.f32 %v1855, %v1919
      %1921 = vmatmul.f32.gmra.mxu0 %v1802
      %v1922 = vpop.f32.mrf.mxu0
      %v1923 = vadd.f32 %v1858, %v1922
      %1924 = vmatmul.f32.gmra.mxu0 %v1804
      %v1925 = vpop.f32.mrf.mxu0
      %v1926 = vadd.f32 %v1861, %v1925
      %1927 = vmatmul.f32.gmra.mxu0 %v1806
      %v1928 = vpop.f32.mrf.mxu0
      %v1929 = vadd.f32 %v1864, %v1928
      %1930 = vmatmul.f32.gmra.mxu0 %v1808
      %v1931 = vpop.f32.mrf.mxu0
      %v1932 = vadd.f32 %v1867, %v1931
      %1933 = vmatmul.f32.gmra.mxu0 %v1810
      %v1934 = vpop.f32.mrf.mxu0
      %v1935 = vadd.f32 %v1870, %v1934
      %1936 = vmatmul.f32.gmra.mxu0 %v1812
      %v1937 = vpop.f32.mrf.mxu0
      %v1938 = vadd.f32 %v1873, %v1937
      %1939 = vmatmul.f32.gmra.mxu0 %v1814
      %v1940 = vpop.f32.mrf.mxu0
      %v1941 = vadd.f32 %v1876, %v1940
      %1942 = vmatmul.f32.gmra.mxu0 %v1816
      %v1943 = vpop.f32.mrf.mxu0
      %v1944 = vadd.f32 %v1879, %v1943
      %1945 = vmatmul.f32.gmra.mxu0 %v1818
      %v1946 = vpop.f32.mrf.mxu0
      %v1947 = vadd.f32 %v1882, %v1946
      %1948 = vdwg.mxu0
      %v1949 = vadd.f32 %v1902, %v1122
      %v1950 = vadd.f32 %v1905, %v1122
      %v1951 = vadd.f32 %v1908, %v1122
      %v1952 = vadd.f32 %v1911, %v1122
      %v1953 = vadd.f32 %v1914, %v1122
      %v1954 = vadd.f32 %v1917, %v1122
      %v1955 = vadd.f32 %v1920, %v1122
      %v1956 = vadd.f32 %v1923, %v1122
      %v1957 = vadd.f32 %v1926, %v1122
      %v1958 = vadd.f32 %v1929, %v1122
      %v1959 = vadd.f32 %v1932, %v1122
      %v1960 = vadd.f32 %v1935, %v1122
      %v1961 = vadd.f32 %v1938, %v1122
      %v1962 = vadd.f32 %v1941, %v1122
      %v1963 = vadd.f32 %v1944, %v1122
      %v1964 = vadd.f32 %v1947, %v1122
      %v1965 = vmax.f32 %v1949, 0.0
      %v1966 = vmax.f32 %v1950, 0.0
      %v1967 = vmax.f32 %v1951, 0.0
      %v1968 = vmax.f32 %v1952, 0.0
      %v1969 = vmax.f32 %v1953, 0.0
      %v1970 = vmax.f32 %v1954, 0.0
      %v1971 = vmax.f32 %v1955, 0.0
      %v1972 = vmax.f32 %v1956, 0.0
      %v1973 = vmax.f32 %v1957, 0.0
      %v1974 = vmax.f32 %v1958, 0.0
      %v1975 = vmax.f32 %v1959, 0.0
      %v1976 = vmax.f32 %v1960, 0.0
      %v1977 = vmax.f32 %v1961, 0.0
      %v1978 = vmax.f32 %v1962, 0.0
      %v1979 = vmax.f32 %v1963, 0.0
      %v1980 = vmax.f32 %v1964, 0.0
      %v1981 = vpack.c.bf16 %v1966, %v1965
      %v1982 = vpack.c.bf16 %v1968, %v1967
      %v1983 = vpack.c.bf16 %v1970, %v1969
      %v1984 = vpack.c.bf16 %v1972, %v1971
      %v1985 = vpack.c.bf16 %v1974, %v1973
      %v1986 = vpack.c.bf16 %v1976, %v1975
      %v1987 = vpack.c.bf16 %v1978, %v1977
      %v1988 = vpack.c.bf16 %v1980, %v1979
      %1989 = vmatpush.bf16.msra.mxu0 %v1206
      %1990 = vmatpush.bf16.msra.mxu0 %v1205
      %1991 = vmatpush.bf16.msra.mxu0 %v1204
      %1992 = vmatpush.bf16.msra.mxu0 %v1203
      %1993 = vmatpush.bf16.msra.mxu0 %v1202
      %1994 = vmatpush.bf16.msra.mxu0 %v1201
      %1995 = vmatpush.bf16.msra.mxu0 %v1200
      %1996 = vmatpush.bf16.msra.mxu0 %v1199
      %1997 = vmatmul.bf16.gmra.mxu0 %v1981
      %v1998 = vpop.f32.mrf.mxu0
      %v1999 = vadd.f32 %v1165, %v1998
      %v2000 = vpop.f32.mrf.mxu0
      %v2001 = vadd.f32 %v1165, %v2000
      %2002 = vmatmul.bf16.gmra.mxu0 %v1982
      %v2003 = vpop.f32.mrf.mxu0
      %v2004 = vadd.f32 %v1165, %v2003
      %v2005 = vpop.f32.mrf.mxu0
      %v2006 = vadd.f32 %v1165, %v2005
      %2007 = vmatmul.bf16.gmra.mxu0 %v1983
      %v2008 = vpop.f32.mrf.mxu0
      %v2009 = vadd.f32 %v1165, %v2008
      %v2010 = vpop.f32.mrf.mxu0
      %v2011 = vadd.f32 %v1165, %v2010
      %2012 = vmatmul.bf16.gmra.mxu0 %v1984
      %v2013 = vpop.f32.mrf.mxu0
      %v2014 = vadd.f32 %v1165, %v2013
      %v2015 = vpop.f32.mrf.mxu0
      %v2016 = vadd.f32 %v1165, %v2015
      %2017 = vmatmul.bf16.gmra.mxu0 %v1985
      %v2018 = vpop.f32.mrf.mxu0
      %v2019 = vadd.f32 %v1165, %v2018
      %v2020 = vpop.f32.mrf.mxu0
      %v2021 = vadd.f32 %v1165, %v2020
      %2022 = vmatmul.bf16.gmra.mxu0 %v1986
      %v2023 = vpop.f32.mrf.mxu0
      %v2024 = vadd.f32 %v1165, %v2023
      %v2025 = vpop.f32.mrf.mxu0
      %v2026 = vadd.f32 %v1165, %v2025
      %2027 = vmatmul.bf16.gmra.mxu0 %v1987
      %v2028 = vpop.f32.mrf.mxu0
      %v2029 = vadd.f32 %v1165, %v2028
      %v2030 = vpop.f32.mrf.mxu0
      %v2031 = vadd.f32 %v1165, %v2030
      %2032 = vmatmul.bf16.gmra.mxu0 %v1988
      %v2033 = vpop.f32.mrf.mxu0
      %v2034 = vadd.f32 %v1165, %v2033
      %v2035 = vpop.f32.mrf.mxu0
      %v2036 = vadd.f32 %v1165, %v2035
      %2037 = vdwg.mxu0
      %v2038 = vmax.f32 %v1999, 0.0
      %v2039 = vmax.f32 %v2001, 0.0
      %v2040 = vmax.f32 %v2004, 0.0
      %v2041 = vmax.f32 %v2006, 0.0
      %v2042 = vmax.f32 %v2009, 0.0
      %v2043 = vmax.f32 %v2011, 0.0
      %v2044 = vmax.f32 %v2014, 0.0
      %v2045 = vmax.f32 %v2016, 0.0
      %v2046 = vmax.f32 %v2019, 0.0
      %v2047 = vmax.f32 %v2021, 0.0
      %v2048 = vmax.f32 %v2024, 0.0
      %v2049 = vmax.f32 %v2026, 0.0
      %v2050 = vmax.f32 %v2029, 0.0
      %v2051 = vmax.f32 %v2031, 0.0
      %v2052 = vmax.f32 %v2034, 0.0
      %v2053 = vmax.f32 %v2036, 0.0
      %v2054 = vmax.f32 %v1659, %v2038
      %v2055 = vmax.f32 %v1660, %v2039
      %v2056 = vmax.f32 %v1661, %v2040
      %v2057 = vmax.f32 %v1662, %v2041
      %v2058 = vmax.f32 %v1663, %v2042
      %v2059 = vmax.f32 %v1664, %v2043
      %v2060 = vmax.f32 %v1665, %v2044
      %v2061 = vmax.f32 %v1666, %v2045
      %v2062 = vmax.f32 %v1667, %v2046
      %v2063 = vmax.f32 %v1668, %v2047
      %v2064 = vmax.f32 %v1669, %v2048
      %v2065 = vmax.f32 %v1670, %v2049
      %v2066 = vmax.f32 %v1671, %v2050
      %v2067 = vmax.f32 %v1672, %v2051
      %v2068 = vmax.f32 %v1673, %v2052
      %v2069 = vmax.f32 %v1674, %v2053
      %2070 = vset.pattern.permute.xlu0 3
      %2071 = vperm.xlu0 %2070, %v828
      %v2072 = vpop.permute.xlu0 %2071
      %2073 = vset.pattern.permute.xlu0 3
      %2074 = vperm.xlu0 %2073, %v829
      %v2075 = vpop.permute.xlu0 %2074
      %2076 = vset.pattern.permute.xlu0 3
      %2077 = vperm.xlu0 %2076, %v830
      %v2078 = vpop.permute.xlu0 %2077
      %2079 = vset.pattern.permute.xlu0 3
      %2080 = vperm.xlu0 %2079, %v831
      %v2081 = vpop.permute.xlu0 %2080
      %2082 = vset.pattern.permute.xlu0 3
      %2083 = vperm.xlu0 %2082, %v832
      %v2084 = vpop.permute.xlu0 %2083
      %2085 = vset.pattern.permute.xlu0 3
      %2086 = vperm.xlu0 %2085, %v833
      %v2087 = vpop.permute.xlu0 %2086
      %2088 = vset.pattern.permute.xlu0 3
      %2089 = vperm.xlu0 %2088, %v834
      %v2090 = vpop.permute.xlu0 %2089
      %2091 = vset.pattern.permute.xlu0 3
      %2092 = vperm.xlu0 %2091, %v835
      %v2093 = vpop.permute.xlu0 %2092
      %2094 = vset.pattern.permute.xlu0 3
      %2095 = vperm.xlu0 %2094, %v836
      %v2096 = vpop.permute.xlu0 %2095
      %2097 = vset.pattern.permute.xlu0 3
      %2098 = vperm.xlu0 %2097, %v837
      %v2099 = vpop.permute.xlu0 %2098
      %2100 = vset.pattern.permute.xlu0 3
      %2101 = vperm.xlu0 %2100, %v838
      %v2102 = vpop.permute.xlu0 %2101
      %2103 = vset.pattern.permute.xlu0 3
      %2104 = vperm.xlu0 %2103, %v839
      %v2105 = vpop.permute.xlu0 %2104
      %2106 = vset.pattern.permute.xlu0 3
      %2107 = vperm.xlu0 %2106, %v840
      %v2108 = vpop.permute.xlu0 %2107
      %2109 = vset.pattern.permute.xlu0 3
      %2110 = vperm.xlu0 %2109, %v841
      %v2111 = vpop.permute.xlu0 %2110
      %2112 = vset.pattern.permute.xlu0 3
      %2113 = vperm.xlu0 %2112, %v842
      %v2114 = vpop.permute.xlu0 %2113
      %2115 = vset.pattern.permute.xlu0 3
      %2116 = vperm.xlu0 %2115, %v843
      %v2117 = vpop.permute.xlu0 %2116
      %vm2118 = vcmp.eq.s32.totalorder %v2072, %v845
      %vm2119 = vcmp.eq.s32.totalorder %v2072, %v846
      %vm2120 = vcmp.eq.s32.totalorder %v2075, %v845
      %vm2121 = vcmp.eq.s32.totalorder %v2075, %v846
      %vm2122 = vcmp.eq.s32.totalorder %v2078, %v845
      %vm2123 = vcmp.eq.s32.totalorder %v2078, %v846
      %vm2124 = vcmp.eq.s32.totalorder %v2081, %v845
      %vm2125 = vcmp.eq.s32.totalorder %v2081, %v846
      %vm2126 = vcmp.eq.s32.totalorder %v2084, %v845
      %vm2127 = vcmp.eq.s32.totalorder %v2084, %v846
      %vm2128 = vcmp.eq.s32.totalorder %v2087, %v845
      %vm2129 = vcmp.eq.s32.totalorder %v2087, %v846
      %vm2130 = vcmp.eq.s32.totalorder %v2090, %v845
      %vm2131 = vcmp.eq.s32.totalorder %v2090, %v846
      %vm2132 = vcmp.eq.s32.totalorder %v2093, %v845
      %vm2133 = vcmp.eq.s32.totalorder %v2093, %v846
      %vm2134 = vcmp.eq.s32.totalorder %v2096, %v845
      %vm2135 = vcmp.eq.s32.totalorder %v2096, %v846
      %vm2136 = vcmp.eq.s32.totalorder %v2099, %v845
      %vm2137 = vcmp.eq.s32.totalorder %v2099, %v846
      %vm2138 = vcmp.eq.s32.totalorder %v2102, %v845
      %vm2139 = vcmp.eq.s32.totalorder %v2102, %v846
      %vm2140 = vcmp.eq.s32.totalorder %v2105, %v845
      %vm2141 = vcmp.eq.s32.totalorder %v2105, %v846
      %vm2142 = vcmp.eq.s32.totalorder %v2108, %v845
      %vm2143 = vcmp.eq.s32.totalorder %v2108, %v846
      %vm2144 = vcmp.eq.s32.totalorder %v2111, %v845
      %vm2145 = vcmp.eq.s32.totalorder %v2111, %v846
      %vm2146 = vcmp.eq.s32.totalorder %v2114, %v845
      %vm2147 = vcmp.eq.s32.totalorder %v2114, %v846
      %vm2148 = vcmp.eq.s32.totalorder %v2117, %v845
      %vm2149 = vcmp.eq.s32.totalorder %v2117, %v846
      %v2150 = vsel %vm2118, 1, 0
      %v2151 = vsel %vm2119, 1, 0
      %v2152 = vsel %vm2120, 1, 0
      %v2153 = vsel %vm2121, 1, 0
      %v2154 = vsel %vm2122, 1, 0
      %v2155 = vsel %vm2123, 1, 0
      %v2156 = vsel %vm2124, 1, 0
      %v2157 = vsel %vm2125, 1, 0
      %v2158 = vsel %vm2126, 1, 0
      %v2159 = vsel %vm2127, 1, 0
      %v2160 = vsel %vm2128, 1, 0
      %v2161 = vsel %vm2129, 1, 0
      %v2162 = vsel %vm2130, 1, 0
      %v2163 = vsel %vm2131, 1, 0
      %v2164 = vsel %vm2132, 1, 0
      %v2165 = vsel %vm2133, 1, 0
      %v2166 = vsel %vm2134, 1, 0
      %v2167 = vsel %vm2135, 1, 0
      %v2168 = vsel %vm2136, 1, 0
      %v2169 = vsel %vm2137, 1, 0
      %v2170 = vsel %vm2138, 1, 0
      %v2171 = vsel %vm2139, 1, 0
      %v2172 = vsel %vm2140, 1, 0
      %v2173 = vsel %vm2141, 1, 0
      %v2174 = vsel %vm2142, 1, 0
      %v2175 = vsel %vm2143, 1, 0
      %v2176 = vsel %vm2144, 1, 0
      %v2177 = vsel %vm2145, 1, 0
      %v2178 = vsel %vm2146, 1, 0
      %v2179 = vsel %vm2147, 1, 0
      %v2180 = vsel %vm2148, 1, 0
      %v2181 = vsel %vm2149, 1, 0
      %v2182 = vcvt.s32.f32 %v2150
      %v2183 = vcvt.s32.f32 %v2151
      %v2184 = vcvt.s32.f32 %v2152
      %v2185 = vcvt.s32.f32 %v2153
      %v2186 = vcvt.s32.f32 %v2154
      %v2187 = vcvt.s32.f32 %v2155
      %v2188 = vcvt.s32.f32 %v2156
      %v2189 = vcvt.s32.f32 %v2157
      %v2190 = vcvt.s32.f32 %v2158
      %v2191 = vcvt.s32.f32 %v2159
      %v2192 = vcvt.s32.f32 %v2160
      %v2193 = vcvt.s32.f32 %v2161
      %v2194 = vcvt.s32.f32 %v2162
      %v2195 = vcvt.s32.f32 %v2163
      %v2196 = vcvt.s32.f32 %v2164
      %v2197 = vcvt.s32.f32 %v2165
      %v2198 = vcvt.s32.f32 %v2166
      %v2199 = vcvt.s32.f32 %v2167
      %v2200 = vcvt.s32.f32 %v2168
      %v2201 = vcvt.s32.f32 %v2169
      %v2202 = vcvt.s32.f32 %v2170
      %v2203 = vcvt.s32.f32 %v2171
      %v2204 = vcvt.s32.f32 %v2172
      %v2205 = vcvt.s32.f32 %v2173
      %v2206 = vcvt.s32.f32 %v2174
      %v2207 = vcvt.s32.f32 %v2175
      %v2208 = vcvt.s32.f32 %v2176
      %v2209 = vcvt.s32.f32 %v2177
      %v2210 = vcvt.s32.f32 %v2178
      %v2211 = vcvt.s32.f32 %v2179
      %v2212 = vcvt.s32.f32 %v2180
      %v2213 = vcvt.s32.f32 %v2181
      %2214 = vmatpush.msra.mxu0 %v775
      %2215 = vmatpush.msra.mxu0 %v774
      %2216 = vmatpush.msra.mxu0 %v773
      %2217 = vmatpush.msra.mxu0 %v772
      %2218 = vmatpush.msra.mxu0 %v771
      %2219 = vmatpush.msra.mxu0 %v770
      %2220 = vmatpush.msra.mxu0 %v769
      %2221 = vmatpush.msra.mxu0 %v768
      %2222 = vmatpush.msra.mxu0 %v767
      %2223 = vmatpush.msra.mxu0 %v766
      %2224 = vmatpush.msra.mxu0 %v765
      %2225 = vmatpush.msra.mxu0 %v764
      %2226 = vmatpush.msra.mxu0 %v763
      %2227 = vmatpush.msra.mxu0 %v762
      %2228 = vmatpush.msra.mxu0 %v761
      %2229 = vmatpush.msra.mxu0 %v760
      %2230 = vmatmul.f32.gmra.mxu0 %v2182
      %v2231 = vpop.f32.mrf.mxu0
      %v2232 = vadd.f32 %v794, %v2231
      %2233 = vmatmul.f32.gmra.mxu0 %v2184
      %v2234 = vpop.f32.mrf.mxu0
      %v2235 = vadd.f32 %v795, %v2234
      %2236 = vmatmul.f32.gmra.mxu0 %v2186
      %v2237 = vpop.f32.mrf.mxu0
      %v2238 = vadd.f32 %v796, %v2237
      %2239 = vmatmul.f32.gmra.mxu0 %v2188
      %v2240 = vpop.f32.mrf.mxu0
      %v2241 = vadd.f32 %v797, %v2240
      %2242 = vmatmul.f32.gmra.mxu0 %v2190
      %v2243 = vpop.f32.mrf.mxu0
      %v2244 = vadd.f32 %v798, %v2243
      %2245 = vmatmul.f32.gmra.mxu0 %v2192
      %v2246 = vpop.f32.mrf.mxu0
      %v2247 = vadd.f32 %v799, %v2246
      %2248 = vmatmul.f32.gmra.mxu0 %v2194
      %v2249 = vpop.f32.mrf.mxu0
      %v2250 = vadd.f32 %v800, %v2249
      %2251 = vmatmul.f32.gmra.mxu0 %v2196
      %v2252 = vpop.f32.mrf.mxu0
      %v2253 = vadd.f32 %v801, %v2252
      %2254 = vmatmul.f32.gmra.mxu0 %v2198
      %v2255 = vpop.f32.mrf.mxu0
      %v2256 = vadd.f32 %v802, %v2255
      %2257 = vmatmul.f32.gmra.mxu0 %v2200
      %v2258 = vpop.f32.mrf.mxu0
      %v2259 = vadd.f32 %v803, %v2258
      %2260 = vmatmul.f32.gmra.mxu0 %v2202
      %v2261 = vpop.f32.mrf.mxu0
      %v2262 = vadd.f32 %v804, %v2261
      %2263 = vmatmul.f32.gmra.mxu0 %v2204
      %v2264 = vpop.f32.mrf.mxu0
      %v2265 = vadd.f32 %v805, %v2264
      %2266 = vmatmul.f32.gmra.mxu0 %v2206
      %v2267 = vpop.f32.mrf.mxu0
      %v2268 = vadd.f32 %v806, %v2267
      %2269 = vmatmul.f32.gmra.mxu0 %v2208
      %v2270 = vpop.f32.mrf.mxu0
      %v2271 = vadd.f32 %v807, %v2270
      %2272 = vmatmul.f32.gmra.mxu0 %v2210
      %v2273 = vpop.f32.mrf.mxu0
      %v2274 = vadd.f32 %v808, %v2273
      %2275 = vmatmul.f32.gmra.mxu0 %v2212
      %v2276 = vpop.f32.mrf.mxu0
      %v2277 = vadd.f32 %v809, %v2276
      %2278 = vdwg.mxu0
      %2279 = vmatpush.msra.mxu0 %v791
      %2280 = vmatpush.msra.mxu0 %v790
      %2281 = vmatpush.msra.mxu0 %v789
      %2282 = vmatpush.msra.mxu0 %v788
      %2283 = vmatpush.msra.mxu0 %v787
      %2284 = vmatpush.msra.mxu0 %v786
      %2285 = vmatpush.msra.mxu0 %v785
      %2286 = vmatpush.msra.mxu0 %v784
      %2287 = vmatpush.msra.mxu0 %v783
      %2288 = vmatpush.msra.mxu0 %v782
      %2289 = vmatpush.msra.mxu0 %v781
      %2290 = vmatpush.msra.mxu0 %v780
      %2291 = vmatpush.msra.mxu0 %v779
      %2292 = vmatpush.msra.mxu0 %v778
      %2293 = vmatpush.msra.mxu0 %v777
      %2294 = vmatpush.msra.mxu0 %v776
      %2295 = vmatmul.f32.gmra.mxu0 %v2183
      %v2296 = vpop.f32.mrf.mxu0
      %v2297 = vadd.f32 %v2232, %v2296
      %2298 = vmatmul.f32.gmra.mxu0 %v2185
      %v2299 = vpop.f32.mrf.mxu0
      %v2300 = vadd.f32 %v2235, %v2299
      %2301 = vmatmul.f32.gmra.mxu0 %v2187
      %v2302 = vpop.f32.mrf.mxu0
      %v2303 = vadd.f32 %v2238, %v2302
      %2304 = vmatmul.f32.gmra.mxu0 %v2189
      %v2305 = vpop.f32.mrf.mxu0
      %v2306 = vadd.f32 %v2241, %v2305
      %2307 = vmatmul.f32.gmra.mxu0 %v2191
      %v2308 = vpop.f32.mrf.mxu0
      %v2309 = vadd.f32 %v2244, %v2308
      %2310 = vmatmul.f32.gmra.mxu0 %v2193
      %v2311 = vpop.f32.mrf.mxu0
      %v2312 = vadd.f32 %v2247, %v2311
      %2313 = vmatmul.f32.gmra.mxu0 %v2195
      %v2314 = vpop.f32.mrf.mxu0
      %v2315 = vadd.f32 %v2250, %v2314
      %2316 = vmatmul.f32.gmra.mxu0 %v2197
      %v2317 = vpop.f32.mrf.mxu0
      %v2318 = vadd.f32 %v2253, %v2317
      %2319 = vmatmul.f32.gmra.mxu0 %v2199
      %v2320 = vpop.f32.mrf.mxu0
      %v2321 = vadd.f32 %v2256, %v2320
      %2322 = vmatmul.f32.gmra.mxu0 %v2201
      %v2323 = vpop.f32.mrf.mxu0
      %v2324 = vadd.f32 %v2259, %v2323
      %2325 = vmatmul.f32.gmra.mxu0 %v2203
      %v2326 = vpop.f32.mrf.mxu0
      %v2327 = vadd.f32 %v2262, %v2326
      %2328 = vmatmul.f32.gmra.mxu0 %v2205
      %v2329 = vpop.f32.mrf.mxu0
      %v2330 = vadd.f32 %v2265, %v2329
      %2331 = vmatmul.f32.gmra.mxu0 %v2207
      %v2332 = vpop.f32.mrf.mxu0
      %v2333 = vadd.f32 %v2268, %v2332
      %2334 = vmatmul.f32.gmra.mxu0 %v2209
      %v2335 = vpop.f32.mrf.mxu0
      %v2336 = vadd.f32 %v2271, %v2335
      %2337 = vmatmul.f32.gmra.mxu0 %v2211
      %v2338 = vpop.f32.mrf.mxu0
      %v2339 = vadd.f32 %v2274, %v2338
      %2340 = vmatmul.f32.gmra.mxu0 %v2213
      %v2341 = vpop.f32.mrf.mxu0
      %v2342 = vadd.f32 %v2277, %v2341
      %2343 = vdwg.mxu0
      %v2344 = vadd.f32 %v2297, %v1122
      %v2345 = vadd.f32 %v2300, %v1122
      %v2346 = vadd.f32 %v2303, %v1122
      %v2347 = vadd.f32 %v2306, %v1122
      %v2348 = vadd.f32 %v2309, %v1122
      %v2349 = vadd.f32 %v2312, %v1122
      %v2350 = vadd.f32 %v2315, %v1122
      %v2351 = vadd.f32 %v2318, %v1122
      %v2352 = vadd.f32 %v2321, %v1122
      %v2353 = vadd.f32 %v2324, %v1122
      %v2354 = vadd.f32 %v2327, %v1122
      %v2355 = vadd.f32 %v2330, %v1122
      %v2356 = vadd.f32 %v2333, %v1122
      %v2357 = vadd.f32 %v2336, %v1122
      %v2358 = vadd.f32 %v2339, %v1122
      %v2359 = vadd.f32 %v2342, %v1122
      %v2360 = vmax.f32 %v2344, 0.0
      %v2361 = vmax.f32 %v2345, 0.0
      %v2362 = vmax.f32 %v2346, 0.0
      %v2363 = vmax.f32 %v2347, 0.0
      %v2364 = vmax.f32 %v2348, 0.0
      %v2365 = vmax.f32 %v2349, 0.0
      %v2366 = vmax.f32 %v2350, 0.0
      %v2367 = vmax.f32 %v2351, 0.0
      %v2368 = vmax.f32 %v2352, 0.0
      %v2369 = vmax.f32 %v2353, 0.0
      %v2370 = vmax.f32 %v2354, 0.0
      %v2371 = vmax.f32 %v2355, 0.0
      %v2372 = vmax.f32 %v2356, 0.0
      %v2373 = vmax.f32 %v2357, 0.0
      %v2374 = vmax.f32 %v2358, 0.0
      %v2375 = vmax.f32 %v2359, 0.0
      %v2376 = vpack.c.bf16 %v2361, %v2360
      %v2377 = vpack.c.bf16 %v2363, %v2362
      %v2378 = vpack.c.bf16 %v2365, %v2364
      %v2379 = vpack.c.bf16 %v2367, %v2366
      %v2380 = vpack.c.bf16 %v2369, %v2368
      %v2381 = vpack.c.bf16 %v2371, %v2370
      %v2382 = vpack.c.bf16 %v2373, %v2372
      %v2383 = vpack.c.bf16 %v2375, %v2374
      %2384 = vmatpush.bf16.msra.mxu0 %v1206
      %2385 = vmatpush.bf16.msra.mxu0 %v1205
      %2386 = vmatpush.bf16.msra.mxu0 %v1204
      %2387 = vmatpush.bf16.msra.mxu0 %v1203
      %2388 = vmatpush.bf16.msra.mxu0 %v1202
      %2389 = vmatpush.bf16.msra.mxu0 %v1201
      %2390 = vmatpush.bf16.msra.mxu0 %v1200
      %2391 = vmatpush.bf16.msra.mxu0 %v1199
      %2392 = vmatmul.bf16.gmra.mxu0 %v2376
      %v2393 = vpop.f32.mrf.mxu0
      %v2394 = vadd.f32 %v1165, %v2393
      %v2395 = vpop.f32.mrf.mxu0
      %v2396 = vadd.f32 %v1165, %v2395
      %2397 = vmatmul.bf16.gmra.mxu0 %v2377
      %v2398 = vpop.f32.mrf.mxu0
      %v2399 = vadd.f32 %v1165, %v2398
      %v2400 = vpop.f32.mrf.mxu0
      %v2401 = vadd.f32 %v1165, %v2400
      %2402 = vmatmul.bf16.gmra.mxu0 %v2378
      %v2403 = vpop.f32.mrf.mxu0
      %v2404 = vadd.f32 %v1165, %v2403
      %v2405 = vpop.f32.mrf.mxu0
      %v2406 = vadd.f32 %v1165, %v2405
      %2407 = vmatmul.bf16.gmra.mxu0 %v2379
      %v2408 = vpop.f32.mrf.mxu0
      %v2409 = vadd.f32 %v1165, %v2408
      %v2410 = vpop.f32.mrf.mxu0
      %v2411 = vadd.f32 %v1165, %v2410
      %2412 = vmatmul.bf16.gmra.mxu0 %v2380
      %v2413 = vpop.f32.mrf.mxu0
      %v2414 = vadd.f32 %v1165, %v2413
      %v2415 = vpop.f32.mrf.mxu0
      %v2416 = vadd.f32 %v1165, %v2415
      %2417 = vmatmul.bf16.gmra.mxu0 %v2381
      %v2418 = vpop.f32.mrf.mxu0
      %v2419 = vadd.f32 %v1165, %v2418
      %v2420 = vpop.f32.mrf.mxu0
      %v2421 = vadd.f32 %v1165, %v2420
      %2422 = vmatmul.bf16.gmra.mxu0 %v2382
      %v2423 = vpop.f32.mrf.mxu0
      %v2424 = vadd.f32 %v1165, %v2423
      %v2425 = vpop.f32.mrf.mxu0
      %v2426 = vadd.f32 %v1165, %v2425
      %2427 = vmatmul.bf16.gmra.mxu0 %v2383
      %v2428 = vpop.f32.mrf.mxu0
      %v2429 = vadd.f32 %v1165, %v2428
      %v2430 = vpop.f32.mrf.mxu0
      %v2431 = vadd.f32 %v1165, %v2430
      %2432 = vdwg.mxu0
      %v2433 = vmax.f32 %v2394, 0.0
      %v2434 = vmax.f32 %v2396, 0.0
      %v2435 = vmax.f32 %v2399, 0.0
      %v2436 = vmax.f32 %v2401, 0.0
      %v2437 = vmax.f32 %v2404, 0.0
      %v2438 = vmax.f32 %v2406, 0.0
      %v2439 = vmax.f32 %v2409, 0.0
      %v2440 = vmax.f32 %v2411, 0.0
      %v2441 = vmax.f32 %v2414, 0.0
      %v2442 = vmax.f32 %v2416, 0.0
      %v2443 = vmax.f32 %v2419, 0.0
      %v2444 = vmax.f32 %v2421, 0.0
      %v2445 = vmax.f32 %v2424, 0.0
      %v2446 = vmax.f32 %v2426, 0.0
      %v2447 = vmax.f32 %v2429, 0.0
      %v2448 = vmax.f32 %v2431, 0.0
      %v2449 = vmax.f32 %v2054, %v2433
      %v2450 = vmax.f32 %v2055, %v2434
      %v2451 = vmax.f32 %v2056, %v2435
      %v2452 = vmax.f32 %v2057, %v2436
      %v2453 = vmax.f32 %v2058, %v2437
      %v2454 = vmax.f32 %v2059, %v2438
      %v2455 = vmax.f32 %v2060, %v2439
      %v2456 = vmax.f32 %v2061, %v2440
      %v2457 = vmax.f32 %v2062, %v2441
      %v2458 = vmax.f32 %v2063, %v2442
      %v2459 = vmax.f32 %v2064, %v2443
      %v2460 = vmax.f32 %v2065, %v2444
      %v2461 = vmax.f32 %v2066, %v2445
      %v2462 = vmax.f32 %v2067, %v2446
      %v2463 = vmax.f32 %v2068, %v2447
      %v2464 = vmax.f32 %v2069, %v2448
      %2465 = vset.pattern.permute.xlu0 4
      %2466 = vperm.xlu0 %2465, %v828
      %v2467 = vpop.permute.xlu0 %2466
      %2468 = vset.pattern.permute.xlu0 4
      %2469 = vperm.xlu0 %2468, %v829
      %v2470 = vpop.permute.xlu0 %2469
      %2471 = vset.pattern.permute.xlu0 4
      %2472 = vperm.xlu0 %2471, %v830
      %v2473 = vpop.permute.xlu0 %2472
      %2474 = vset.pattern.permute.xlu0 4
      %2475 = vperm.xlu0 %2474, %v831
      %v2476 = vpop.permute.xlu0 %2475
      %2477 = vset.pattern.permute.xlu0 4
      %2478 = vperm.xlu0 %2477, %v832
      %v2479 = vpop.permute.xlu0 %2478
      %2480 = vset.pattern.permute.xlu0 4
      %2481 = vperm.xlu0 %2480, %v833
      %v2482 = vpop.permute.xlu0 %2481
      %2483 = vset.pattern.permute.xlu0 4
      %2484 = vperm.xlu0 %2483, %v834
      %v2485 = vpop.permute.xlu0 %2484
      %2486 = vset.pattern.permute.xlu0 4
      %2487 = vperm.xlu0 %2486, %v835
      %v2488 = vpop.permute.xlu0 %2487
      %2489 = vset.pattern.permute.xlu0 4
      %2490 = vperm.xlu0 %2489, %v836
      %v2491 = vpop.permute.xlu0 %2490
      %2492 = vset.pattern.permute.xlu0 4
      %2493 = vperm.xlu0 %2492, %v837
      %v2494 = vpop.permute.xlu0 %2493
      %2495 = vset.pattern.permute.xlu0 4
      %2496 = vperm.xlu0 %2495, %v838
      %v2497 = vpop.permute.xlu0 %2496
      %2498 = vset.pattern.permute.xlu0 4
      %2499 = vperm.xlu0 %2498, %v839
      %v2500 = vpop.permute.xlu0 %2499
      %2501 = vset.pattern.permute.xlu0 4
      %2502 = vperm.xlu0 %2501, %v840
      %v2503 = vpop.permute.xlu0 %2502
      %2504 = vset.pattern.permute.xlu0 4
      %2505 = vperm.xlu0 %2504, %v841
      %v2506 = vpop.permute.xlu0 %2505
      %2507 = vset.pattern.permute.xlu0 4
      %2508 = vperm.xlu0 %2507, %v842
      %v2509 = vpop.permute.xlu0 %2508
      %2510 = vset.pattern.permute.xlu0 4
      %2511 = vperm.xlu0 %2510, %v843
      %v2512 = vpop.permute.xlu0 %2511
      %vm2513 = vcmp.eq.s32.totalorder %v2467, %v845
      %vm2514 = vcmp.eq.s32.totalorder %v2467, %v846
      %vm2515 = vcmp.eq.s32.totalorder %v2470, %v845
      %vm2516 = vcmp.eq.s32.totalorder %v2470, %v846
      %vm2517 = vcmp.eq.s32.totalorder %v2473, %v845
      %vm2518 = vcmp.eq.s32.totalorder %v2473, %v846
      %vm2519 = vcmp.eq.s32.totalorder %v2476, %v845
      %vm2520 = vcmp.eq.s32.totalorder %v2476, %v846
      %vm2521 = vcmp.eq.s32.totalorder %v2479, %v845
      %vm2522 = vcmp.eq.s32.totalorder %v2479, %v846
      %vm2523 = vcmp.eq.s32.totalorder %v2482, %v845
      %vm2524 = vcmp.eq.s32.totalorder %v2482, %v846
      %vm2525 = vcmp.eq.s32.totalorder %v2485, %v845
      %vm2526 = vcmp.eq.s32.totalorder %v2485, %v846
      %vm2527 = vcmp.eq.s32.totalorder %v2488, %v845
      %vm2528 = vcmp.eq.s32.totalorder %v2488, %v846
      %vm2529 = vcmp.eq.s32.totalorder %v2491, %v845
      %vm2530 = vcmp.eq.s32.totalorder %v2491, %v846
      %vm2531 = vcmp.eq.s32.totalorder %v2494, %v845
      %vm2532 = vcmp.eq.s32.totalorder %v2494, %v846
      %vm2533 = vcmp.eq.s32.totalorder %v2497, %v845
      %vm2534 = vcmp.eq.s32.totalorder %v2497, %v846
      %vm2535 = vcmp.eq.s32.totalorder %v2500, %v845
      %vm2536 = vcmp.eq.s32.totalorder %v2500, %v846
      %vm2537 = vcmp.eq.s32.totalorder %v2503, %v845
      %vm2538 = vcmp.eq.s32.totalorder %v2503, %v846
      %vm2539 = vcmp.eq.s32.totalorder %v2506, %v845
      %vm2540 = vcmp.eq.s32.totalorder %v2506, %v846
      %vm2541 = vcmp.eq.s32.totalorder %v2509, %v845
      %vm2542 = vcmp.eq.s32.totalorder %v2509, %v846
      %vm2543 = vcmp.eq.s32.totalorder %v2512, %v845
      %vm2544 = vcmp.eq.s32.totalorder %v2512, %v846
      %v2545 = vsel %vm2513, 1, 0
      %v2546 = vsel %vm2514, 1, 0
      %v2547 = vsel %vm2515, 1, 0
      %v2548 = vsel %vm2516, 1, 0
      %v2549 = vsel %vm2517, 1, 0
      %v2550 = vsel %vm2518, 1, 0
      %v2551 = vsel %vm2519, 1, 0
      %v2552 = vsel %vm2520, 1, 0
      %v2553 = vsel %vm2521, 1, 0
      %v2554 = vsel %vm2522, 1, 0
      %v2555 = vsel %vm2523, 1, 0
      %v2556 = vsel %vm2524, 1, 0
      %v2557 = vsel %vm2525, 1, 0
      %v2558 = vsel %vm2526, 1, 0
      %v2559 = vsel %vm2527, 1, 0
      %v2560 = vsel %vm2528, 1, 0
      %v2561 = vsel %vm2529, 1, 0
      %v2562 = vsel %vm2530, 1, 0
      %v2563 = vsel %vm2531, 1, 0
      %v2564 = vsel %vm2532, 1, 0
      %v2565 = vsel %vm2533, 1, 0
      %v2566 = vsel %vm2534, 1, 0
      %v2567 = vsel %vm2535, 1, 0
      %v2568 = vsel %vm2536, 1, 0
      %v2569 = vsel %vm2537, 1, 0
      %v2570 = vsel %vm2538, 1, 0
      %v2571 = vsel %vm2539, 1, 0
      %v2572 = vsel %vm2540, 1, 0
      %v2573 = vsel %vm2541, 1, 0
      %v2574 = vsel %vm2542, 1, 0
      %v2575 = vsel %vm2543, 1, 0
      %v2576 = vsel %vm2544, 1, 0
      %v2577 = vcvt.s32.f32 %v2545
      %v2578 = vcvt.s32.f32 %v2546
      %v2579 = vcvt.s32.f32 %v2547
      %v2580 = vcvt.s32.f32 %v2548
      %v2581 = vcvt.s32.f32 %v2549
      %v2582 = vcvt.s32.f32 %v2550
      %v2583 = vcvt.s32.f32 %v2551
      %v2584 = vcvt.s32.f32 %v2552
      %v2585 = vcvt.s32.f32 %v2553
      %v2586 = vcvt.s32.f32 %v2554
      %v2587 = vcvt.s32.f32 %v2555
      %v2588 = vcvt.s32.f32 %v2556
      %v2589 = vcvt.s32.f32 %v2557
      %v2590 = vcvt.s32.f32 %v2558
      %v2591 = vcvt.s32.f32 %v2559
      %v2592 = vcvt.s32.f32 %v2560
      %v2593 = vcvt.s32.f32 %v2561
      %v2594 = vcvt.s32.f32 %v2562
      %v2595 = vcvt.s32.f32 %v2563
      %v2596 = vcvt.s32.f32 %v2564
      %v2597 = vcvt.s32.f32 %v2565
      %v2598 = vcvt.s32.f32 %v2566
      %v2599 = vcvt.s32.f32 %v2567
      %v2600 = vcvt.s32.f32 %v2568
      %v2601 = vcvt.s32.f32 %v2569
      %v2602 = vcvt.s32.f32 %v2570
      %v2603 = vcvt.s32.f32 %v2571
      %v2604 = vcvt.s32.f32 %v2572
      %v2605 = vcvt.s32.f32 %v2573
      %v2606 = vcvt.s32.f32 %v2574
      %v2607 = vcvt.s32.f32 %v2575
      %v2608 = vcvt.s32.f32 %v2576
      %2609 = vmatpush.msra.mxu0 %v775
      %2610 = vmatpush.msra.mxu0 %v774
      %2611 = vmatpush.msra.mxu0 %v773
      %2612 = vmatpush.msra.mxu0 %v772
      %2613 = vmatpush.msra.mxu0 %v771
      %2614 = vmatpush.msra.mxu0 %v770
      %2615 = vmatpush.msra.mxu0 %v769
      %2616 = vmatpush.msra.mxu0 %v768
      %2617 = vmatpush.msra.mxu0 %v767
      %2618 = vmatpush.msra.mxu0 %v766
      %2619 = vmatpush.msra.mxu0 %v765
      %2620 = vmatpush.msra.mxu0 %v764
      %2621 = vmatpush.msra.mxu0 %v763
      %2622 = vmatpush.msra.mxu0 %v762
      %2623 = vmatpush.msra.mxu0 %v761
      %2624 = vmatpush.msra.mxu0 %v760
      %2625 = vmatmul.f32.gmra.mxu0 %v2577
      %v2626 = vpop.f32.mrf.mxu0
      %v2627 = vadd.f32 %v794, %v2626
      %2628 = vmatmul.f32.gmra.mxu0 %v2579
      %v2629 = vpop.f32.mrf.mxu0
      %v2630 = vadd.f32 %v795, %v2629
      %2631 = vmatmul.f32.gmra.mxu0 %v2581
      %v2632 = vpop.f32.mrf.mxu0
      %v2633 = vadd.f32 %v796, %v2632
      %2634 = vmatmul.f32.gmra.mxu0 %v2583
      %v2635 = vpop.f32.mrf.mxu0
      %v2636 = vadd.f32 %v797, %v2635
      %2637 = vmatmul.f32.gmra.mxu0 %v2585
      %v2638 = vpop.f32.mrf.mxu0
      %v2639 = vadd.f32 %v798, %v2638
      %2640 = vmatmul.f32.gmra.mxu0 %v2587
      %v2641 = vpop.f32.mrf.mxu0
      %v2642 = vadd.f32 %v799, %v2641
      %2643 = vmatmul.f32.gmra.mxu0 %v2589
      %v2644 = vpop.f32.mrf.mxu0
      %v2645 = vadd.f32 %v800, %v2644
      %2646 = vmatmul.f32.gmra.mxu0 %v2591
      %v2647 = vpop.f32.mrf.mxu0
      %v2648 = vadd.f32 %v801, %v2647
      %2649 = vmatmul.f32.gmra.mxu0 %v2593
      %v2650 = vpop.f32.mrf.mxu0
      %v2651 = vadd.f32 %v802, %v2650
      %2652 = vmatmul.f32.gmra.mxu0 %v2595
      %v2653 = vpop.f32.mrf.mxu0
      %v2654 = vadd.f32 %v803, %v2653
      %2655 = vmatmul.f32.gmra.mxu0 %v2597
      %v2656 = vpop.f32.mrf.mxu0
      %v2657 = vadd.f32 %v804, %v2656
      %2658 = vmatmul.f32.gmra.mxu0 %v2599
      %v2659 = vpop.f32.mrf.mxu0
      %v2660 = vadd.f32 %v805, %v2659
      %2661 = vmatmul.f32.gmra.mxu0 %v2601
      %v2662 = vpop.f32.mrf.mxu0
      %v2663 = vadd.f32 %v806, %v2662
      %2664 = vmatmul.f32.gmra.mxu0 %v2603
      %v2665 = vpop.f32.mrf.mxu0
      %v2666 = vadd.f32 %v807, %v2665
      %2667 = vmatmul.f32.gmra.mxu0 %v2605
      %v2668 = vpop.f32.mrf.mxu0
      %v2669 = vadd.f32 %v808, %v2668
      %2670 = vmatmul.f32.gmra.mxu0 %v2607
      %v2671 = vpop.f32.mrf.mxu0
      %v2672 = vadd.f32 %v809, %v2671
      %2673 = vdwg.mxu0
      %2674 = vmatpush.msra.mxu0 %v791
      %2675 = vmatpush.msra.mxu0 %v790
      %2676 = vmatpush.msra.mxu0 %v789
      %2677 = vmatpush.msra.mxu0 %v788
      %2678 = vmatpush.msra.mxu0 %v787
      %2679 = vmatpush.msra.mxu0 %v786
      %2680 = vmatpush.msra.mxu0 %v785
      %2681 = vmatpush.msra.mxu0 %v784
      %2682 = vmatpush.msra.mxu0 %v783
      %2683 = vmatpush.msra.mxu0 %v782
      %2684 = vmatpush.msra.mxu0 %v781
      %2685 = vmatpush.msra.mxu0 %v780
      %2686 = vmatpush.msra.mxu0 %v779
      %2687 = vmatpush.msra.mxu0 %v778
      %2688 = vmatpush.msra.mxu0 %v777
      %2689 = vmatpush.msra.mxu0 %v776
      %2690 = vmatmul.f32.gmra.mxu0 %v2578
      %v2691 = vpop.f32.mrf.mxu0
      %v2692 = vadd.f32 %v2627, %v2691
      %2693 = vmatmul.f32.gmra.mxu0 %v2580
      %v2694 = vpop.f32.mrf.mxu0
      %v2695 = vadd.f32 %v2630, %v2694
      %2696 = vmatmul.f32.gmra.mxu0 %v2582
      %v2697 = vpop.f32.mrf.mxu0
      %v2698 = vadd.f32 %v2633, %v2697
      %2699 = vmatmul.f32.gmra.mxu0 %v2584
      %v2700 = vpop.f32.mrf.mxu0
      %v2701 = vadd.f32 %v2636, %v2700
      %2702 = vmatmul.f32.gmra.mxu0 %v2586
      %v2703 = vpop.f32.mrf.mxu0
      %v2704 = vadd.f32 %v2639, %v2703
      %2705 = vmatmul.f32.gmra.mxu0 %v2588
      %v2706 = vpop.f32.mrf.mxu0
      %v2707 = vadd.f32 %v2642, %v2706
      %2708 = vmatmul.f32.gmra.mxu0 %v2590
      %v2709 = vpop.f32.mrf.mxu0
      %v2710 = vadd.f32 %v2645, %v2709
      %2711 = vmatmul.f32.gmra.mxu0 %v2592
      %v2712 = vpop.f32.mrf.mxu0
      %v2713 = vadd.f32 %v2648, %v2712
      %2714 = vmatmul.f32.gmra.mxu0 %v2594
      %v2715 = vpop.f32.mrf.mxu0
      %v2716 = vadd.f32 %v2651, %v2715
      %2717 = vmatmul.f32.gmra.mxu0 %v2596
      %v2718 = vpop.f32.mrf.mxu0
      %v2719 = vadd.f32 %v2654, %v2718
      %2720 = vmatmul.f32.gmra.mxu0 %v2598
      %v2721 = vpop.f32.mrf.mxu0
      %v2722 = vadd.f32 %v2657, %v2721
      %2723 = vmatmul.f32.gmra.mxu0 %v2600
      %v2724 = vpop.f32.mrf.mxu0
      %v2725 = vadd.f32 %v2660, %v2724
      %2726 = vmatmul.f32.gmra.mxu0 %v2602
      %v2727 = vpop.f32.mrf.mxu0
      %v2728 = vadd.f32 %v2663, %v2727
      %2729 = vmatmul.f32.gmra.mxu0 %v2604
      %v2730 = vpop.f32.mrf.mxu0
      %v2731 = vadd.f32 %v2666, %v2730
      %2732 = vmatmul.f32.gmra.mxu0 %v2606
      %v2733 = vpop.f32.mrf.mxu0
      %v2734 = vadd.f32 %v2669, %v2733
      %2735 = vmatmul.f32.gmra.mxu0 %v2608
      %v2736 = vpop.f32.mrf.mxu0
      %v2737 = vadd.f32 %v2672, %v2736
      %2738 = vdwg.mxu0
      %v2739 = vadd.f32 %v2692, %v1122
      %v2740 = vadd.f32 %v2695, %v1122
      %v2741 = vadd.f32 %v2698, %v1122
      %v2742 = vadd.f32 %v2701, %v1122
      %v2743 = vadd.f32 %v2704, %v1122
      %v2744 = vadd.f32 %v2707, %v1122
      %v2745 = vadd.f32 %v2710, %v1122
      %v2746 = vadd.f32 %v2713, %v1122
      %v2747 = vadd.f32 %v2716, %v1122
      %v2748 = vadd.f32 %v2719, %v1122
      %v2749 = vadd.f32 %v2722, %v1122
      %v2750 = vadd.f32 %v2725, %v1122
      %v2751 = vadd.f32 %v2728, %v1122
      %v2752 = vadd.f32 %v2731, %v1122
      %v2753 = vadd.f32 %v2734, %v1122
      %v2754 = vadd.f32 %v2737, %v1122
      %v2755 = vmax.f32 %v2739, 0.0
      %v2756 = vmax.f32 %v2740, 0.0
      %v2757 = vmax.f32 %v2741, 0.0
      %v2758 = vmax.f32 %v2742, 0.0
      %v2759 = vmax.f32 %v2743, 0.0
      %v2760 = vmax.f32 %v2744, 0.0
      %v2761 = vmax.f32 %v2745, 0.0
      %v2762 = vmax.f32 %v2746, 0.0
      %v2763 = vmax.f32 %v2747, 0.0
      %v2764 = vmax.f32 %v2748, 0.0
      %v2765 = vmax.f32 %v2749, 0.0
      %v2766 = vmax.f32 %v2750, 0.0
      %v2767 = vmax.f32 %v2751, 0.0
      %v2768 = vmax.f32 %v2752, 0.0
      %v2769 = vmax.f32 %v2753, 0.0
      %v2770 = vmax.f32 %v2754, 0.0
      %v2771 = vpack.c.bf16 %v2756, %v2755
      %v2772 = vpack.c.bf16 %v2758, %v2757
      %v2773 = vpack.c.bf16 %v2760, %v2759
      %v2774 = vpack.c.bf16 %v2762, %v2761
      %v2775 = vpack.c.bf16 %v2764, %v2763
      %v2776 = vpack.c.bf16 %v2766, %v2765
      %v2777 = vpack.c.bf16 %v2768, %v2767
      %v2778 = vpack.c.bf16 %v2770, %v2769
      %2779 = vmatpush.bf16.msra.mxu0 %v1206
      %2780 = vmatpush.bf16.msra.mxu0 %v1205
      %2781 = vmatpush.bf16.msra.mxu0 %v1204
      %2782 = vmatpush.bf16.msra.mxu0 %v1203
      %2783 = vmatpush.bf16.msra.mxu0 %v1202
      %2784 = vmatpush.bf16.msra.mxu0 %v1201
      %2785 = vmatpush.bf16.msra.mxu0 %v1200
      %2786 = vmatpush.bf16.msra.mxu0 %v1199
      %2787 = vmatmul.bf16.gmra.mxu0 %v2771
      %v2788 = vpop.f32.mrf.mxu0
      %v2789 = vadd.f32 %v1165, %v2788
      %v2790 = vpop.f32.mrf.mxu0
      %v2791 = vadd.f32 %v1165, %v2790
      %2792 = vmatmul.bf16.gmra.mxu0 %v2772
      %v2793 = vpop.f32.mrf.mxu0
      %v2794 = vadd.f32 %v1165, %v2793
      %v2795 = vpop.f32.mrf.mxu0
      %v2796 = vadd.f32 %v1165, %v2795
      %2797 = vmatmul.bf16.gmra.mxu0 %v2773
      %v2798 = vpop.f32.mrf.mxu0
      %v2799 = vadd.f32 %v1165, %v2798
      %v2800 = vpop.f32.mrf.mxu0
      %v2801 = vadd.f32 %v1165, %v2800
      %2802 = vmatmul.bf16.gmra.mxu0 %v2774
      %v2803 = vpop.f32.mrf.mxu0
      %v2804 = vadd.f32 %v1165, %v2803
      %v2805 = vpop.f32.mrf.mxu0
      %v2806 = vadd.f32 %v1165, %v2805
      %2807 = vmatmul.bf16.gmra.mxu0 %v2775
      %v2808 = vpop.f32.mrf.mxu0
      %v2809 = vadd.f32 %v1165, %v2808
      %v2810 = vpop.f32.mrf.mxu0
      %v2811 = vadd.f32 %v1165, %v2810
      %2812 = vmatmul.bf16.gmra.mxu0 %v2776
      %v2813 = vpop.f32.mrf.mxu0
      %v2814 = vadd.f32 %v1165, %v2813
      %v2815 = vpop.f32.mrf.mxu0
      %v2816 = vadd.f32 %v1165, %v2815
      %2817 = vmatmul.bf16.gmra.mxu0 %v2777
      %v2818 = vpop.f32.mrf.mxu0
      %v2819 = vadd.f32 %v1165, %v2818
      %v2820 = vpop.f32.mrf.mxu0
      %v2821 = vadd.f32 %v1165, %v2820
      %2822 = vmatmul.bf16.gmra.mxu0 %v2778
      %v2823 = vpop.f32.mrf.mxu0
      %v2824 = vadd.f32 %v1165, %v2823
      %v2825 = vpop.f32.mrf.mxu0
      %v2826 = vadd.f32 %v1165, %v2825
      %2827 = vdwg.mxu0
      %v2828 = vmax.f32 %v2789, 0.0
      %v2829 = vmax.f32 %v2791, 0.0
      %v2830 = vmax.f32 %v2794, 0.0
      %v2831 = vmax.f32 %v2796, 0.0
      %v2832 = vmax.f32 %v2799, 0.0
      %v2833 = vmax.f32 %v2801, 0.0
      %v2834 = vmax.f32 %v2804, 0.0
      %v2835 = vmax.f32 %v2806, 0.0
      %v2836 = vmax.f32 %v2809, 0.0
      %v2837 = vmax.f32 %v2811, 0.0
      %v2838 = vmax.f32 %v2814, 0.0
      %v2839 = vmax.f32 %v2816, 0.0
      %v2840 = vmax.f32 %v2819, 0.0
      %v2841 = vmax.f32 %v2821, 0.0
      %v2842 = vmax.f32 %v2824, 0.0
      %v2843 = vmax.f32 %v2826, 0.0
      %v2844 = vmax.f32 %v2449, %v2828
      %v2845 = vmax.f32 %v2450, %v2829
      %v2846 = vmax.f32 %v2451, %v2830
      %v2847 = vmax.f32 %v2452, %v2831
      %v2848 = vmax.f32 %v2453, %v2832
      %v2849 = vmax.f32 %v2454, %v2833
      %v2850 = vmax.f32 %v2455, %v2834
      %v2851 = vmax.f32 %v2456, %v2835
      %v2852 = vmax.f32 %v2457, %v2836
      %v2853 = vmax.f32 %v2458, %v2837
      %v2854 = vmax.f32 %v2459, %v2838
      %v2855 = vmax.f32 %v2460, %v2839
      %v2856 = vmax.f32 %v2461, %v2840
      %v2857 = vmax.f32 %v2462, %v2841
      %v2858 = vmax.f32 %v2463, %v2842
      %v2859 = vmax.f32 %v2464, %v2843
      %2860 = vset.pattern.permute.xlu0 5
      %2861 = vperm.xlu0 %2860, %v828
      %v2862 = vpop.permute.xlu0 %2861
      %2863 = vset.pattern.permute.xlu0 5
      %2864 = vperm.xlu0 %2863, %v829
      %v2865 = vpop.permute.xlu0 %2864
      %2866 = vset.pattern.permute.xlu0 5
      %2867 = vperm.xlu0 %2866, %v830
      %v2868 = vpop.permute.xlu0 %2867
      %2869 = vset.pattern.permute.xlu0 5
      %2870 = vperm.xlu0 %2869, %v831
      %v2871 = vpop.permute.xlu0 %2870
      %2872 = vset.pattern.permute.xlu0 5
      %2873 = vperm.xlu0 %2872, %v832
      %v2874 = vpop.permute.xlu0 %2873
      %2875 = vset.pattern.permute.xlu0 5
      %2876 = vperm.xlu0 %2875, %v833
      %v2877 = vpop.permute.xlu0 %2876
      %2878 = vset.pattern.permute.xlu0 5
      %2879 = vperm.xlu0 %2878, %v834
      %v2880 = vpop.permute.xlu0 %2879
      %2881 = vset.pattern.permute.xlu0 5
      %2882 = vperm.xlu0 %2881, %v835
      %v2883 = vpop.permute.xlu0 %2882
      %2884 = vset.pattern.permute.xlu0 5
      %2885 = vperm.xlu0 %2884, %v836
      %v2886 = vpop.permute.xlu0 %2885
      %2887 = vset.pattern.permute.xlu0 5
      %2888 = vperm.xlu0 %2887, %v837
      %v2889 = vpop.permute.xlu0 %2888
      %2890 = vset.pattern.permute.xlu0 5
      %2891 = vperm.xlu0 %2890, %v838
      %v2892 = vpop.permute.xlu0 %2891
      %2893 = vset.pattern.permute.xlu0 5
      %2894 = vperm.xlu0 %2893, %v839
      %v2895 = vpop.permute.xlu0 %2894
      %2896 = vset.pattern.permute.xlu0 5
      %2897 = vperm.xlu0 %2896, %v840
      %v2898 = vpop.permute.xlu0 %2897
      %2899 = vset.pattern.permute.xlu0 5
      %2900 = vperm.xlu0 %2899, %v841
      %v2901 = vpop.permute.xlu0 %2900
      %2902 = vset.pattern.permute.xlu0 5
      %2903 = vperm.xlu0 %2902, %v842
      %v2904 = vpop.permute.xlu0 %2903
      %2905 = vset.pattern.permute.xlu0 5
      %2906 = vperm.xlu0 %2905, %v843
      %v2907 = vpop.permute.xlu0 %2906
      %vm2908 = vcmp.eq.s32.totalorder %v2862, %v845
      %vm2909 = vcmp.eq.s32.totalorder %v2862, %v846
      %vm2910 = vcmp.eq.s32.totalorder %v2865, %v845
      %vm2911 = vcmp.eq.s32.totalorder %v2865, %v846
      %vm2912 = vcmp.eq.s32.totalorder %v2868, %v845
      %vm2913 = vcmp.eq.s32.totalorder %v2868, %v846
      %vm2914 = vcmp.eq.s32.totalorder %v2871, %v845
      %vm2915 = vcmp.eq.s32.totalorder %v2871, %v846
      %vm2916 = vcmp.eq.s32.totalorder %v2874, %v845
      %vm2917 = vcmp.eq.s32.totalorder %v2874, %v846
      %vm2918 = vcmp.eq.s32.totalorder %v2877, %v845
      %vm2919 = vcmp.eq.s32.totalorder %v2877, %v846
      %vm2920 = vcmp.eq.s32.totalorder %v2880, %v845
      %vm2921 = vcmp.eq.s32.totalorder %v2880, %v846
      %vm2922 = vcmp.eq.s32.totalorder %v2883, %v845
      %vm2923 = vcmp.eq.s32.totalorder %v2883, %v846
      %vm2924 = vcmp.eq.s32.totalorder %v2886, %v845
      %vm2925 = vcmp.eq.s32.totalorder %v2886, %v846
      %vm2926 = vcmp.eq.s32.totalorder %v2889, %v845
      %vm2927 = vcmp.eq.s32.totalorder %v2889, %v846
      %vm2928 = vcmp.eq.s32.totalorder %v2892, %v845
      %vm2929 = vcmp.eq.s32.totalorder %v2892, %v846
      %vm2930 = vcmp.eq.s32.totalorder %v2895, %v845
      %vm2931 = vcmp.eq.s32.totalorder %v2895, %v846
      %vm2932 = vcmp.eq.s32.totalorder %v2898, %v845
      %vm2933 = vcmp.eq.s32.totalorder %v2898, %v846
      %vm2934 = vcmp.eq.s32.totalorder %v2901, %v845
      %vm2935 = vcmp.eq.s32.totalorder %v2901, %v846
      %vm2936 = vcmp.eq.s32.totalorder %v2904, %v845
      %vm2937 = vcmp.eq.s32.totalorder %v2904, %v846
      %vm2938 = vcmp.eq.s32.totalorder %v2907, %v845
      %vm2939 = vcmp.eq.s32.totalorder %v2907, %v846
      %v2940 = vsel %vm2908, 1, 0
      %v2941 = vsel %vm2909, 1, 0
      %v2942 = vsel %vm2910, 1, 0
      %v2943 = vsel %vm2911, 1, 0
      %v2944 = vsel %vm2912, 1, 0
      %v2945 = vsel %vm2913, 1, 0
      %v2946 = vsel %vm2914, 1, 0
      %v2947 = vsel %vm2915, 1, 0
      %v2948 = vsel %vm2916, 1, 0
      %v2949 = vsel %vm2917, 1, 0
      %v2950 = vsel %vm2918, 1, 0
      %v2951 = vsel %vm2919, 1, 0
      %v2952 = vsel %vm2920, 1, 0
      %v2953 = vsel %vm2921, 1, 0
      %v2954 = vsel %vm2922, 1, 0
      %v2955 = vsel %vm2923, 1, 0
      %v2956 = vsel %vm2924, 1, 0
      %v2957 = vsel %vm2925, 1, 0
      %v2958 = vsel %vm2926, 1, 0
      %v2959 = vsel %vm2927, 1, 0
      %v2960 = vsel %vm2928, 1, 0
      %v2961 = vsel %vm2929, 1, 0
      %v2962 = vsel %vm2930, 1, 0
      %v2963 = vsel %vm2931, 1, 0
      %v2964 = vsel %vm2932, 1, 0
      %v2965 = vsel %vm2933, 1, 0
      %v2966 = vsel %vm2934, 1, 0
      %v2967 = vsel %vm2935, 1, 0
      %v2968 = vsel %vm2936, 1, 0
      %v2969 = vsel %vm2937, 1, 0
      %v2970 = vsel %vm2938, 1, 0
      %v2971 = vsel %vm2939, 1, 0
      %v2972 = vcvt.s32.f32 %v2940
      %v2973 = vcvt.s32.f32 %v2941
      %v2974 = vcvt.s32.f32 %v2942
      %v2975 = vcvt.s32.f32 %v2943
      %v2976 = vcvt.s32.f32 %v2944
      %v2977 = vcvt.s32.f32 %v2945
      %v2978 = vcvt.s32.f32 %v2946
      %v2979 = vcvt.s32.f32 %v2947
      %v2980 = vcvt.s32.f32 %v2948
      %v2981 = vcvt.s32.f32 %v2949
      %v2982 = vcvt.s32.f32 %v2950
      %v2983 = vcvt.s32.f32 %v2951
      %v2984 = vcvt.s32.f32 %v2952
      %v2985 = vcvt.s32.f32 %v2953
      %v2986 = vcvt.s32.f32 %v2954
      %v2987 = vcvt.s32.f32 %v2955
      %v2988 = vcvt.s32.f32 %v2956
      %v2989 = vcvt.s32.f32 %v2957
      %v2990 = vcvt.s32.f32 %v2958
      %v2991 = vcvt.s32.f32 %v2959
      %v2992 = vcvt.s32.f32 %v2960
      %v2993 = vcvt.s32.f32 %v2961
      %v2994 = vcvt.s32.f32 %v2962
      %v2995 = vcvt.s32.f32 %v2963
      %v2996 = vcvt.s32.f32 %v2964
      %v2997 = vcvt.s32.f32 %v2965
      %v2998 = vcvt.s32.f32 %v2966
      %v2999 = vcvt.s32.f32 %v2967
      %v3000 = vcvt.s32.f32 %v2968
      %v3001 = vcvt.s32.f32 %v2969
      %v3002 = vcvt.s32.f32 %v2970
      %v3003 = vcvt.s32.f32 %v2971
      %3004 = vmatpush.msra.mxu0 %v775
      %3005 = vmatpush.msra.mxu0 %v774
      %3006 = vmatpush.msra.mxu0 %v773
      %3007 = vmatpush.msra.mxu0 %v772
      %3008 = vmatpush.msra.mxu0 %v771
      %3009 = vmatpush.msra.mxu0 %v770
      %3010 = vmatpush.msra.mxu0 %v769
      %3011 = vmatpush.msra.mxu0 %v768
      %3012 = vmatpush.msra.mxu0 %v767
      %3013 = vmatpush.msra.mxu0 %v766
      %3014 = vmatpush.msra.mxu0 %v765
      %3015 = vmatpush.msra.mxu0 %v764
      %3016 = vmatpush.msra.mxu0 %v763
      %3017 = vmatpush.msra.mxu0 %v762
      %3018 = vmatpush.msra.mxu0 %v761
      %3019 = vmatpush.msra.mxu0 %v760
      %3020 = vmatmul.f32.gmra.mxu0 %v2972
      %v3021 = vpop.f32.mrf.mxu0
      %v3022 = vadd.f32 %v794, %v3021
      %3023 = vmatmul.f32.gmra.mxu0 %v2974
      %v3024 = vpop.f32.mrf.mxu0
      %v3025 = vadd.f32 %v795, %v3024
      %3026 = vmatmul.f32.gmra.mxu0 %v2976
      %v3027 = vpop.f32.mrf.mxu0
      %v3028 = vadd.f32 %v796, %v3027
      %3029 = vmatmul.f32.gmra.mxu0 %v2978
      %v3030 = vpop.f32.mrf.mxu0
      %v3031 = vadd.f32 %v797, %v3030
      %3032 = vmatmul.f32.gmra.mxu0 %v2980
      %v3033 = vpop.f32.mrf.mxu0
      %v3034 = vadd.f32 %v798, %v3033
      %3035 = vmatmul.f32.gmra.mxu0 %v2982
      %v3036 = vpop.f32.mrf.mxu0
      %v3037 = vadd.f32 %v799, %v3036
      %3038 = vmatmul.f32.gmra.mxu0 %v2984
      %v3039 = vpop.f32.mrf.mxu0
      %v3040 = vadd.f32 %v800, %v3039
      %3041 = vmatmul.f32.gmra.mxu0 %v2986
      %v3042 = vpop.f32.mrf.mxu0
      %v3043 = vadd.f32 %v801, %v3042
      %3044 = vmatmul.f32.gmra.mxu0 %v2988
      %v3045 = vpop.f32.mrf.mxu0
      %v3046 = vadd.f32 %v802, %v3045
      %3047 = vmatmul.f32.gmra.mxu0 %v2990
      %v3048 = vpop.f32.mrf.mxu0
      %v3049 = vadd.f32 %v803, %v3048
      %3050 = vmatmul.f32.gmra.mxu0 %v2992
      %v3051 = vpop.f32.mrf.mxu0
      %v3052 = vadd.f32 %v804, %v3051
      %3053 = vmatmul.f32.gmra.mxu0 %v2994
      %v3054 = vpop.f32.mrf.mxu0
      %v3055 = vadd.f32 %v805, %v3054
      %3056 = vmatmul.f32.gmra.mxu0 %v2996
      %v3057 = vpop.f32.mrf.mxu0
      %v3058 = vadd.f32 %v806, %v3057
      %3059 = vmatmul.f32.gmra.mxu0 %v2998
      %v3060 = vpop.f32.mrf.mxu0
      %v3061 = vadd.f32 %v807, %v3060
      %3062 = vmatmul.f32.gmra.mxu0 %v3000
      %v3063 = vpop.f32.mrf.mxu0
      %v3064 = vadd.f32 %v808, %v3063
      %3065 = vmatmul.f32.gmra.mxu0 %v3002
      %v3066 = vpop.f32.mrf.mxu0
      %v3067 = vadd.f32 %v809, %v3066
      %3068 = vdwg.mxu0
      %3069 = vmatpush.msra.mxu0 %v791
      %3070 = vmatpush.msra.mxu0 %v790
      %3071 = vmatpush.msra.mxu0 %v789
      %3072 = vmatpush.msra.mxu0 %v788
      %3073 = vmatpush.msra.mxu0 %v787
      %3074 = vmatpush.msra.mxu0 %v786
      %3075 = vmatpush.msra.mxu0 %v785
      %3076 = vmatpush.msra.mxu0 %v784
      %3077 = vmatpush.msra.mxu0 %v783
      %3078 = vmatpush.msra.mxu0 %v782
      %3079 = vmatpush.msra.mxu0 %v781
      %3080 = vmatpush.msra.mxu0 %v780
      %3081 = vmatpush.msra.mxu0 %v779
      %3082 = vmatpush.msra.mxu0 %v778
      %3083 = vmatpush.msra.mxu0 %v777
      %3084 = vmatpush.msra.mxu0 %v776
      %3085 = vmatmul.f32.gmra.mxu0 %v2973
      %v3086 = vpop.f32.mrf.mxu0
      %v3087 = vadd.f32 %v3022, %v3086
      %3088 = vmatmul.f32.gmra.mxu0 %v2975
      %v3089 = vpop.f32.mrf.mxu0
      %v3090 = vadd.f32 %v3025, %v3089
      %3091 = vmatmul.f32.gmra.mxu0 %v2977
      %v3092 = vpop.f32.mrf.mxu0
      %v3093 = vadd.f32 %v3028, %v3092
      %3094 = vmatmul.f32.gmra.mxu0 %v2979
      %v3095 = vpop.f32.mrf.mxu0
      %v3096 = vadd.f32 %v3031, %v3095
      %3097 = vmatmul.f32.gmra.mxu0 %v2981
      %v3098 = vpop.f32.mrf.mxu0
      %v3099 = vadd.f32 %v3034, %v3098
      %3100 = vmatmul.f32.gmra.mxu0 %v2983
      %v3101 = vpop.f32.mrf.mxu0
      %v3102 = vadd.f32 %v3037, %v3101
      %3103 = vmatmul.f32.gmra.mxu0 %v2985
      %v3104 = vpop.f32.mrf.mxu0
      %v3105 = vadd.f32 %v3040, %v3104
      %3106 = vmatmul.f32.gmra.mxu0 %v2987
      %v3107 = vpop.f32.mrf.mxu0
      %v3108 = vadd.f32 %v3043, %v3107
      %3109 = vmatmul.f32.gmra.mxu0 %v2989
      %v3110 = vpop.f32.mrf.mxu0
      %v3111 = vadd.f32 %v3046, %v3110
      %3112 = vmatmul.f32.gmra.mxu0 %v2991
      %v3113 = vpop.f32.mrf.mxu0
      %v3114 = vadd.f32 %v3049, %v3113
      %3115 = vmatmul.f32.gmra.mxu0 %v2993
      %v3116 = vpop.f32.mrf.mxu0
      %v3117 = vadd.f32 %v3052, %v3116
      %3118 = vmatmul.f32.gmra.mxu0 %v2995
      %v3119 = vpop.f32.mrf.mxu0
      %v3120 = vadd.f32 %v3055, %v3119
      %3121 = vmatmul.f32.gmra.mxu0 %v2997
      %v3122 = vpop.f32.mrf.mxu0
      %v3123 = vadd.f32 %v3058, %v3122
      %3124 = vmatmul.f32.gmra.mxu0 %v2999
      %v3125 = vpop.f32.mrf.mxu0
      %v3126 = vadd.f32 %v3061, %v3125
      %3127 = vmatmul.f32.gmra.mxu0 %v3001
      %v3128 = vpop.f32.mrf.mxu0
      %v3129 = vadd.f32 %v3064, %v3128
      %3130 = vmatmul.f32.gmra.mxu0 %v3003
      %v3131 = vpop.f32.mrf.mxu0
      %v3132 = vadd.f32 %v3067, %v3131
      %3133 = vdwg.mxu0
      %v3134 = vadd.f32 %v3087, %v1122
      %v3135 = vadd.f32 %v3090, %v1122
      %v3136 = vadd.f32 %v3093, %v1122
      %v3137 = vadd.f32 %v3096, %v1122
      %v3138 = vadd.f32 %v3099, %v1122
      %v3139 = vadd.f32 %v3102, %v1122
      %v3140 = vadd.f32 %v3105, %v1122
      %v3141 = vadd.f32 %v3108, %v1122
      %v3142 = vadd.f32 %v3111, %v1122
      %v3143 = vadd.f32 %v3114, %v1122
      %v3144 = vadd.f32 %v3117, %v1122
      %v3145 = vadd.f32 %v3120, %v1122
      %v3146 = vadd.f32 %v3123, %v1122
      %v3147 = vadd.f32 %v3126, %v1122
      %v3148 = vadd.f32 %v3129, %v1122
      %v3149 = vadd.f32 %v3132, %v1122
      %v3150 = vmax.f32 %v3134, 0.0
      %v3151 = vmax.f32 %v3135, 0.0
      %v3152 = vmax.f32 %v3136, 0.0
      %v3153 = vmax.f32 %v3137, 0.0
      %v3154 = vmax.f32 %v3138, 0.0
      %v3155 = vmax.f32 %v3139, 0.0
      %v3156 = vmax.f32 %v3140, 0.0
      %v3157 = vmax.f32 %v3141, 0.0
      %v3158 = vmax.f32 %v3142, 0.0
      %v3159 = vmax.f32 %v3143, 0.0
      %v3160 = vmax.f32 %v3144, 0.0
      %v3161 = vmax.f32 %v3145, 0.0
      %v3162 = vmax.f32 %v3146, 0.0
      %v3163 = vmax.f32 %v3147, 0.0
      %v3164 = vmax.f32 %v3148, 0.0
      %v3165 = vmax.f32 %v3149, 0.0
      %v3166 = vpack.c.bf16 %v3151, %v3150
      %v3167 = vpack.c.bf16 %v3153, %v3152
      %v3168 = vpack.c.bf16 %v3155, %v3154
      %v3169 = vpack.c.bf16 %v3157, %v3156
      %v3170 = vpack.c.bf16 %v3159, %v3158
      %v3171 = vpack.c.bf16 %v3161, %v3160
      %v3172 = vpack.c.bf16 %v3163, %v3162
      %v3173 = vpack.c.bf16 %v3165, %v3164
      %3174 = vmatpush.bf16.msra.mxu0 %v1206
      %3175 = vmatpush.bf16.msra.mxu0 %v1205
      %3176 = vmatpush.bf16.msra.mxu0 %v1204
      %3177 = vmatpush.bf16.msra.mxu0 %v1203
      %3178 = vmatpush.bf16.msra.mxu0 %v1202
      %3179 = vmatpush.bf16.msra.mxu0 %v1201
      %3180 = vmatpush.bf16.msra.mxu0 %v1200
      %3181 = vmatpush.bf16.msra.mxu0 %v1199
      %3182 = vmatmul.bf16.gmra.mxu0 %v3166
      %v3183 = vpop.f32.mrf.mxu0
      %v3184 = vadd.f32 %v1165, %v3183
      %v3185 = vpop.f32.mrf.mxu0
      %v3186 = vadd.f32 %v1165, %v3185
      %3187 = vmatmul.bf16.gmra.mxu0 %v3167
      %v3188 = vpop.f32.mrf.mxu0
      %v3189 = vadd.f32 %v1165, %v3188
      %v3190 = vpop.f32.mrf.mxu0
      %v3191 = vadd.f32 %v1165, %v3190
      %3192 = vmatmul.bf16.gmra.mxu0 %v3168
      %v3193 = vpop.f32.mrf.mxu0
      %v3194 = vadd.f32 %v1165, %v3193
      %v3195 = vpop.f32.mrf.mxu0
      %v3196 = vadd.f32 %v1165, %v3195
      %3197 = vmatmul.bf16.gmra.mxu0 %v3169
      %v3198 = vpop.f32.mrf.mxu0
      %v3199 = vadd.f32 %v1165, %v3198
      %v3200 = vpop.f32.mrf.mxu0
      %v3201 = vadd.f32 %v1165, %v3200
      %3202 = vmatmul.bf16.gmra.mxu0 %v3170
      %v3203 = vpop.f32.mrf.mxu0
      %v3204 = vadd.f32 %v1165, %v3203
      %v3205 = vpop.f32.mrf.mxu0
      %v3206 = vadd.f32 %v1165, %v3205
      %3207 = vmatmul.bf16.gmra.mxu0 %v3171
      %v3208 = vpop.f32.mrf.mxu0
      %v3209 = vadd.f32 %v1165, %v3208
      %v3210 = vpop.f32.mrf.mxu0
      %v3211 = vadd.f32 %v1165, %v3210
      %3212 = vmatmul.bf16.gmra.mxu0 %v3172
      %v3213 = vpop.f32.mrf.mxu0
      %v3214 = vadd.f32 %v1165, %v3213
      %v3215 = vpop.f32.mrf.mxu0
      %v3216 = vadd.f32 %v1165, %v3215
      %3217 = vmatmul.bf16.gmra.mxu0 %v3173
      %v3218 = vpop.f32.mrf.mxu0
      %v3219 = vadd.f32 %v1165, %v3218
      %v3220 = vpop.f32.mrf.mxu0
      %v3221 = vadd.f32 %v1165, %v3220
      %3222 = vdwg.mxu0
      %v3223 = vmax.f32 %v3184, 0.0
      %v3224 = vmax.f32 %v3186, 0.0
      %v3225 = vmax.f32 %v3189, 0.0
      %v3226 = vmax.f32 %v3191, 0.0
      %v3227 = vmax.f32 %v3194, 0.0
      %v3228 = vmax.f32 %v3196, 0.0
      %v3229 = vmax.f32 %v3199, 0.0
      %v3230 = vmax.f32 %v3201, 0.0
      %v3231 = vmax.f32 %v3204, 0.0
      %v3232 = vmax.f32 %v3206, 0.0
      %v3233 = vmax.f32 %v3209, 0.0
      %v3234 = vmax.f32 %v3211, 0.0
      %v3235 = vmax.f32 %v3214, 0.0
      %v3236 = vmax.f32 %v3216, 0.0
      %v3237 = vmax.f32 %v3219, 0.0
      %v3238 = vmax.f32 %v3221, 0.0
      %v3239 = vmax.f32 %v2844, %v3223
      %v3240 = vmax.f32 %v2845, %v3224
      %v3241 = vmax.f32 %v2846, %v3225
      %v3242 = vmax.f32 %v2847, %v3226
      %v3243 = vmax.f32 %v2848, %v3227
      %v3244 = vmax.f32 %v2849, %v3228
      %v3245 = vmax.f32 %v2850, %v3229
      %v3246 = vmax.f32 %v2851, %v3230
      %v3247 = vmax.f32 %v2852, %v3231
      %v3248 = vmax.f32 %v2853, %v3232
      %v3249 = vmax.f32 %v2854, %v3233
      %v3250 = vmax.f32 %v2855, %v3234
      %v3251 = vmax.f32 %v2856, %v3235
      %v3252 = vmax.f32 %v2857, %v3236
      %v3253 = vmax.f32 %v2858, %v3237
      %v3254 = vmax.f32 %v2859, %v3238
      %3255 = vset.pattern.permute.xlu0 6
      %3256 = vperm.xlu0 %3255, %v828
      %v3257 = vpop.permute.xlu0 %3256
      %3258 = vset.pattern.permute.xlu0 6
      %3259 = vperm.xlu0 %3258, %v829
      %v3260 = vpop.permute.xlu0 %3259
      %3261 = vset.pattern.permute.xlu0 6
      %3262 = vperm.xlu0 %3261, %v830
      %v3263 = vpop.permute.xlu0 %3262
      %3264 = vset.pattern.permute.xlu0 6
      %3265 = vperm.xlu0 %3264, %v831
      %v3266 = vpop.permute.xlu0 %3265
      %3267 = vset.pattern.permute.xlu0 6
      %3268 = vperm.xlu0 %3267, %v832
      %v3269 = vpop.permute.xlu0 %3268
      %3270 = vset.pattern.permute.xlu0 6
      %3271 = vperm.xlu0 %3270, %v833
      %v3272 = vpop.permute.xlu0 %3271
      %3273 = vset.pattern.permute.xlu0 6
      %3274 = vperm.xlu0 %3273, %v834
      %v3275 = vpop.permute.xlu0 %3274
      %3276 = vset.pattern.permute.xlu0 6
      %3277 = vperm.xlu0 %3276, %v835
      %v3278 = vpop.permute.xlu0 %3277
      %3279 = vset.pattern.permute.xlu0 6
      %3280 = vperm.xlu0 %3279, %v836
      %v3281 = vpop.permute.xlu0 %3280
      %3282 = vset.pattern.permute.xlu0 6
      %3283 = vperm.xlu0 %3282, %v837
      %v3284 = vpop.permute.xlu0 %3283
      %3285 = vset.pattern.permute.xlu0 6
      %3286 = vperm.xlu0 %3285, %v838
      %v3287 = vpop.permute.xlu0 %3286
      %3288 = vset.pattern.permute.xlu0 6
      %3289 = vperm.xlu0 %3288, %v839
      %v3290 = vpop.permute.xlu0 %3289
      %3291 = vset.pattern.permute.xlu0 6
      %3292 = vperm.xlu0 %3291, %v840
      %v3293 = vpop.permute.xlu0 %3292
      %3294 = vset.pattern.permute.xlu0 6
      %3295 = vperm.xlu0 %3294, %v841
      %v3296 = vpop.permute.xlu0 %3295
      %3297 = vset.pattern.permute.xlu0 6
      %3298 = vperm.xlu0 %3297, %v842
      %v3299 = vpop.permute.xlu0 %3298
      %3300 = vset.pattern.permute.xlu0 6
      %3301 = vperm.xlu0 %3300, %v843
      %v3302 = vpop.permute.xlu0 %3301
      %vm3303 = vcmp.eq.s32.totalorder %v3257, %v845
      %vm3304 = vcmp.eq.s32.totalorder %v3257, %v846
      %vm3305 = vcmp.eq.s32.totalorder %v3260, %v845
      %vm3306 = vcmp.eq.s32.totalorder %v3260, %v846
      %vm3307 = vcmp.eq.s32.totalorder %v3263, %v845
      %vm3308 = vcmp.eq.s32.totalorder %v3263, %v846
      %vm3309 = vcmp.eq.s32.totalorder %v3266, %v845
      %vm3310 = vcmp.eq.s32.totalorder %v3266, %v846
      %vm3311 = vcmp.eq.s32.totalorder %v3269, %v845
      %vm3312 = vcmp.eq.s32.totalorder %v3269, %v846
      %vm3313 = vcmp.eq.s32.totalorder %v3272, %v845
      %vm3314 = vcmp.eq.s32.totalorder %v3272, %v846
      %vm3315 = vcmp.eq.s32.totalorder %v3275, %v845
      %vm3316 = vcmp.eq.s32.totalorder %v3275, %v846
      %vm3317 = vcmp.eq.s32.totalorder %v3278, %v845
      %vm3318 = vcmp.eq.s32.totalorder %v3278, %v846
      %vm3319 = vcmp.eq.s32.totalorder %v3281, %v845
      %vm3320 = vcmp.eq.s32.totalorder %v3281, %v846
      %vm3321 = vcmp.eq.s32.totalorder %v3284, %v845
      %vm3322 = vcmp.eq.s32.totalorder %v3284, %v846
      %vm3323 = vcmp.eq.s32.totalorder %v3287, %v845
      %vm3324 = vcmp.eq.s32.totalorder %v3287, %v846
      %vm3325 = vcmp.eq.s32.totalorder %v3290, %v845
      %vm3326 = vcmp.eq.s32.totalorder %v3290, %v846
      %vm3327 = vcmp.eq.s32.totalorder %v3293, %v845
      %vm3328 = vcmp.eq.s32.totalorder %v3293, %v846
      %vm3329 = vcmp.eq.s32.totalorder %v3296, %v845
      %vm3330 = vcmp.eq.s32.totalorder %v3296, %v846
      %vm3331 = vcmp.eq.s32.totalorder %v3299, %v845
      %vm3332 = vcmp.eq.s32.totalorder %v3299, %v846
      %vm3333 = vcmp.eq.s32.totalorder %v3302, %v845
      %vm3334 = vcmp.eq.s32.totalorder %v3302, %v846
      %v3335 = vsel %vm3303, 1, 0
      %v3336 = vsel %vm3304, 1, 0
      %v3337 = vsel %vm3305, 1, 0
      %v3338 = vsel %vm3306, 1, 0
      %v3339 = vsel %vm3307, 1, 0
      %v3340 = vsel %vm3308, 1, 0
      %v3341 = vsel %vm3309, 1, 0
      %v3342 = vsel %vm3310, 1, 0
      %v3343 = vsel %vm3311, 1, 0
      %v3344 = vsel %vm3312, 1, 0
      %v3345 = vsel %vm3313, 1, 0
      %v3346 = vsel %vm3314, 1, 0
      %v3347 = vsel %vm3315, 1, 0
      %v3348 = vsel %vm3316, 1, 0
      %v3349 = vsel %vm3317, 1, 0
      %v3350 = vsel %vm3318, 1, 0
      %v3351 = vsel %vm3319, 1, 0
      %v3352 = vsel %vm3320, 1, 0
      %v3353 = vsel %vm3321, 1, 0
      %v3354 = vsel %vm3322, 1, 0
      %v3355 = vsel %vm3323, 1, 0
      %v3356 = vsel %vm3324, 1, 0
      %v3357 = vsel %vm3325, 1, 0
      %v3358 = vsel %vm3326, 1, 0
      %v3359 = vsel %vm3327, 1, 0
      %v3360 = vsel %vm3328, 1, 0
      %v3361 = vsel %vm3329, 1, 0
      %v3362 = vsel %vm3330, 1, 0
      %v3363 = vsel %vm3331, 1, 0
      %v3364 = vsel %vm3332, 1, 0
      %v3365 = vsel %vm3333, 1, 0
      %v3366 = vsel %vm3334, 1, 0
      %v3367 = vcvt.s32.f32 %v3335
      %v3368 = vcvt.s32.f32 %v3336
      %v3369 = vcvt.s32.f32 %v3337
      %v3370 = vcvt.s32.f32 %v3338
      %v3371 = vcvt.s32.f32 %v3339
      %v3372 = vcvt.s32.f32 %v3340
      %v3373 = vcvt.s32.f32 %v3341
      %v3374 = vcvt.s32.f32 %v3342
      %v3375 = vcvt.s32.f32 %v3343
      %v3376 = vcvt.s32.f32 %v3344
      %v3377 = vcvt.s32.f32 %v3345
      %v3378 = vcvt.s32.f32 %v3346
      %v3379 = vcvt.s32.f32 %v3347
      %v3380 = vcvt.s32.f32 %v3348
      %v3381 = vcvt.s32.f32 %v3349
      %v3382 = vcvt.s32.f32 %v3350
      %v3383 = vcvt.s32.f32 %v3351
      %v3384 = vcvt.s32.f32 %v3352
      %v3385 = vcvt.s32.f32 %v3353
      %v3386 = vcvt.s32.f32 %v3354
      %v3387 = vcvt.s32.f32 %v3355
      %v3388 = vcvt.s32.f32 %v3356
      %v3389 = vcvt.s32.f32 %v3357
      %v3390 = vcvt.s32.f32 %v3358
      %v3391 = vcvt.s32.f32 %v3359
      %v3392 = vcvt.s32.f32 %v3360
      %v3393 = vcvt.s32.f32 %v3361
      %v3394 = vcvt.s32.f32 %v3362
      %v3395 = vcvt.s32.f32 %v3363
      %v3396 = vcvt.s32.f32 %v3364
      %v3397 = vcvt.s32.f32 %v3365
      %v3398 = vcvt.s32.f32 %v3366
      %3399 = vmatpush.msra.mxu0 %v775
      %3400 = vmatpush.msra.mxu0 %v774
      %3401 = vmatpush.msra.mxu0 %v773
      %3402 = vmatpush.msra.mxu0 %v772
      %3403 = vmatpush.msra.mxu0 %v771
      %3404 = vmatpush.msra.mxu0 %v770
      %3405 = vmatpush.msra.mxu0 %v769
      %3406 = vmatpush.msra.mxu0 %v768
      %3407 = vmatpush.msra.mxu0 %v767
      %3408 = vmatpush.msra.mxu0 %v766
      %3409 = vmatpush.msra.mxu0 %v765
      %3410 = vmatpush.msra.mxu0 %v764
      %3411 = vmatpush.msra.mxu0 %v763
      %3412 = vmatpush.msra.mxu0 %v762
      %3413 = vmatpush.msra.mxu0 %v761
      %3414 = vmatpush.msra.mxu0 %v760
      %3415 = vmatmul.f32.gmra.mxu0 %v3367
      %v3416 = vpop.f32.mrf.mxu0
      %v3417 = vadd.f32 %v794, %v3416
      %3418 = vmatmul.f32.gmra.mxu0 %v3369
      %v3419 = vpop.f32.mrf.mxu0
      %v3420 = vadd.f32 %v795, %v3419
      %3421 = vmatmul.f32.gmra.mxu0 %v3371
      %v3422 = vpop.f32.mrf.mxu0
      %v3423 = vadd.f32 %v796, %v3422
      %3424 = vmatmul.f32.gmra.mxu0 %v3373
      %v3425 = vpop.f32.mrf.mxu0
      %v3426 = vadd.f32 %v797, %v3425
      %3427 = vmatmul.f32.gmra.mxu0 %v3375
      %v3428 = vpop.f32.mrf.mxu0
      %v3429 = vadd.f32 %v798, %v3428
      %3430 = vmatmul.f32.gmra.mxu0 %v3377
      %v3431 = vpop.f32.mrf.mxu0
      %v3432 = vadd.f32 %v799, %v3431
      %3433 = vmatmul.f32.gmra.mxu0 %v3379
      %v3434 = vpop.f32.mrf.mxu0
      %v3435 = vadd.f32 %v800, %v3434
      %3436 = vmatmul.f32.gmra.mxu0 %v3381
      %v3437 = vpop.f32.mrf.mxu0
      %v3438 = vadd.f32 %v801, %v3437
      %3439 = vmatmul.f32.gmra.mxu0 %v3383
      %v3440 = vpop.f32.mrf.mxu0
      %v3441 = vadd.f32 %v802, %v3440
      %3442 = vmatmul.f32.gmra.mxu0 %v3385
      %v3443 = vpop.f32.mrf.mxu0
      %v3444 = vadd.f32 %v803, %v3443
      %3445 = vmatmul.f32.gmra.mxu0 %v3387
      %v3446 = vpop.f32.mrf.mxu0
      %v3447 = vadd.f32 %v804, %v3446
      %3448 = vmatmul.f32.gmra.mxu0 %v3389
      %v3449 = vpop.f32.mrf.mxu0
      %v3450 = vadd.f32 %v805, %v3449
      %3451 = vmatmul.f32.gmra.mxu0 %v3391
      %v3452 = vpop.f32.mrf.mxu0
      %v3453 = vadd.f32 %v806, %v3452
      %3454 = vmatmul.f32.gmra.mxu0 %v3393
      %v3455 = vpop.f32.mrf.mxu0
      %v3456 = vadd.f32 %v807, %v3455
      %3457 = vmatmul.f32.gmra.mxu0 %v3395
      %v3458 = vpop.f32.mrf.mxu0
      %v3459 = vadd.f32 %v808, %v3458
      %3460 = vmatmul.f32.gmra.mxu0 %v3397
      %v3461 = vpop.f32.mrf.mxu0
      %v3462 = vadd.f32 %v809, %v3461
      %3463 = vdwg.mxu0
      %3464 = vmatpush.msra.mxu0 %v791
      %3465 = vmatpush.msra.mxu0 %v790
      %3466 = vmatpush.msra.mxu0 %v789
      %3467 = vmatpush.msra.mxu0 %v788
      %3468 = vmatpush.msra.mxu0 %v787
      %3469 = vmatpush.msra.mxu0 %v786
      %3470 = vmatpush.msra.mxu0 %v785
      %3471 = vmatpush.msra.mxu0 %v784
      %3472 = vmatpush.msra.mxu0 %v783
      %3473 = vmatpush.msra.mxu0 %v782
      %3474 = vmatpush.msra.mxu0 %v781
      %3475 = vmatpush.msra.mxu0 %v780
      %3476 = vmatpush.msra.mxu0 %v779
      %3477 = vmatpush.msra.mxu0 %v778
      %3478 = vmatpush.msra.mxu0 %v777
      %3479 = vmatpush.msra.mxu0 %v776
      %3480 = vmatmul.f32.gmra.mxu0 %v3368
      %v3481 = vpop.f32.mrf.mxu0
      %v3482 = vadd.f32 %v3417, %v3481
      %3483 = vmatmul.f32.gmra.mxu0 %v3370
      %v3484 = vpop.f32.mrf.mxu0
      %v3485 = vadd.f32 %v3420, %v3484
      %3486 = vmatmul.f32.gmra.mxu0 %v3372
      %v3487 = vpop.f32.mrf.mxu0
      %v3488 = vadd.f32 %v3423, %v3487
      %3489 = vmatmul.f32.gmra.mxu0 %v3374
      %v3490 = vpop.f32.mrf.mxu0
      %v3491 = vadd.f32 %v3426, %v3490
      %3492 = vmatmul.f32.gmra.mxu0 %v3376
      %v3493 = vpop.f32.mrf.mxu0
      %v3494 = vadd.f32 %v3429, %v3493
      %3495 = vmatmul.f32.gmra.mxu0 %v3378
      %v3496 = vpop.f32.mrf.mxu0
      %v3497 = vadd.f32 %v3432, %v3496
      %3498 = vmatmul.f32.gmra.mxu0 %v3380
      %v3499 = vpop.f32.mrf.mxu0
      %v3500 = vadd.f32 %v3435, %v3499
      %3501 = vmatmul.f32.gmra.mxu0 %v3382
      %v3502 = vpop.f32.mrf.mxu0
      %v3503 = vadd.f32 %v3438, %v3502
      %3504 = vmatmul.f32.gmra.mxu0 %v3384
      %v3505 = vpop.f32.mrf.mxu0
      %v3506 = vadd.f32 %v3441, %v3505
      %3507 = vmatmul.f32.gmra.mxu0 %v3386
      %v3508 = vpop.f32.mrf.mxu0
      %v3509 = vadd.f32 %v3444, %v3508
      %3510 = vmatmul.f32.gmra.mxu0 %v3388
      %v3511 = vpop.f32.mrf.mxu0
      %v3512 = vadd.f32 %v3447, %v3511
      %3513 = vmatmul.f32.gmra.mxu0 %v3390
      %v3514 = vpop.f32.mrf.mxu0
      %v3515 = vadd.f32 %v3450, %v3514
      %3516 = vmatmul.f32.gmra.mxu0 %v3392
      %v3517 = vpop.f32.mrf.mxu0
      %v3518 = vadd.f32 %v3453, %v3517
      %3519 = vmatmul.f32.gmra.mxu0 %v3394
      %v3520 = vpop.f32.mrf.mxu0
      %v3521 = vadd.f32 %v3456, %v3520
      %3522 = vmatmul.f32.gmra.mxu0 %v3396
      %v3523 = vpop.f32.mrf.mxu0
      %v3524 = vadd.f32 %v3459, %v3523
      %3525 = vmatmul.f32.gmra.mxu0 %v3398
      %v3526 = vpop.f32.mrf.mxu0
      %v3527 = vadd.f32 %v3462, %v3526
      %3528 = vdwg.mxu0
      %v3529 = vadd.f32 %v3482, %v1122
      %v3530 = vadd.f32 %v3485, %v1122
      %v3531 = vadd.f32 %v3488, %v1122
      %v3532 = vadd.f32 %v3491, %v1122
      %v3533 = vadd.f32 %v3494, %v1122
      %v3534 = vadd.f32 %v3497, %v1122
      %v3535 = vadd.f32 %v3500, %v1122
      %v3536 = vadd.f32 %v3503, %v1122
      %v3537 = vadd.f32 %v3506, %v1122
      %v3538 = vadd.f32 %v3509, %v1122
      %v3539 = vadd.f32 %v3512, %v1122
      %v3540 = vadd.f32 %v3515, %v1122
      %v3541 = vadd.f32 %v3518, %v1122
      %v3542 = vadd.f32 %v3521, %v1122
      %v3543 = vadd.f32 %v3524, %v1122
      %v3544 = vadd.f32 %v3527, %v1122
      %v3545 = vmax.f32 %v3529, 0.0
      %v3546 = vmax.f32 %v3530, 0.0
      %v3547 = vmax.f32 %v3531, 0.0
      %v3548 = vmax.f32 %v3532, 0.0
      %v3549 = vmax.f32 %v3533, 0.0
      %v3550 = vmax.f32 %v3534, 0.0
      %v3551 = vmax.f32 %v3535, 0.0
      %v3552 = vmax.f32 %v3536, 0.0
      %v3553 = vmax.f32 %v3537, 0.0
      %v3554 = vmax.f32 %v3538, 0.0
      %v3555 = vmax.f32 %v3539, 0.0
      %v3556 = vmax.f32 %v3540, 0.0
      %v3557 = vmax.f32 %v3541, 0.0
      %v3558 = vmax.f32 %v3542, 0.0
      %v3559 = vmax.f32 %v3543, 0.0
      %v3560 = vmax.f32 %v3544, 0.0
      %v3561 = vpack.c.bf16 %v3546, %v3545
      %v3562 = vpack.c.bf16 %v3548, %v3547
      %v3563 = vpack.c.bf16 %v3550, %v3549
      %v3564 = vpack.c.bf16 %v3552, %v3551
      %v3565 = vpack.c.bf16 %v3554, %v3553
      %v3566 = vpack.c.bf16 %v3556, %v3555
      %v3567 = vpack.c.bf16 %v3558, %v3557
      %v3568 = vpack.c.bf16 %v3560, %v3559
      %3569 = vmatpush.bf16.msra.mxu0 %v1206
      %3570 = vmatpush.bf16.msra.mxu0 %v1205
      %3571 = vmatpush.bf16.msra.mxu0 %v1204
      %3572 = vmatpush.bf16.msra.mxu0 %v1203
      %3573 = vmatpush.bf16.msra.mxu0 %v1202
      %3574 = vmatpush.bf16.msra.mxu0 %v1201
      %3575 = vmatpush.bf16.msra.mxu0 %v1200
      %3576 = vmatpush.bf16.msra.mxu0 %v1199
      %3577 = vmatmul.bf16.gmra.mxu0 %v3561
      %v3578 = vpop.f32.mrf.mxu0
      %v3579 = vadd.f32 %v1165, %v3578
      %v3580 = vpop.f32.mrf.mxu0
      %v3581 = vadd.f32 %v1165, %v3580
      %3582 = vmatmul.bf16.gmra.mxu0 %v3562
      %v3583 = vpop.f32.mrf.mxu0
      %v3584 = vadd.f32 %v1165, %v3583
      %v3585 = vpop.f32.mrf.mxu0
      %v3586 = vadd.f32 %v1165, %v3585
      %3587 = vmatmul.bf16.gmra.mxu0 %v3563
      %v3588 = vpop.f32.mrf.mxu0
      %v3589 = vadd.f32 %v1165, %v3588
      %v3590 = vpop.f32.mrf.mxu0
      %v3591 = vadd.f32 %v1165, %v3590
      %3592 = vmatmul.bf16.gmra.mxu0 %v3564
      %v3593 = vpop.f32.mrf.mxu0
      %v3594 = vadd.f32 %v1165, %v3593
      %v3595 = vpop.f32.mrf.mxu0
      %v3596 = vadd.f32 %v1165, %v3595
      %3597 = vmatmul.bf16.gmra.mxu0 %v3565
      %v3598 = vpop.f32.mrf.mxu0
      %v3599 = vadd.f32 %v1165, %v3598
      %v3600 = vpop.f32.mrf.mxu0
      %v3601 = vadd.f32 %v1165, %v3600
      %3602 = vmatmul.bf16.gmra.mxu0 %v3566
      %v3603 = vpop.f32.mrf.mxu0
      %v3604 = vadd.f32 %v1165, %v3603
      %v3605 = vpop.f32.mrf.mxu0
      %v3606 = vadd.f32 %v1165, %v3605
      %3607 = vmatmul.bf16.gmra.mxu0 %v3567
      %v3608 = vpop.f32.mrf.mxu0
      %v3609 = vadd.f32 %v1165, %v3608
      %v3610 = vpop.f32.mrf.mxu0
      %v3611 = vadd.f32 %v1165, %v3610
      %3612 = vmatmul.bf16.gmra.mxu0 %v3568
      %v3613 = vpop.f32.mrf.mxu0
      %v3614 = vadd.f32 %v1165, %v3613
      %v3615 = vpop.f32.mrf.mxu0
      %v3616 = vadd.f32 %v1165, %v3615
      %3617 = vdwg.mxu0
      %v3618 = vmax.f32 %v3579, 0.0
      %v3619 = vmax.f32 %v3581, 0.0
      %v3620 = vmax.f32 %v3584, 0.0
      %v3621 = vmax.f32 %v3586, 0.0
      %v3622 = vmax.f32 %v3589, 0.0
      %v3623 = vmax.f32 %v3591, 0.0
      %v3624 = vmax.f32 %v3594, 0.0
      %v3625 = vmax.f32 %v3596, 0.0
      %v3626 = vmax.f32 %v3599, 0.0
      %v3627 = vmax.f32 %v3601, 0.0
      %v3628 = vmax.f32 %v3604, 0.0
      %v3629 = vmax.f32 %v3606, 0.0
      %v3630 = vmax.f32 %v3609, 0.0
      %v3631 = vmax.f32 %v3611, 0.0
      %v3632 = vmax.f32 %v3614, 0.0
      %v3633 = vmax.f32 %v3616, 0.0
      %v3634 = vmax.f32 %v3239, %v3618
      %v3635 = vmax.f32 %v3240, %v3619
      %v3636 = vmax.f32 %v3241, %v3620
      %v3637 = vmax.f32 %v3242, %v3621
      %v3638 = vmax.f32 %v3243, %v3622
      %v3639 = vmax.f32 %v3244, %v3623
      %v3640 = vmax.f32 %v3245, %v3624
      %v3641 = vmax.f32 %v3246, %v3625
      %v3642 = vmax.f32 %v3247, %v3626
      %v3643 = vmax.f32 %v3248, %v3627
      %v3644 = vmax.f32 %v3249, %v3628
      %v3645 = vmax.f32 %v3250, %v3629
      %v3646 = vmax.f32 %v3251, %v3630
      %v3647 = vmax.f32 %v3252, %v3631
      %v3648 = vmax.f32 %v3253, %v3632
      %v3649 = vmax.f32 %v3254, %v3633
      %3650 = vset.pattern.permute.xlu0 7
      %3651 = vperm.xlu0 %3650, %v828
      %v3652 = vpop.permute.xlu0 %3651
      %3653 = vset.pattern.permute.xlu0 7
      %3654 = vperm.xlu0 %3653, %v829
      %v3655 = vpop.permute.xlu0 %3654
      %3656 = vset.pattern.permute.xlu0 7
      %3657 = vperm.xlu0 %3656, %v830
      %v3658 = vpop.permute.xlu0 %3657
      %3659 = vset.pattern.permute.xlu0 7
      %3660 = vperm.xlu0 %3659, %v831
      %v3661 = vpop.permute.xlu0 %3660
      %3662 = vset.pattern.permute.xlu0 7
      %3663 = vperm.xlu0 %3662, %v832
      %v3664 = vpop.permute.xlu0 %3663
      %3665 = vset.pattern.permute.xlu0 7
      %3666 = vperm.xlu0 %3665, %v833
      %v3667 = vpop.permute.xlu0 %3666
      %3668 = vset.pattern.permute.xlu0 7
      %3669 = vperm.xlu0 %3668, %v834
      %v3670 = vpop.permute.xlu0 %3669
      %3671 = vset.pattern.permute.xlu0 7
      %3672 = vperm.xlu0 %3671, %v835
      %v3673 = vpop.permute.xlu0 %3672
      %3674 = vset.pattern.permute.xlu0 7
      %3675 = vperm.xlu0 %3674, %v836
      %v3676 = vpop.permute.xlu0 %3675
      %3677 = vset.pattern.permute.xlu0 7
      %3678 = vperm.xlu0 %3677, %v837
      %v3679 = vpop.permute.xlu0 %3678
      %3680 = vset.pattern.permute.xlu0 7
      %3681 = vperm.xlu0 %3680, %v838
      %v3682 = vpop.permute.xlu0 %3681
      %3683 = vset.pattern.permute.xlu0 7
      %3684 = vperm.xlu0 %3683, %v839
      %v3685 = vpop.permute.xlu0 %3684
      %3686 = vset.pattern.permute.xlu0 7
      %3687 = vperm.xlu0 %3686, %v840
      %v3688 = vpop.permute.xlu0 %3687
      %3689 = vset.pattern.permute.xlu0 7
      %3690 = vperm.xlu0 %3689, %v841
      %v3691 = vpop.permute.xlu0 %3690
      %3692 = vset.pattern.permute.xlu0 7
      %3693 = vperm.xlu0 %3692, %v842
      %v3694 = vpop.permute.xlu0 %3693
      %3695 = vset.pattern.permute.xlu0 7
      %3696 = vperm.xlu0 %3695, %v843
      %v3697 = vpop.permute.xlu0 %3696
      %vm3698 = vcmp.eq.s32.totalorder %v3652, %v845
      %vm3699 = vcmp.eq.s32.totalorder %v3652, %v846
      %vm3700 = vcmp.eq.s32.totalorder %v3655, %v845
      %vm3701 = vcmp.eq.s32.totalorder %v3655, %v846
      %vm3702 = vcmp.eq.s32.totalorder %v3658, %v845
      %vm3703 = vcmp.eq.s32.totalorder %v3658, %v846
      %vm3704 = vcmp.eq.s32.totalorder %v3661, %v845
      %vm3705 = vcmp.eq.s32.totalorder %v3661, %v846
      %vm3706 = vcmp.eq.s32.totalorder %v3664, %v845
      %vm3707 = vcmp.eq.s32.totalorder %v3664, %v846
      %vm3708 = vcmp.eq.s32.totalorder %v3667, %v845
      %vm3709 = vcmp.eq.s32.totalorder %v3667, %v846
      %vm3710 = vcmp.eq.s32.totalorder %v3670, %v845
      %vm3711 = vcmp.eq.s32.totalorder %v3670, %v846
      %vm3712 = vcmp.eq.s32.totalorder %v3673, %v845
      %vm3713 = vcmp.eq.s32.totalorder %v3673, %v846
      %vm3714 = vcmp.eq.s32.totalorder %v3676, %v845
      %vm3715 = vcmp.eq.s32.totalorder %v3676, %v846
      %vm3716 = vcmp.eq.s32.totalorder %v3679, %v845
      %vm3717 = vcmp.eq.s32.totalorder %v3679, %v846
      %vm3718 = vcmp.eq.s32.totalorder %v3682, %v845
      %vm3719 = vcmp.eq.s32.totalorder %v3682, %v846
      %vm3720 = vcmp.eq.s32.totalorder %v3685, %v845
      %vm3721 = vcmp.eq.s32.totalorder %v3685, %v846
      %vm3722 = vcmp.eq.s32.totalorder %v3688, %v845
      %vm3723 = vcmp.eq.s32.totalorder %v3688, %v846
      %vm3724 = vcmp.eq.s32.totalorder %v3691, %v845
      %vm3725 = vcmp.eq.s32.totalorder %v3691, %v846
      %vm3726 = vcmp.eq.s32.totalorder %v3694, %v845
      %vm3727 = vcmp.eq.s32.totalorder %v3694, %v846
      %vm3728 = vcmp.eq.s32.totalorder %v3697, %v845
      %vm3729 = vcmp.eq.s32.totalorder %v3697, %v846
      %v3730 = vsel %vm3698, 1, 0
      %v3731 = vsel %vm3699, 1, 0
      %v3732 = vsel %vm3700, 1, 0
      %v3733 = vsel %vm3701, 1, 0
      %v3734 = vsel %vm3702, 1, 0
      %v3735 = vsel %vm3703, 1, 0
      %v3736 = vsel %vm3704, 1, 0
      %v3737 = vsel %vm3705, 1, 0
      %v3738 = vsel %vm3706, 1, 0
      %v3739 = vsel %vm3707, 1, 0
      %v3740 = vsel %vm3708, 1, 0
      %v3741 = vsel %vm3709, 1, 0
      %v3742 = vsel %vm3710, 1, 0
      %v3743 = vsel %vm3711, 1, 0
      %v3744 = vsel %vm3712, 1, 0
      %v3745 = vsel %vm3713, 1, 0
      %v3746 = vsel %vm3714, 1, 0
      %v3747 = vsel %vm3715, 1, 0
      %v3748 = vsel %vm3716, 1, 0
      %v3749 = vsel %vm3717, 1, 0
      %v3750 = vsel %vm3718, 1, 0
      %v3751 = vsel %vm3719, 1, 0
      %v3752 = vsel %vm3720, 1, 0
      %v3753 = vsel %vm3721, 1, 0
      %v3754 = vsel %vm3722, 1, 0
      %v3755 = vsel %vm3723, 1, 0
      %v3756 = vsel %vm3724, 1, 0
      %v3757 = vsel %vm3725, 1, 0
      %v3758 = vsel %vm3726, 1, 0
      %v3759 = vsel %vm3727, 1, 0
      %v3760 = vsel %vm3728, 1, 0
      %v3761 = vsel %vm3729, 1, 0
      %v3762 = vcvt.s32.f32 %v3730
      %v3763 = vcvt.s32.f32 %v3731
      %v3764 = vcvt.s32.f32 %v3732
      %v3765 = vcvt.s32.f32 %v3733
      %v3766 = vcvt.s32.f32 %v3734
      %v3767 = vcvt.s32.f32 %v3735
      %v3768 = vcvt.s32.f32 %v3736
      %v3769 = vcvt.s32.f32 %v3737
      %v3770 = vcvt.s32.f32 %v3738
      %v3771 = vcvt.s32.f32 %v3739
      %v3772 = vcvt.s32.f32 %v3740
      %v3773 = vcvt.s32.f32 %v3741
      %v3774 = vcvt.s32.f32 %v3742
      %v3775 = vcvt.s32.f32 %v3743
      %v3776 = vcvt.s32.f32 %v3744
      %v3777 = vcvt.s32.f32 %v3745
      %v3778 = vcvt.s32.f32 %v3746
      %v3779 = vcvt.s32.f32 %v3747
      %v3780 = vcvt.s32.f32 %v3748
      %v3781 = vcvt.s32.f32 %v3749
      %v3782 = vcvt.s32.f32 %v3750
      %v3783 = vcvt.s32.f32 %v3751
      %v3784 = vcvt.s32.f32 %v3752
      %v3785 = vcvt.s32.f32 %v3753
      %v3786 = vcvt.s32.f32 %v3754
      %v3787 = vcvt.s32.f32 %v3755
      %v3788 = vcvt.s32.f32 %v3756
      %v3789 = vcvt.s32.f32 %v3757
      %v3790 = vcvt.s32.f32 %v3758
      %v3791 = vcvt.s32.f32 %v3759
      %v3792 = vcvt.s32.f32 %v3760
      %v3793 = vcvt.s32.f32 %v3761
      %3794 = vmatpush.msra.mxu0 %v775
      %3795 = vmatpush.msra.mxu0 %v774
      %3796 = vmatpush.msra.mxu0 %v773
      %3797 = vmatpush.msra.mxu0 %v772
      %3798 = vmatpush.msra.mxu0 %v771
      %3799 = vmatpush.msra.mxu0 %v770
      %3800 = vmatpush.msra.mxu0 %v769
      %3801 = vmatpush.msra.mxu0 %v768
      %3802 = vmatpush.msra.mxu0 %v767
      %3803 = vmatpush.msra.mxu0 %v766
      %3804 = vmatpush.msra.mxu0 %v765
      %3805 = vmatpush.msra.mxu0 %v764
      %3806 = vmatpush.msra.mxu0 %v763
      %3807 = vmatpush.msra.mxu0 %v762
      %3808 = vmatpush.msra.mxu0 %v761
      %3809 = vmatpush.msra.mxu0 %v760
      %3810 = vmatmul.f32.gmra.mxu0 %v3762
      %v3811 = vpop.f32.mrf.mxu0
      %v3812 = vadd.f32 %v794, %v3811
      %3813 = vmatmul.f32.gmra.mxu0 %v3764
      %v3814 = vpop.f32.mrf.mxu0
      %v3815 = vadd.f32 %v795, %v3814
      %3816 = vmatmul.f32.gmra.mxu0 %v3766
      %v3817 = vpop.f32.mrf.mxu0
      %v3818 = vadd.f32 %v796, %v3817
      %3819 = vmatmul.f32.gmra.mxu0 %v3768
      %v3820 = vpop.f32.mrf.mxu0
      %v3821 = vadd.f32 %v797, %v3820
      %3822 = vmatmul.f32.gmra.mxu0 %v3770
      %v3823 = vpop.f32.mrf.mxu0
      %v3824 = vadd.f32 %v798, %v3823
      %3825 = vmatmul.f32.gmra.mxu0 %v3772
      %v3826 = vpop.f32.mrf.mxu0
      %v3827 = vadd.f32 %v799, %v3826
      %3828 = vmatmul.f32.gmra.mxu0 %v3774
      %v3829 = vpop.f32.mrf.mxu0
      %v3830 = vadd.f32 %v800, %v3829
      %3831 = vmatmul.f32.gmra.mxu0 %v3776
      %v3832 = vpop.f32.mrf.mxu0
      %v3833 = vadd.f32 %v801, %v3832
      %3834 = vmatmul.f32.gmra.mxu0 %v3778
      %v3835 = vpop.f32.mrf.mxu0
      %v3836 = vadd.f32 %v802, %v3835
      %3837 = vmatmul.f32.gmra.mxu0 %v3780
      %v3838 = vpop.f32.mrf.mxu0
      %v3839 = vadd.f32 %v803, %v3838
      %3840 = vmatmul.f32.gmra.mxu0 %v3782
      %v3841 = vpop.f32.mrf.mxu0
      %v3842 = vadd.f32 %v804, %v3841
      %3843 = vmatmul.f32.gmra.mxu0 %v3784
      %v3844 = vpop.f32.mrf.mxu0
      %v3845 = vadd.f32 %v805, %v3844
      %3846 = vmatmul.f32.gmra.mxu0 %v3786
      %v3847 = vpop.f32.mrf.mxu0
      %v3848 = vadd.f32 %v806, %v3847
      %3849 = vmatmul.f32.gmra.mxu0 %v3788
      %v3850 = vpop.f32.mrf.mxu0
      %v3851 = vadd.f32 %v807, %v3850
      %3852 = vmatmul.f32.gmra.mxu0 %v3790
      %v3853 = vpop.f32.mrf.mxu0
      %v3854 = vadd.f32 %v808, %v3853
      %3855 = vmatmul.f32.gmra.mxu0 %v3792
      %v3856 = vpop.f32.mrf.mxu0
      %v3857 = vadd.f32 %v809, %v3856
      %3858 = vdwg.mxu0
      %3859 = vmatpush.msra.mxu0 %v791
      %3860 = vmatpush.msra.mxu0 %v790
      %3861 = vmatpush.msra.mxu0 %v789
      %3862 = vmatpush.msra.mxu0 %v788
      %3863 = vmatpush.msra.mxu0 %v787
      %3864 = vmatpush.msra.mxu0 %v786
      %3865 = vmatpush.msra.mxu0 %v785
      %3866 = vmatpush.msra.mxu0 %v784
      %3867 = vmatpush.msra.mxu0 %v783
      %3868 = vmatpush.msra.mxu0 %v782
      %3869 = vmatpush.msra.mxu0 %v781
      %3870 = vmatpush.msra.mxu0 %v780
      %3871 = vmatpush.msra.mxu0 %v779
      %3872 = vmatpush.msra.mxu0 %v778
      %3873 = vmatpush.msra.mxu0 %v777
      %3874 = vmatpush.msra.mxu0 %v776
      %3875 = vmatmul.f32.gmra.mxu0 %v3763
      %v3876 = vpop.f32.mrf.mxu0
      %v3877 = vadd.f32 %v3812, %v3876
      %3878 = vmatmul.f32.gmra.mxu0 %v3765
      %v3879 = vpop.f32.mrf.mxu0
      %v3880 = vadd.f32 %v3815, %v3879
      %3881 = vmatmul.f32.gmra.mxu0 %v3767
      %v3882 = vpop.f32.mrf.mxu0
      %v3883 = vadd.f32 %v3818, %v3882
      %3884 = vmatmul.f32.gmra.mxu0 %v3769
      %v3885 = vpop.f32.mrf.mxu0
      %v3886 = vadd.f32 %v3821, %v3885
      %3887 = vmatmul.f32.gmra.mxu0 %v3771
      %v3888 = vpop.f32.mrf.mxu0
      %v3889 = vadd.f32 %v3824, %v3888
      %3890 = vmatmul.f32.gmra.mxu0 %v3773
      %v3891 = vpop.f32.mrf.mxu0
      %v3892 = vadd.f32 %v3827, %v3891
      %3893 = vmatmul.f32.gmra.mxu0 %v3775
      %v3894 = vpop.f32.mrf.mxu0
      %v3895 = vadd.f32 %v3830, %v3894
      %3896 = vmatmul.f32.gmra.mxu0 %v3777
      %v3897 = vpop.f32.mrf.mxu0
      %v3898 = vadd.f32 %v3833, %v3897
      %3899 = vmatmul.f32.gmra.mxu0 %v3779
      %v3900 = vpop.f32.mrf.mxu0
      %v3901 = vadd.f32 %v3836, %v3900
      %3902 = vmatmul.f32.gmra.mxu0 %v3781
      %v3903 = vpop.f32.mrf.mxu0
      %v3904 = vadd.f32 %v3839, %v3903
      %3905 = vmatmul.f32.gmra.mxu0 %v3783
      %v3906 = vpop.f32.mrf.mxu0
      %v3907 = vadd.f32 %v3842, %v3906
      %3908 = vmatmul.f32.gmra.mxu0 %v3785
      %v3909 = vpop.f32.mrf.mxu0
      %v3910 = vadd.f32 %v3845, %v3909
      %3911 = vmatmul.f32.gmra.mxu0 %v3787
      %v3912 = vpop.f32.mrf.mxu0
      %v3913 = vadd.f32 %v3848, %v3912
      %3914 = vmatmul.f32.gmra.mxu0 %v3789
      %v3915 = vpop.f32.mrf.mxu0
      %v3916 = vadd.f32 %v3851, %v3915
      %3917 = vmatmul.f32.gmra.mxu0 %v3791
      %v3918 = vpop.f32.mrf.mxu0
      %v3919 = vadd.f32 %v3854, %v3918
      %3920 = vmatmul.f32.gmra.mxu0 %v3793
      %v3921 = vpop.f32.mrf.mxu0
      %v3922 = vadd.f32 %v3857, %v3921
      %3923 = vdwg.mxu0
      %v3924 = vadd.f32 %v3877, %v1122
      %v3925 = vadd.f32 %v3880, %v1122
      %v3926 = vadd.f32 %v3883, %v1122
      %v3927 = vadd.f32 %v3886, %v1122
      %v3928 = vadd.f32 %v3889, %v1122
      %v3929 = vadd.f32 %v3892, %v1122
      %v3930 = vadd.f32 %v3895, %v1122
      %v3931 = vadd.f32 %v3898, %v1122
      %v3932 = vadd.f32 %v3901, %v1122
      %v3933 = vadd.f32 %v3904, %v1122
      %v3934 = vadd.f32 %v3907, %v1122
      %v3935 = vadd.f32 %v3910, %v1122
      %v3936 = vadd.f32 %v3913, %v1122
      %v3937 = vadd.f32 %v3916, %v1122
      %v3938 = vadd.f32 %v3919, %v1122
      %v3939 = vadd.f32 %v3922, %v1122
      %v3940 = vmax.f32 %v3924, 0.0
      %v3941 = vmax.f32 %v3925, 0.0
      %v3942 = vmax.f32 %v3926, 0.0
      %v3943 = vmax.f32 %v3927, 0.0
      %v3944 = vmax.f32 %v3928, 0.0
      %v3945 = vmax.f32 %v3929, 0.0
      %v3946 = vmax.f32 %v3930, 0.0
      %v3947 = vmax.f32 %v3931, 0.0
      %v3948 = vmax.f32 %v3932, 0.0
      %v3949 = vmax.f32 %v3933, 0.0
      %v3950 = vmax.f32 %v3934, 0.0
      %v3951 = vmax.f32 %v3935, 0.0
      %v3952 = vmax.f32 %v3936, 0.0
      %v3953 = vmax.f32 %v3937, 0.0
      %v3954 = vmax.f32 %v3938, 0.0
      %v3955 = vmax.f32 %v3939, 0.0
      %v3956 = vpack.c.bf16 %v3941, %v3940
      %v3957 = vpack.c.bf16 %v3943, %v3942
      %v3958 = vpack.c.bf16 %v3945, %v3944
      %v3959 = vpack.c.bf16 %v3947, %v3946
      %v3960 = vpack.c.bf16 %v3949, %v3948
      %v3961 = vpack.c.bf16 %v3951, %v3950
      %v3962 = vpack.c.bf16 %v3953, %v3952
      %v3963 = vpack.c.bf16 %v3955, %v3954
      %3964 = vmatpush.bf16.msra.mxu0 %v1206
      %3965 = vmatpush.bf16.msra.mxu0 %v1205
      %3966 = vmatpush.bf16.msra.mxu0 %v1204
      %3967 = vmatpush.bf16.msra.mxu0 %v1203
      %3968 = vmatpush.bf16.msra.mxu0 %v1202
      %3969 = vmatpush.bf16.msra.mxu0 %v1201
      %3970 = vmatpush.bf16.msra.mxu0 %v1200
      %3971 = vmatpush.bf16.msra.mxu0 %v1199
      %3972 = vmatmul.bf16.gmra.mxu0 %v3956
      %v3973 = vpop.f32.mrf.mxu0
      %v3974 = vadd.f32 %v1165, %v3973
      %v3975 = vpop.f32.mrf.mxu0
      %v3976 = vadd.f32 %v1165, %v3975
      %3977 = vmatmul.bf16.gmra.mxu0 %v3957
      %v3978 = vpop.f32.mrf.mxu0
      %v3979 = vadd.f32 %v1165, %v3978
      %v3980 = vpop.f32.mrf.mxu0
      %v3981 = vadd.f32 %v1165, %v3980
      %3982 = vmatmul.bf16.gmra.mxu0 %v3958
      %v3983 = vpop.f32.mrf.mxu0
      %v3984 = vadd.f32 %v1165, %v3983
      %v3985 = vpop.f32.mrf.mxu0
      %v3986 = vadd.f32 %v1165, %v3985
      %3987 = vmatmul.bf16.gmra.mxu0 %v3959
      %v3988 = vpop.f32.mrf.mxu0
      %v3989 = vadd.f32 %v1165, %v3988
      %v3990 = vpop.f32.mrf.mxu0
      %v3991 = vadd.f32 %v1165, %v3990
      %3992 = vmatmul.bf16.gmra.mxu0 %v3960
      %v3993 = vpop.f32.mrf.mxu0
      %v3994 = vadd.f32 %v1165, %v3993
      %v3995 = vpop.f32.mrf.mxu0
      %v3996 = vadd.f32 %v1165, %v3995
      %3997 = vmatmul.bf16.gmra.mxu0 %v3961
      %v3998 = vpop.f32.mrf.mxu0
      %v3999 = vadd.f32 %v1165, %v3998
      %v4000 = vpop.f32.mrf.mxu0
      %v4001 = vadd.f32 %v1165, %v4000
      %4002 = vmatmul.bf16.gmra.mxu0 %v3962
      %v4003 = vpop.f32.mrf.mxu0
      %v4004 = vadd.f32 %v1165, %v4003
      %v4005 = vpop.f32.mrf.mxu0
      %v4006 = vadd.f32 %v1165, %v4005
      %4007 = vmatmul.bf16.gmra.mxu0 %v3963
      %v4008 = vpop.f32.mrf.mxu0
      %v4009 = vadd.f32 %v1165, %v4008
      %v4010 = vpop.f32.mrf.mxu0
      %v4011 = vadd.f32 %v1165, %v4010
      %4012 = vdwg.mxu0
      %v4013 = vmax.f32 %v3974, 0.0
      %v4014 = vmax.f32 %v3976, 0.0
      %v4015 = vmax.f32 %v3979, 0.0
      %v4016 = vmax.f32 %v3981, 0.0
      %v4017 = vmax.f32 %v3984, 0.0
      %v4018 = vmax.f32 %v3986, 0.0
      %v4019 = vmax.f32 %v3989, 0.0
      %v4020 = vmax.f32 %v3991, 0.0
      %v4021 = vmax.f32 %v3994, 0.0
      %v4022 = vmax.f32 %v3996, 0.0
      %v4023 = vmax.f32 %v3999, 0.0
      %v4024 = vmax.f32 %v4001, 0.0
      %v4025 = vmax.f32 %v4004, 0.0
      %v4026 = vmax.f32 %v4006, 0.0
      %v4027 = vmax.f32 %v4009, 0.0
      %v4028 = vmax.f32 %v4011, 0.0
      %v4029 = vmax.f32 %v3634, %v4013
      %v4030 = vmax.f32 %v3635, %v4014
      %v4031 = vmax.f32 %v3636, %v4015
      %v4032 = vmax.f32 %v3637, %v4016
      %v4033 = vmax.f32 %v3638, %v4017
      %v4034 = vmax.f32 %v3639, %v4018
      %v4035 = vmax.f32 %v3640, %v4019
      %v4036 = vmax.f32 %v3641, %v4020
      %v4037 = vmax.f32 %v3642, %v4021
      %v4038 = vmax.f32 %v3643, %v4022
      %v4039 = vmax.f32 %v3644, %v4023
      %v4040 = vmax.f32 %v3645, %v4024
      %v4041 = vmax.f32 %v3646, %v4025
      %v4042 = vmax.f32 %v3647, %v4026
      %v4043 = vmax.f32 %v3648, %v4027
      %v4044 = vmax.f32 %v3649, %v4028
      %4045 = vst [vmem:[%s336] sm:$0xff] %v4029
      %4046 = vst [vmem:[%s336 + $0x8] sm:$0xff] %v4030
      %4047 = vst [vmem:[%s336 + $0x10] sm:$0xff] %v4031
      %4048 = vst [vmem:[%s336 + $0x18] sm:$0xff] %v4032
      %4049 = vst [vmem:[%s336 + $0x20] sm:$0xff] %v4033
      %4050 = vst [vmem:[%s336 + $0x28] sm:$0xff] %v4034
      %4051 = vst [vmem:[%s336 + $0x30] sm:$0xff] %v4035
      %4052 = vst [vmem:[%s336 + $0x38] sm:$0xff] %v4036
      %4053 = vst [vmem:[%s336 + $0x40] sm:$0xff] %v4037
      %4054 = vst [vmem:[%s336 + $0x48] sm:$0xff] %v4038
      %4055 = vst [vmem:[%s336 + $0x50] sm:$0xff] %v4039
      %4056 = vst [vmem:[%s336 + $0x58] sm:$0xff] %v4040
      %4057 = vst [vmem:[%s336 + $0x60] sm:$0xff] %v4041
      %4058 = vst [vmem:[%s336 + $0x68] sm:$0xff] %v4042
      %4059 = vst [vmem:[%s336 + $0x70] sm:$0xff] %v4043
      %4060 = vst [vmem:[%s336 + $0x78] sm:$0xff] %v4044
      %s4061 = smul.u32 16, %s23
      %p4062 = scmp.lt.s32.totalorder %s22, 1
      %s4063 = scalar_select %p4062, %s22, 1
      %p4064 = scmp.lt.s32.totalorder %s4061, 31
      %s4065 = scalar_select %p4064, %s4061, 31
      %s4066 = smul.addr %s4063, 32
      %s4067 = sadd.s32 %s4065, %s4066
      %s4068 = smul.addr %s4067, 8
      %s4069 = scalar_lea.vmem %s7, %s4068
      // Predicated region
      $region53: #{edgeconv_forward.3} parent=47 // pred_check
        %p4070 = pneg %p209
      $region54: #{edgeconv_forward.3} parent=47 // pred_check_branch
        %4072 = sbr.rel (%p4070) target = $region56
      $region55: #{edgeconv_forward.3} parent=47 // pred_region
        %s4073 = smul.u32 16, %s23
      $region56: #{edgeconv_forward.3} parent=47 // pred_fallthru
        _
    $region48: #{edgeconv_forward.3} parent=5 // pred_fallthru
      _
    %p4074 = scmp.le.s32.totalorder 2, %s13
    // Predicated region
    $region57: #{edgeconv_forward.3} parent=5 // pred_check
      %p4075 = pneg %p4074
    $region58: #{edgeconv_forward.3} parent=5 // pred_check_branch
      %4077 = sbr.rel (%p4075) target = $region60
    $region59: #{edgeconv_forward.3} parent=5 // pred_region
      %s4078 = ssub.s32 %s13, 2
      // Predicated region
      $region61: #{edgeconv_forward.3} parent=59 // pred_check
        %p4079 = pneg %p215
      $region62: #{edgeconv_forward.3} parent=59 // pred_check_branch
        %4081 = sbr.rel (%p4079) target = $region64
      $region63: #{edgeconv_forward.3} parent=59 // pred_region
        %s4082 = smul.u32 16, %s25
        %p4083 = scmp.lt.s32.totalorder %s24, 1
        %s4084 = scalar_select %p4083, %s24, 1
        %p4085 = scmp.lt.s32.totalorder %s4082, 31
        %s4086 = scalar_select %p4085, %s4082, 31
        %s4087 = smul.addr %s4084, 32
        %s4088 = sadd.s32 %s4086, %s4087
        %s4089 = smul.addr %s4088, 8
        %s4090 = scalar_lea.vmem %s7, %s4089
      $region64: #{edgeconv_forward.3} parent=59 // pred_fallthru
        _
    $region60: #{edgeconv_forward.3} parent=5 // pred_fallthru
      _
  $region6: #{edgeconv_forward.3} parent=0 // loop_footer
    %s17 = sadd.s32 1, %s13
  $region7: #{edgeconv_forward.3} parent=0 // loop_footer_branch
    %12 = sbr.rel target = $region3
  $region8: #{edgeconv_forward.3} parent=0 // loop_exit
    _

</llo_original>
